<compile_context>
chip_gen: v7x
topology: tpu7x:2x2x1
jax: 0.10.0
libtpu: 0.0.40
codegen_flags: <defaults>
</compile_context>

<pallas_src>
import math

import jax
import jax.numpy as jnp
from jax import lax
from jax.experimental import pallas as pl
from jax.experimental.pallas import tpu as pltpu

# --- small, TPU-friendly shapes consistent with the module ---------------
# (source: n_vocab=49488, n_embed=768, n_tokens=77, n_head=12, n_layers=12)
B = 2          # batch
T = 8          # sequence length (n_tokens)
D = 128        # n_embed
H = 4          # n_head
HD = D // H    # head dim
L = 2          # number of CLIP layers
V = 256        # vocab size
F4 = 4 * D     # MLP hidden
EPS = 1e-5     # nn.LayerNorm default eps


def _layer_norm(x, w, b):
    mu = jnp.mean(x, axis=-1, keepdims=True)
    var = jnp.mean((x - mu) ** 2, axis=-1, keepdims=True)
    return (x - mu) * lax.rsqrt(var + EPS) * w + b


# ------------------------------ kernel -----------------------------------
def clip_kernel(x_ref, wqkv_ref, bqkv_ref, wo_ref, bo_ref,
                w1_ref, b1_ref, w2_ref, b2_ref, ln_ref, lnf_ref, out_ref):
    # One grid step == one batch element; x_ref block is (T, D).
    x = x_ref[...]

    # Additive causal bias, built once and reused by every layer.
    row = lax.broadcasted_iota(jnp.int32, (T, T), 0)
    col = lax.broadcasted_iota(jnp.int32, (T, T), 1)
    causal_bias = jnp.where(col <= row, 0.0, -1e30).astype(jnp.float32)

    scale = 1.0 / math.sqrt(HD)

    for l in range(L):        # static layer loop; all weights resident in VMEM
        # ---------------- attention block ----------------
        residue = x
        h = _layer_norm(x, ln_ref[4 * l + 0], ln_ref[4 * l + 1])
        # fused Q/K/V projection: bf16 x bf16 -> f32 accumulation on the MXU
        qkv = jnp.dot(h.astype(jnp.bfloat16), wqkv_ref[l],
                      preferred_element_type=jnp.float32) + bqkv_ref[l]
        q = qkv[:, 0 * D:1 * D]          # 128-lane-aligned slices
        k = qkv[:, 1 * D:2 * D]
        v = qkv[:, 2 * D:3 * D]

        # TODO(synk): per-head 32-wide lane slices remain; a batched einsum
        # over a head axis needs in-kernel transposes that don't lower cleanly.
        heads = []
        for hh in range(H):
            sl = slice(hh * HD, (hh + 1) * HD)
            qh, kh, vh = q[:, sl], k[:, sl], v[:, sl]
            s = jnp.einsum('qd,kd->qk', qh, kh,
                           preferred_element_type=jnp.float32) * scale
            s = s + causal_bias
            s = s - jnp.max(s, axis=-1, keepdims=True)
            p = jnp.exp(s)
            p = p * pl.reciprocal(jnp.sum(p, axis=-1, keepdims=True),
                                  approx=True)
            heads.append(jnp.dot(p, vh, preferred_element_type=jnp.float32))
        o = jnp.concatenate(heads, axis=-1)               # (T, D)
        # single full-K output projection (concat(heads) @ Wo)
        x = (jnp.dot(o.astype(jnp.bfloat16), wo_ref[l],
                     preferred_element_type=jnp.float32)
             + bo_ref[l] + residue)

        # ---------------- MLP block (quick-GELU) ----------------
        residue = x
        h = _layer_norm(x, ln_ref[4 * l + 2], ln_ref[4 * l + 3])
        h = jnp.dot(h.astype(jnp.bfloat16), w1_ref[l],
                    preferred_element_type=jnp.float32) + b1_ref[l]
        h = h * jax.nn.sigmoid(1.702 * h)
        h = jnp.dot(h.astype(jnp.bfloat16), w2_ref[l],
                    preferred_element_type=jnp.float32) + b2_ref[l]
        x = h + residue

    # Final LayerNorm, written once per batch element.
    out_ref[...] = _layer_norm(x, lnf_ref[0], lnf_ref[1])


# ------------------------------ wrapper -----------------------------------
def clip_forward(tokens, p):
    # Embedding (gather + position add) is glue: plain JAX.
    x = (jnp.take(p['tok_emb'], tokens, axis=0)
         + p['pos_emb'][None]).astype(jnp.float32)

    # Pack / precondition weights once, outside the kernel.
    wqkv = jnp.concatenate([p['wq'], p['wk'], p['wv']],
                           axis=-1).astype(jnp.bfloat16)            # (L, D, 3D)
    bqkv = jnp.concatenate([p['bq'], p['bk'], p['bv']], axis=-1)    # (L, 3D)
    wo = p['wo'].astype(jnp.bfloat16)                               # (L, D, D)
    w1 = p['w1'].astype(jnp.bfloat16)                               # (L, D, 4D)
    w2 = p['w2'].astype(jnp.bfloat16)                               # (L, 4D, D)
    ln = jnp.stack([p['ln1_w'], p['ln1_b'], p['ln2_w'], p['ln2_b']],
                   axis=1).reshape(4 * L, D)                        # (4L, D)
    lnf = jnp.concatenate([p['lnf_w'], p['lnf_b']], axis=0)         # (2, D)

    def full(shape):
        return pl.BlockSpec(shape, lambda b: (0,) * len(shape))

    grid_spec = pltpu.PrefetchScalarGridSpec(
        num_scalar_prefetch=0,
        grid=(B,),                       # batch axis; "parallel" -> 2nd TC on v7x
        in_specs=[
            pl.BlockSpec((None, T, D), lambda b: (b, 0, 0)),   # embedded tokens
            full((L, D, 3 * D)),   # wqkv (bf16)
            full((L, 3 * D)),      # bqkv
            full((L, D, D)),       # wo (bf16)
            full((L, D)),          # bo
            full((L, D, F4)),      # w1 (bf16)
            full((L, F4)),         # b1
            full((L, F4, D)),      # w2 (bf16)
            full((L, D)),          # b2
            full((4 * L, D)),      # packed LayerNorm params
            full((2, D)),          # final LayerNorm params
        ],
        out_specs=pl.BlockSpec((None, T, D), lambda b: (b, 0, 0)),
    )

    return pl.pallas_call(
        clip_kernel,
        out_shape=jax.ShapeDtypeStruct((B, T, D), jnp.float32),
        grid_spec=grid_spec,
        # At real CLIP sizes (D=768, L=12) restore a per-layer grid axis and set
        # an explicit vmem_limit_bytes; unnecessary at these toy sizes.
        compiler_params=pltpu.CompilerParams(
            dimension_semantics=("parallel",)),
    )(x, wqkv, bqkv, wo, p['bo'], w1, p['b1'], w2, p['b2'], ln, lnf)


# -------------------------- pure-JAX reference -----------------------------
def clip_reference(tokens, p):
    x = jnp.take(p['tok_emb'], tokens, axis=0) + p['pos_emb'][None]
    mask = jnp.tril(jnp.ones((T, T), bool))
    for l in range(L):
        res = x
        h = _layer_norm(x, p['ln1_w'][l], p['ln1_b'][l])
        q = (h @ p['wq'][l] + p['bq'][l]).reshape(B, T, H, HD).transpose(0, 2, 1, 3)
        k = (h @ p['wk'][l] + p['bk'][l]).reshape(B, T, H, HD).transpose(0, 2, 1, 3)
        v = (h @ p['wv'][l] + p['bv'][l]).reshape(B, T, H, HD).transpose(0, 2, 1, 3)
        s = jnp.einsum('bhqd,bhkd->bhqk', q, k) / math.sqrt(HD)
        s = jnp.where(mask, s, -jnp.inf)
        a = jax.nn.softmax(s, axis=-1)
        o = jnp.einsum('bhqk,bhkd->bhqd', a, v).transpose(0, 2, 1, 3).reshape(B, T, D)
        x = o @ p['wo'][l] + p['bo'][l] + res
        res = x
        h = _layer_norm(x, p['ln2_w'][l], p['ln2_b'][l])
        h = h @ p['w1'][l] + p['b1'][l]
        h = h * jax.nn.sigmoid(1.702 * h)
        x = h @ p['w2'][l] + p['b2'][l] + res
    return _layer_norm(x, p['lnf_w'][0], p['lnf_b'][0])


# ------------------------------ init / main --------------------------------
def init_params(key):
    ks = jax.random.split(key, 16)
    nrm = lambda k, shp, s=0.02: jax.random.normal(k, shp, jnp.float32) * s
    return dict(
        tok_emb=nrm(ks[0], (V, D), 1.0),                 # nn.Embedding ~ N(0,1)
        pos_emb=jnp.zeros((T, D), jnp.float32),          # nn.Parameter(zeros)
        ln1_w=1.0 + nrm(ks[1], (L, D)), ln1_b=nrm(ks[2], (L, D)),
        wq=nrm(ks[3], (L, D, D)), bq=nrm(ks[4], (L, D)),
        wk=nrm(ks[5], (L, D, D)), bk=nrm(ks[6], (L, D)),
        wv=nrm(ks[7], (L, D, D)), bv=nrm(ks[8], (L, D)),
        wo=nrm(ks[9], (L, D, D)), bo=nrm(ks[10], (L, D)),
        ln2_w=1.0 + nrm(ks[11], (L, D)), ln2_b=nrm(ks[12], (L, D)),
        w1=nrm(ks[13], (L, D, F4)), b1=nrm(ks[14], (L, F4)),
        w2=nrm(ks[15], (L, F4, D)), b2=jnp.zeros((L, D), jnp.float32),
        lnf_w=jnp.ones((1, D), jnp.float32), lnf_b=jnp.zeros((1, D), jnp.float32),
    )


if __name__ == "__main__":
    key = jax.random.PRNGKey(0)
    k_tok, k_par = jax.random.split(key)
    tokens = jax.random.randint(k_tok, (B, T), 0, V, dtype=jnp.int32)
    params = init_params(k_par)

    out = jax.block_until_ready(clip_forward(tokens, params))
    ref = clip_reference(tokens, params)

    assert out.shape == (B, T, D) and out.dtype == jnp.float32
    # tolerance accounts for bf16 weights/activation feeds (f32 accumulation)
    # and the EUP approx-reciprocal in softmax.
    assert jnp.allclose(out, ref, atol=3e-2, rtol=3e-2), (
        float(jnp.max(jnp.abs(out - ref))))

    print("KERNEL_OK")
</pallas_src>

<mosaic_0001>
module attributes {stable_mosaic.version = 11 : i64} {
  func.func @clip_kernel(%arg0: i32, %arg1: memref<1x8x128xf32, #tpu.memory_space<vmem>>, %arg2: memref<2x128x384xbf16, #tpu.memory_space<vmem>>, %arg3: memref<2x384xf32, #tpu.memory_space<vmem>>, %arg4: memref<2x128x128xbf16, #tpu.memory_space<vmem>>, %arg5: memref<2x128xf32, #tpu.memory_space<vmem>>, %arg6: memref<2x128x512xbf16, #tpu.memory_space<vmem>>, %arg7: memref<2x512xf32, #tpu.memory_space<vmem>>, %arg8: memref<2x512x128xbf16, #tpu.memory_space<vmem>>, %arg9: memref<2x128xf32, #tpu.memory_space<vmem>>, %arg10: memref<8x128xf32, #tpu.memory_space<vmem>>, %arg11: memref<2x128xf32, #tpu.memory_space<vmem>>, %arg12: memref<1x8x128xf32, #tpu.memory_space<vmem>>) attributes {dimension_semantics = [#tpu.dimension_semantics<parallel>], iteration_bounds = array<i64: 2>, scalar_prefetch = 0 : i64, scratch_operands = 0 : i64, tpu.core_type = #tpu.core_type<tc>, window_params = [{transform_indices = @transform_0, window_bounds = array<i64: 1, 8, 128>}, {pipeline_mode = #tpu.pipeline_mode<synchronous>, transform_indices = @transform_1, window_bounds = array<i64: 2, 128, 384>}, {pipeline_mode = #tpu.pipeline_mode<synchronous>, transform_indices = @transform_2, window_bounds = array<i64: 2, 384>}, {pipeline_mode = #tpu.pipeline_mode<synchronous>, transform_indices = @transform_3, window_bounds = array<i64: 2, 128, 128>}, {pipeline_mode = #tpu.pipeline_mode<synchronous>, transform_indices = @transform_4, window_bounds = array<i64: 2, 128>}, {pipeline_mode = #tpu.pipeline_mode<synchronous>, transform_indices = @transform_5, window_bounds = array<i64: 2, 128, 512>}, {pipeline_mode = #tpu.pipeline_mode<synchronous>, transform_indices = @transform_6, window_bounds = array<i64: 2, 512>}, {pipeline_mode = #tpu.pipeline_mode<synchronous>, transform_indices = @transform_7, window_bounds = array<i64: 2, 512, 128>}, {pipeline_mode = #tpu.pipeline_mode<synchronous>, transform_indices = @transform_8, window_bounds = array<i64: 2, 128>}, {pipeline_mode = #tpu.pipeline_mode<synchronous>, transform_indices = @transform_9, window_bounds = array<i64: 8, 128>}, {pipeline_mode = #tpu.pipeline_mode<synchronous>, transform_indices = @transform_10, window_bounds = array<i64: 2, 128>}, {transform_indices = @transform_11, window_bounds = array<i64: 1, 8, 128>}]} {
    %c0 = arith.constant 0 : index
    %c0_0 = arith.constant 0 : index
    %c0_1 = arith.constant 0 : index
    %0 = vector.load %arg1[%c0, %c0_0, %c0_1] : memref<1x8x128xf32, #tpu.memory_space<vmem>>, vector<1x8x128xf32>
    %1 = vector.shape_cast %0 : vector<1x8x128xf32> to vector<8x128xf32>
    %2 = tpu.iota {dimensions = array<i32: 0>} : vector<8x8xi32>
    %3 = tpu.iota {dimensions = array<i32: 1>} : vector<8x8xi32>
    %4 = arith.cmpi sle, %3, %2 : vector<8x8xi32>
    %cst = arith.constant 0.000000e+00 : f32
    %cst_2 = arith.constant -1.000000e+30 : f32
    %5 = vector.broadcast %cst : f32 to vector<8x8xf32>
    %6 = vector.broadcast %cst_2 : f32 to vector<8x8xf32>
    %7 = arith.select %4, %5, %6 : vector<8x8xi1>, vector<8x8xf32>
    %c0_3 = arith.constant 0 : index
    %c0_4 = arith.constant 0 : index
    %8 = vector.load %arg10[%c0_3, %c0_4] : memref<8x128xf32, #tpu.memory_space<vmem>>, vector<1x128xf32>
    %9 = vector.shape_cast %8 : vector<1x128xf32> to vector<128xf32>
    %c1 = arith.constant 1 : index
    %c0_5 = arith.constant 0 : index
    %10 = vector.load %arg10[%c1, %c0_5] : memref<8x128xf32, #tpu.memory_space<vmem>>, vector<1x128xf32>
    %11 = vector.shape_cast %10 : vector<1x128xf32> to vector<128xf32>
    %cst_6 = arith.constant dense<0.000000e+00> : vector<8xf32>
    %12 = vector.multi_reduction <add>, %1, %cst_6 [1] : vector<8x128xf32> to vector<8xf32>
    %13 = vector.shape_cast %12 : vector<8xf32> to vector<8x1xf32>
    %cst_7 = arith.constant 1.280000e+02 : f32
    %14 = vector.broadcast %cst_7 : f32 to vector<8x1xf32>
    %15 = arith.divf %13, %14 : vector<8x1xf32>
    %16 = vector.broadcast %15 : vector<8x1xf32> to vector<8x128xf32>
    %17 = arith.subf %1, %16 : vector<8x128xf32>
    %18 = arith.mulf %17, %17 : vector<8x128xf32>
    %cst_8 = arith.constant dense<0.000000e+00> : vector<8xf32>
    %19 = vector.multi_reduction <add>, %18, %cst_8 [1] : vector<8x128xf32> to vector<8xf32>
    %20 = vector.shape_cast %19 : vector<8xf32> to vector<8x1xf32>
    %cst_9 = arith.constant 1.280000e+02 : f32
    %21 = vector.broadcast %cst_9 : f32 to vector<8x1xf32>
    %22 = arith.divf %20, %21 : vector<8x1xf32>
    %23 = vector.broadcast %15 : vector<8x1xf32> to vector<8x128xf32>
    %24 = arith.subf %1, %23 : vector<8x128xf32>
    %cst_10 = arith.constant 9.99999974E-6 : f32
    %25 = vector.broadcast %cst_10 : f32 to vector<8x1xf32>
    %26 = arith.addf %22, %25 : vector<8x1xf32>
    %27 = math.rsqrt %26 : vector<8x1xf32>
    %28 = vector.broadcast %27 : vector<8x1xf32> to vector<8x128xf32>
    %29 = arith.mulf %24, %28 : vector<8x128xf32>
    %30 = vector.shape_cast %9 : vector<128xf32> to vector<1x128xf32>
    %31 = vector.broadcast %30 : vector<1x128xf32> to vector<8x128xf32>
    %32 = arith.mulf %29, %31 : vector<8x128xf32>
    %33 = vector.shape_cast %11 : vector<128xf32> to vector<1x128xf32>
    %34 = vector.broadcast %33 : vector<1x128xf32> to vector<8x128xf32>
    %35 = arith.addf %32, %34 : vector<8x128xf32>
    %36 = arith.truncf %35 : vector<8x128xf32> to vector<8x128xbf16>
    %c0_11 = arith.constant 0 : index
    %c0_12 = arith.constant 0 : index
    %c0_13 = arith.constant 0 : index
    %37 = vector.load %arg2[%c0_11, %c0_12, %c0_13] : memref<2x128x384xbf16, #tpu.memory_space<vmem>>, vector<1x128x384xbf16>
    %38 = vector.shape_cast %37 : vector<1x128x384xbf16> to vector<128x384xbf16>
    %cst_14 = arith.constant dense<0.000000e+00> : vector<8x384xf32>
    %39 = tpu.matmul %36, %38, %cst_14 {dimension_numbers = #tpu.dot_dimension_numbers<[1], [0], [0], [1], [0, 0, 1, 1], [], []>} : vector<8x128xbf16>, vector<128x384xbf16>, vector<8x384xf32> -> vector<8x384xf32>
    %c0_15 = arith.constant 0 : index
    %c0_16 = arith.constant 0 : index
    %40 = vector.load %arg3[%c0_15, %c0_16] : memref<2x384xf32, #tpu.memory_space<vmem>>, vector<1x384xf32>
    %41 = vector.shape_cast %40 : vector<1x384xf32> to vector<384xf32>
    %42 = vector.shape_cast %41 : vector<384xf32> to vector<1x384xf32>
    %43 = vector.broadcast %42 : vector<1x384xf32> to vector<8x384xf32>
    %44 = arith.addf %39, %43 : vector<8x384xf32>
    %45 = vector.extract_strided_slice %44 {offsets = [0, 0], sizes = [8, 128], strides = [1, 1]} : vector<8x384xf32> to vector<8x128xf32>
    %46 = vector.extract_strided_slice %44 {offsets = [0, 128], sizes = [8, 128], strides = [1, 1]} : vector<8x384xf32> to vector<8x128xf32>
    %47 = vector.extract_strided_slice %44 {offsets = [0, 256], sizes = [8, 128], strides = [1, 1]} : vector<8x384xf32> to vector<8x128xf32>
    %48 = vector.extract_strided_slice %45 {offsets = [0, 0], sizes = [8, 32], strides = [1, 1]} : vector<8x128xf32> to vector<8x32xf32>
    %49 = vector.extract_strided_slice %46 {offsets = [0, 0], sizes = [8, 32], strides = [1, 1]} : vector<8x128xf32> to vector<8x32xf32>
    %50 = vector.extract_strided_slice %47 {offsets = [0, 0], sizes = [8, 32], strides = [1, 1]} : vector<8x128xf32> to vector<8x32xf32>
    "tpu.trace_start"() <{level = 10 : i32, message = "qd,kd->qk"}> : () -> ()
    %cst_17 = arith.constant dense<0.000000e+00> : vector<8x8xf32>
    %51 = tpu.matmul %48, %49, %cst_17 {dimension_numbers = #tpu.dot_dimension_numbers<[1], [1], [0], [0], [0, 0, 1, 0], [], []>} : vector<8x32xf32>, vector<8x32xf32>, vector<8x8xf32> -> vector<8x8xf32>
    "tpu.trace_stop"() : () -> ()
    %cst_18 = arith.constant 0.176776692 : f32
    %52 = vector.broadcast %cst_18 : f32 to vector<8x8xf32>
    %53 = arith.mulf %51, %52 : vector<8x8xf32>
    %54 = arith.addf %53, %7 : vector<8x8xf32>
    %cst_19 = arith.constant dense<0xFF800000> : vector<8xf32>
    %55 = vector.multi_reduction <maximumf>, %54, %cst_19 [1] : vector<8x8xf32> to vector<8xf32>
    %56 = vector.shape_cast %55 : vector<8xf32> to vector<8x1xf32>
    %57 = vector.broadcast %56 : vector<8x1xf32> to vector<8x8xf32>
    %58 = arith.subf %54, %57 : vector<8x8xf32>
    %59 = math.exp %58 : vector<8x8xf32>
    %cst_20 = arith.constant dense<0.000000e+00> : vector<8xf32>
    %60 = vector.multi_reduction <add>, %59, %cst_20 [1] : vector<8x8xf32> to vector<8xf32>
    %61 = vector.shape_cast %60 : vector<8xf32> to vector<8x1xf32>
    %62 = tpu.reciprocal %61 {approx = true} : vector<8x1xf32> -> vector<8x1xf32>
    %63 = vector.broadcast %62 : vector<8x1xf32> to vector<8x8xf32>
    %64 = arith.mulf %59, %63 : vector<8x8xf32>
    %cst_21 = arith.constant dense<0.000000e+00> : vector<8x32xf32>
    %65 = tpu.matmul %64, %50, %cst_21 {dimension_numbers = #tpu.dot_dimension_numbers<[1], [0], [0], [1], [0, 0, 1, 1], [], []>} : vector<8x8xf32>, vector<8x32xf32>, vector<8x32xf32> -> vector<8x32xf32>
    %66 = vector.extract_strided_slice %45 {offsets = [0, 32], sizes = [8, 32], strides = [1, 1]} : vector<8x128xf32> to vector<8x32xf32>
    %67 = vector.extract_strided_slice %46 {offsets = [0, 32], sizes = [8, 32], strides = [1, 1]} : vector<8x128xf32> to vector<8x32xf32>
    %68 = vector.extract_strided_slice %47 {offsets = [0, 32], sizes = [8, 32], strides = [1, 1]} : vector<8x128xf32> to vector<8x32xf32>
    "tpu.trace_start"() <{level = 10 : i32, message = "qd,kd->qk"}> : () -> ()
    %cst_22 = arith.constant dense<0.000000e+00> : vector<8x8xf32>
    %69 = tpu.matmul %66, %67, %cst_22 {dimension_numbers = #tpu.dot_dimension_numbers<[1], [1], [0], [0], [0, 0, 1, 0], [], []>} : vector<8x32xf32>, vector<8x32xf32>, vector<8x8xf32> -> vector<8x8xf32>
    "tpu.trace_stop"() : () -> ()
    %cst_23 = arith.constant 0.176776692 : f32
    %70 = vector.broadcast %cst_23 : f32 to vector<8x8xf32>
    %71 = arith.mulf %69, %70 : vector<8x8xf32>
    %72 = arith.addf %71, %7 : vector<8x8xf32>
    %cst_24 = arith.constant dense<0xFF800000> : vector<8xf32>
    %73 = vector.multi_reduction <maximumf>, %72, %cst_24 [1] : vector<8x8xf32> to vector<8xf32>
    %74 = vector.shape_cast %73 : vector<8xf32> to vector<8x1xf32>
    %75 = vector.broadcast %74 : vector<8x1xf32> to vector<8x8xf32>
    %76 = arith.subf %72, %75 : vector<8x8xf32>
    %77 = math.exp %76 : vector<8x8xf32>
    %cst_25 = arith.constant dense<0.000000e+00> : vector<8xf32>
    %78 = vector.multi_reduction <add>, %77, %cst_25 [1] : vector<8x8xf32> to vector<8xf32>
    %79 = vector.shape_cast %78 : vector<8xf32> to vector<8x1xf32>
    %80 = tpu.reciprocal %79 {approx = true} : vector<8x1xf32> -> vector<8x1xf32>
    %81 = vector.broadcast %80 : vector<8x1xf32> to vector<8x8xf32>
    %82 = arith.mulf %77, %81 : vector<8x8xf32>
    %cst_26 = arith.constant dense<0.000000e+00> : vector<8x32xf32>
    %83 = tpu.matmul %82, %68, %cst_26 {dimension_numbers = #tpu.dot_dimension_numbers<[1], [0], [0], [1], [0, 0, 1, 1], [], []>} : vector<8x8xf32>, vector<8x32xf32>, vector<8x32xf32> -> vector<8x32xf32>
    %84 = vector.extract_strided_slice %45 {offsets = [0, 64], sizes = [8, 32], strides = [1, 1]} : vector<8x128xf32> to vector<8x32xf32>
    %85 = vector.extract_strided_slice %46 {offsets = [0, 64], sizes = [8, 32], strides = [1, 1]} : vector<8x128xf32> to vector<8x32xf32>
    %86 = vector.extract_strided_slice %47 {offsets = [0, 64], sizes = [8, 32], strides = [1, 1]} : vector<8x128xf32> to vector<8x32xf32>
    "tpu.trace_start"() <{level = 10 : i32, message = "qd,kd->qk"}> : () -> ()
    %cst_27 = arith.constant dense<0.000000e+00> : vector<8x8xf32>
    %87 = tpu.matmul %84, %85, %cst_27 {dimension_numbers = #tpu.dot_dimension_numbers<[1], [1], [0], [0], [0, 0, 1, 0], [], []>} : vector<8x32xf32>, vector<8x32xf32>, vector<8x8xf32> -> vector<8x8xf32>
    "tpu.trace_stop"() : () -> ()
    %cst_28 = arith.constant 0.176776692 : f32
    %88 = vector.broadcast %cst_28 : f32 to vector<8x8xf32>
    %89 = arith.mulf %87, %88 : vector<8x8xf32>
    %90 = arith.addf %89, %7 : vector<8x8xf32>
    %cst_29 = arith.constant dense<0xFF800000> : vector<8xf32>
    %91 = vector.multi_reduction <maximumf>, %90, %cst_29 [1] : vector<8x8xf32> to vector<8xf32>
    %92 = vector.shape_cast %91 : vector<8xf32> to vector<8x1xf32>
    %93 = vector.broadcast %92 : vector<8x1xf32> to vector<8x8xf32>
    %94 = arith.subf %90, %93 : vector<8x8xf32>
    %95 = math.exp %94 : vector<8x8xf32>
    %cst_30 = arith.constant dense<0.000000e+00> : vector<8xf32>
    %96 = vector.multi_reduction <add>, %95, %cst_30 [1] : vector<8x8xf32> to vector<8xf32>
    %97 = vector.shape_cast %96 : vector<8xf32> to vector<8x1xf32>
    %98 = tpu.reciprocal %97 {approx = true} : vector<8x1xf32> -> vector<8x1xf32>
    %99 = vector.broadcast %98 : vector<8x1xf32> to vector<8x8xf32>
    %100 = arith.mulf %95, %99 : vector<8x8xf32>
    %cst_31 = arith.constant dense<0.000000e+00> : vector<8x32xf32>
    %101 = tpu.matmul %100, %86, %cst_31 {dimension_numbers = #tpu.dot_dimension_numbers<[1], [0], [0], [1], [0, 0, 1, 1], [], []>} : vector<8x8xf32>, vector<8x32xf32>, vector<8x32xf32> -> vector<8x32xf32>
    %102 = vector.extract_strided_slice %45 {offsets = [0, 96], sizes = [8, 32], strides = [1, 1]} : vector<8x128xf32> to vector<8x32xf32>
    %103 = vector.extract_strided_slice %46 {offsets = [0, 96], sizes = [8, 32], strides = [1, 1]} : vector<8x128xf32> to vector<8x32xf32>
    %104 = vector.extract_strided_slice %47 {offsets = [0, 96], sizes = [8, 32], strides = [1, 1]} : vector<8x128xf32> to vector<8x32xf32>
    "tpu.trace_start"() <{level = 10 : i32, message = "qd,kd->qk"}> : () -> ()
    %cst_32 = arith.constant dense<0.000000e+00> : vector<8x8xf32>
    %105 = tpu.matmul %102, %103, %cst_32 {dimension_numbers = #tpu.dot_dimension_numbers<[1], [1], [0], [0], [0, 0, 1, 0], [], []>} : vector<8x32xf32>, vector<8x32xf32>, vector<8x8xf32> -> vector<8x8xf32>
    "tpu.trace_stop"() : () -> ()
    %cst_33 = arith.constant 0.176776692 : f32
    %106 = vector.broadcast %cst_33 : f32 to vector<8x8xf32>
    %107 = arith.mulf %105, %106 : vector<8x8xf32>
    %108 = arith.addf %107, %7 : vector<8x8xf32>
    %cst_34 = arith.constant dense<0xFF800000> : vector<8xf32>
    %109 = vector.multi_reduction <maximumf>, %108, %cst_34 [1] : vector<8x8xf32> to vector<8xf32>
    %110 = vector.shape_cast %109 : vector<8xf32> to vector<8x1xf32>
    %111 = vector.broadcast %110 : vector<8x1xf32> to vector<8x8xf32>
    %112 = arith.subf %108, %111 : vector<8x8xf32>
    %113 = math.exp %112 : vector<8x8xf32>
    %cst_35 = arith.constant dense<0.000000e+00> : vector<8xf32>
    %114 = vector.multi_reduction <add>, %113, %cst_35 [1] : vector<8x8xf32> to vector<8xf32>
    %115 = vector.shape_cast %114 : vector<8xf32> to vector<8x1xf32>
    %116 = tpu.reciprocal %115 {approx = true} : vector<8x1xf32> -> vector<8x1xf32>
    %117 = vector.broadcast %116 : vector<8x1xf32> to vector<8x8xf32>
    %118 = arith.mulf %113, %117 : vector<8x8xf32>
    %cst_36 = arith.constant dense<0.000000e+00> : vector<8x32xf32>
    %119 = tpu.matmul %118, %104, %cst_36 {dimension_numbers = #tpu.dot_dimension_numbers<[1], [0], [0], [1], [0, 0, 1, 1], [], []>} : vector<8x8xf32>, vector<8x32xf32>, vector<8x32xf32> -> vector<8x32xf32>
    %120 = tpu.concatenate %65, %83, %101, %119 in 1 : vector<8x32xf32>, vector<8x32xf32>, vector<8x32xf32>, vector<8x32xf32> -> vector<8x128xf32>
    %121 = arith.truncf %120 : vector<8x128xf32> to vector<8x128xbf16>
    %c0_37 = arith.constant 0 : index
    %c0_38 = arith.constant 0 : index
    %c0_39 = arith.constant 0 : index
    %122 = vector.load %arg4[%c0_37, %c0_38, %c0_39] : memref<2x128x128xbf16, #tpu.memory_space<vmem>>, vector<1x128x128xbf16>
    %123 = vector.shape_cast %122 : vector<1x128x128xbf16> to vector<128x128xbf16>
    %cst_40 = arith.constant dense<0.000000e+00> : vector<8x128xf32>
    %124 = tpu.matmul %121, %123, %cst_40 {dimension_numbers = #tpu.dot_dimension_numbers<[1], [0], [0], [1], [0, 0, 1, 1], [], []>} : vector<8x128xbf16>, vector<128x128xbf16>, vector<8x128xf32> -> vector<8x128xf32>
    %c0_41 = arith.constant 0 : index
    %c0_42 = arith.constant 0 : index
    %125 = vector.load %arg5[%c0_41, %c0_42] : memref<2x128xf32, #tpu.memory_space<vmem>>, vector<1x128xf32>
    %126 = vector.shape_cast %125 : vector<1x128xf32> to vector<128xf32>
    %127 = vector.shape_cast %126 : vector<128xf32> to vector<1x128xf32>
    %128 = vector.broadcast %127 : vector<1x128xf32> to vector<8x128xf32>
    %129 = arith.addf %124, %128 : vector<8x128xf32>
    %130 = arith.addf %129, %1 : vector<8x128xf32>
    %c2 = arith.constant 2 : index
    %c0_43 = arith.constant 0 : index
    %131 = vector.load %arg10[%c2, %c0_43] : memref<8x128xf32, #tpu.memory_space<vmem>>, vector<1x128xf32>
    %132 = vector.shape_cast %131 : vector<1x128xf32> to vector<128xf32>
    %c3 = arith.constant 3 : index
    %c0_44 = arith.constant 0 : index
    %133 = vector.load %arg10[%c3, %c0_44] : memref<8x128xf32, #tpu.memory_space<vmem>>, vector<1x128xf32>
    %134 = vector.shape_cast %133 : vector<1x128xf32> to vector<128xf32>
    %cst_45 = arith.constant dense<0.000000e+00> : vector<8xf32>
    %135 = vector.multi_reduction <add>, %130, %cst_45 [1] : vector<8x128xf32> to vector<8xf32>
    %136 = vector.shape_cast %135 : vector<8xf32> to vector<8x1xf32>
    %cst_46 = arith.constant 1.280000e+02 : f32
    %137 = vector.broadcast %cst_46 : f32 to vector<8x1xf32>
    %138 = arith.divf %136, %137 : vector<8x1xf32>
    %139 = vector.broadcast %138 : vector<8x1xf32> to vector<8x128xf32>
    %140 = arith.subf %130, %139 : vector<8x128xf32>
    %141 = arith.mulf %140, %140 : vector<8x128xf32>
    %cst_47 = arith.constant dense<0.000000e+00> : vector<8xf32>
    %142 = vector.multi_reduction <add>, %141, %cst_47 [1] : vector<8x128xf32> to vector<8xf32>
    %143 = vector.shape_cast %142 : vector<8xf32> to vector<8x1xf32>
    %cst_48 = arith.constant 1.280000e+02 : f32
    %144 = vector.broadcast %cst_48 : f32 to vector<8x1xf32>
    %145 = arith.divf %143, %144 : vector<8x1xf32>
    %146 = vector.broadcast %138 : vector<8x1xf32> to vector<8x128xf32>
    %147 = arith.subf %130, %146 : vector<8x128xf32>
    %cst_49 = arith.constant 9.99999974E-6 : f32
    %148 = vector.broadcast %cst_49 : f32 to vector<8x1xf32>
    %149 = arith.addf %145, %148 : vector<8x1xf32>
    %150 = math.rsqrt %149 : vector<8x1xf32>
    %151 = vector.broadcast %150 : vector<8x1xf32> to vector<8x128xf32>
    %152 = arith.mulf %147, %151 : vector<8x128xf32>
    %153 = vector.shape_cast %132 : vector<128xf32> to vector<1x128xf32>
    %154 = vector.broadcast %153 : vector<1x128xf32> to vector<8x128xf32>
    %155 = arith.mulf %152, %154 : vector<8x128xf32>
    %156 = vector.shape_cast %134 : vector<128xf32> to vector<1x128xf32>
    %157 = vector.broadcast %156 : vector<1x128xf32> to vector<8x128xf32>
    %158 = arith.addf %155, %157 : vector<8x128xf32>
    %159 = arith.truncf %158 : vector<8x128xf32> to vector<8x128xbf16>
    %c0_50 = arith.constant 0 : index
    %c0_51 = arith.constant 0 : index
    %c0_52 = arith.constant 0 : index
    %160 = vector.load %arg6[%c0_50, %c0_51, %c0_52] : memref<2x128x512xbf16, #tpu.memory_space<vmem>>, vector<1x128x512xbf16>
    %161 = vector.shape_cast %160 : vector<1x128x512xbf16> to vector<128x512xbf16>
    %cst_53 = arith.constant dense<0.000000e+00> : vector<8x512xf32>
    %162 = tpu.matmul %159, %161, %cst_53 {dimension_numbers = #tpu.dot_dimension_numbers<[1], [0], [0], [1], [0, 0, 1, 1], [], []>} : vector<8x128xbf16>, vector<128x512xbf16>, vector<8x512xf32> -> vector<8x512xf32>
    %c0_54 = arith.constant 0 : index
    %c0_55 = arith.constant 0 : index
    %163 = vector.load %arg7[%c0_54, %c0_55] : memref<2x512xf32, #tpu.memory_space<vmem>>, vector<1x512xf32>
    %164 = vector.shape_cast %163 : vector<1x512xf32> to vector<512xf32>
    %165 = vector.shape_cast %164 : vector<512xf32> to vector<1x512xf32>
    %166 = vector.broadcast %165 : vector<1x512xf32> to vector<8x512xf32>
    %167 = arith.addf %162, %166 : vector<8x512xf32>
    %cst_56 = arith.constant 1.702000e+00 : f32
    %168 = vector.broadcast %cst_56 : f32 to vector<8x512xf32>
    %169 = arith.mulf %168, %167 : vector<8x512xf32>
    %170 = arith.negf %169 : vector<8x512xf32>
    %171 = math.exp %170 : vector<8x512xf32>
    %cst_57 = arith.constant 1.000000e+00 : f32
    %172 = vector.broadcast %cst_57 : f32 to vector<8x512xf32>
    %173 = arith.addf %172, %171 : vector<8x512xf32>
    %174 = arith.divf %172, %173 : vector<8x512xf32>
    %175 = arith.mulf %167, %174 : vector<8x512xf32>
    %176 = arith.truncf %175 : vector<8x512xf32> to vector<8x512xbf16>
    %c0_58 = arith.constant 0 : index
    %c0_59 = arith.constant 0 : index
    %c0_60 = arith.constant 0 : index
    %177 = vector.load %arg8[%c0_58, %c0_59, %c0_60] : memref<2x512x128xbf16, #tpu.memory_space<vmem>>, vector<1x512x128xbf16>
    %178 = vector.shape_cast %177 : vector<1x512x128xbf16> to vector<512x128xbf16>
    %cst_61 = arith.constant dense<0.000000e+00> : vector<8x128xf32>
    %179 = tpu.matmul %176, %178, %cst_61 {dimension_numbers = #tpu.dot_dimension_numbers<[1], [0], [0], [1], [0, 0, 1, 1], [], []>} : vector<8x512xbf16>, vector<512x128xbf16>, vector<8x128xf32> -> vector<8x128xf32>
    %c0_62 = arith.constant 0 : index
    %c0_63 = arith.constant 0 : index
    %180 = vector.load %arg9[%c0_62, %c0_63] : memref<2x128xf32, #tpu.memory_space<vmem>>, vector<1x128xf32>
    %181 = vector.shape_cast %180 : vector<1x128xf32> to vector<128xf32>
    %182 = vector.shape_cast %181 : vector<128xf32> to vector<1x128xf32>
    %183 = vector.broadcast %182 : vector<1x128xf32> to vector<8x128xf32>
    %184 = arith.addf %179, %183 : vector<8x128xf32>
    %185 = arith.addf %184, %130 : vector<8x128xf32>
    %c4 = arith.constant 4 : index
    %c0_64 = arith.constant 0 : index
    %186 = vector.load %arg10[%c4, %c0_64] : memref<8x128xf32, #tpu.memory_space<vmem>>, vector<1x128xf32>
    %187 = vector.shape_cast %186 : vector<1x128xf32> to vector<128xf32>
    %c5 = arith.constant 5 : index
    %c0_65 = arith.constant 0 : index
    %188 = vector.load %arg10[%c5, %c0_65] : memref<8x128xf32, #tpu.memory_space<vmem>>, vector<1x128xf32>
    %189 = vector.shape_cast %188 : vector<1x128xf32> to vector<128xf32>
    %cst_66 = arith.constant dense<0.000000e+00> : vector<8xf32>
    %190 = vector.multi_reduction <add>, %185, %cst_66 [1] : vector<8x128xf32> to vector<8xf32>
    %191 = vector.shape_cast %190 : vector<8xf32> to vector<8x1xf32>
    %cst_67 = arith.constant 1.280000e+02 : f32
    %192 = vector.broadcast %cst_67 : f32 to vector<8x1xf32>
    %193 = arith.divf %191, %192 : vector<8x1xf32>
    %194 = vector.broadcast %193 : vector<8x1xf32> to vector<8x128xf32>
    %195 = arith.subf %185, %194 : vector<8x128xf32>
    %196 = arith.mulf %195, %195 : vector<8x128xf32>
    %cst_68 = arith.constant dense<0.000000e+00> : vector<8xf32>
    %197 = vector.multi_reduction <add>, %196, %cst_68 [1] : vector<8x128xf32> to vector<8xf32>
    %198 = vector.shape_cast %197 : vector<8xf32> to vector<8x1xf32>
    %cst_69 = arith.constant 1.280000e+02 : f32
    %199 = vector.broadcast %cst_69 : f32 to vector<8x1xf32>
    %200 = arith.divf %198, %199 : vector<8x1xf32>
    %201 = vector.broadcast %193 : vector<8x1xf32> to vector<8x128xf32>
    %202 = arith.subf %185, %201 : vector<8x128xf32>
    %cst_70 = arith.constant 9.99999974E-6 : f32
    %203 = vector.broadcast %cst_70 : f32 to vector<8x1xf32>
    %204 = arith.addf %200, %203 : vector<8x1xf32>
    %205 = math.rsqrt %204 : vector<8x1xf32>
    %206 = vector.broadcast %205 : vector<8x1xf32> to vector<8x128xf32>
    %207 = arith.mulf %202, %206 : vector<8x128xf32>
    %208 = vector.shape_cast %187 : vector<128xf32> to vector<1x128xf32>
    %209 = vector.broadcast %208 : vector<1x128xf32> to vector<8x128xf32>
    %210 = arith.mulf %207, %209 : vector<8x128xf32>
    %211 = vector.shape_cast %189 : vector<128xf32> to vector<1x128xf32>
    %212 = vector.broadcast %211 : vector<1x128xf32> to vector<8x128xf32>
    %213 = arith.addf %210, %212 : vector<8x128xf32>
    %214 = arith.truncf %213 : vector<8x128xf32> to vector<8x128xbf16>
    %c1_71 = arith.constant 1 : index
    %c0_72 = arith.constant 0 : index
    %c0_73 = arith.constant 0 : index
    %215 = vector.load %arg2[%c1_71, %c0_72, %c0_73] : memref<2x128x384xbf16, #tpu.memory_space<vmem>>, vector<1x128x384xbf16>
    %216 = vector.shape_cast %215 : vector<1x128x384xbf16> to vector<128x384xbf16>
    %cst_74 = arith.constant dense<0.000000e+00> : vector<8x384xf32>
    %217 = tpu.matmul %214, %216, %cst_74 {dimension_numbers = #tpu.dot_dimension_numbers<[1], [0], [0], [1], [0, 0, 1, 1], [], []>} : vector<8x128xbf16>, vector<128x384xbf16>, vector<8x384xf32> -> vector<8x384xf32>
    %c1_75 = arith.constant 1 : index
    %c0_76 = arith.constant 0 : index
    %218 = vector.load %arg3[%c1_75, %c0_76] : memref<2x384xf32, #tpu.memory_space<vmem>>, vector<1x384xf32>
    %219 = vector.shape_cast %218 : vector<1x384xf32> to vector<384xf32>
    %220 = vector.shape_cast %219 : vector<384xf32> to vector<1x384xf32>
    %221 = vector.broadcast %220 : vector<1x384xf32> to vector<8x384xf32>
    %222 = arith.addf %217, %221 : vector<8x384xf32>
    %223 = vector.extract_strided_slice %222 {offsets = [0, 0], sizes = [8, 128], strides = [1, 1]} : vector<8x384xf32> to vector<8x128xf32>
    %224 = vector.extract_strided_slice %222 {offsets = [0, 128], sizes = [8, 128], strides = [1, 1]} : vector<8x384xf32> to vector<8x128xf32>
    %225 = vector.extract_strided_slice %222 {offsets = [0, 256], sizes = [8, 128], strides = [1, 1]} : vector<8x384xf32> to vector<8x128xf32>
    %226 = vector.extract_strided_slice %223 {offsets = [0, 0], sizes = [8, 32], strides = [1, 1]} : vector<8x128xf32> to vector<8x32xf32>
    %227 = vector.extract_strided_slice %224 {offsets = [0, 0], sizes = [8, 32], strides = [1, 1]} : vector<8x128xf32> to vector<8x32xf32>
    %228 = vector.extract_strided_slice %225 {offsets = [0, 0], sizes = [8, 32], strides = [1, 1]} : vector<8x128xf32> to vector<8x32xf32>
    "tpu.trace_start"() <{level = 10 : i32, message = "qd,kd->qk"}> : () -> ()
    %cst_77 = arith.constant dense<0.000000e+00> : vector<8x8xf32>
    %229 = tpu.matmul %226, %227, %cst_77 {dimension_numbers = #tpu.dot_dimension_numbers<[1], [1], [0], [0], [0, 0, 1, 0], [], []>} : vector<8x32xf32>, vector<8x32xf32>, vector<8x8xf32> -> vector<8x8xf32>
    "tpu.trace_stop"() : () -> ()
    %cst_78 = arith.constant 0.176776692 : f32
    %230 = vector.broadcast %cst_78 : f32 to vector<8x8xf32>
    %231 = arith.mulf %229, %230 : vector<8x8xf32>
    %232 = arith.addf %231, %7 : vector<8x8xf32>
    %cst_79 = arith.constant dense<0xFF800000> : vector<8xf32>
    %233 = vector.multi_reduction <maximumf>, %232, %cst_79 [1] : vector<8x8xf32> to vector<8xf32>
    %234 = vector.shape_cast %233 : vector<8xf32> to vector<8x1xf32>
    %235 = vector.broadcast %234 : vector<8x1xf32> to vector<8x8xf32>
    %236 = arith.subf %232, %235 : vector<8x8xf32>
    %237 = math.exp %236 : vector<8x8xf32>
    %cst_80 = arith.constant dense<0.000000e+00> : vector<8xf32>
    %238 = vector.multi_reduction <add>, %237, %cst_80 [1] : vector<8x8xf32> to vector<8xf32>
    %239 = vector.shape_cast %238 : vector<8xf32> to vector<8x1xf32>
    %240 = tpu.reciprocal %239 {approx = true} : vector<8x1xf32> -> vector<8x1xf32>
    %241 = vector.broadcast %240 : vector<8x1xf32> to vector<8x8xf32>
    %242 = arith.mulf %237, %241 : vector<8x8xf32>
    %cst_81 = arith.constant dense<0.000000e+00> : vector<8x32xf32>
    %243 = tpu.matmul %242, %228, %cst_81 {dimension_numbers = #tpu.dot_dimension_numbers<[1], [0], [0], [1], [0, 0, 1, 1], [], []>} : vector<8x8xf32>, vector<8x32xf32>, vector<8x32xf32> -> vector<8x32xf32>
    %244 = vector.extract_strided_slice %223 {offsets = [0, 32], sizes = [8, 32], strides = [1, 1]} : vector<8x128xf32> to vector<8x32xf32>
    %245 = vector.extract_strided_slice %224 {offsets = [0, 32], sizes = [8, 32], strides = [1, 1]} : vector<8x128xf32> to vector<8x32xf32>
    %246 = vector.extract_strided_slice %225 {offsets = [0, 32], sizes = [8, 32], strides = [1, 1]} : vector<8x128xf32> to vector<8x32xf32>
    "tpu.trace_start"() <{level = 10 : i32, message = "qd,kd->qk"}> : () -> ()
    %cst_82 = arith.constant dense<0.000000e+00> : vector<8x8xf32>
    %247 = tpu.matmul %244, %245, %cst_82 {dimension_numbers = #tpu.dot_dimension_numbers<[1], [1], [0], [0], [0, 0, 1, 0], [], []>} : vector<8x32xf32>, vector<8x32xf32>, vector<8x8xf32> -> vector<8x8xf32>
    "tpu.trace_stop"() : () -> ()
    %cst_83 = arith.constant 0.176776692 : f32
    %248 = vector.broadcast %cst_83 : f32 to vector<8x8xf32>
    %249 = arith.mulf %247, %248 : vector<8x8xf32>
    %250 = arith.addf %249, %7 : vector<8x8xf32>
    %cst_84 = arith.constant dense<0xFF800000> : vector<8xf32>
    %251 = vector.multi_reduction <maximumf>, %250, %cst_84 [1] : vector<8x8xf32> to vector<8xf32>
    %252 = vector.shape_cast %251 : vector<8xf32> to vector<8x1xf32>
    %253 = vector.broadcast %252 : vector<8x1xf32> to vector<8x8xf32>
    %254 = arith.subf %250, %253 : vector<8x8xf32>
    %255 = math.exp %254 : vector<8x8xf32>
    %cst_85 = arith.constant dense<0.000000e+00> : vector<8xf32>
    %256 = vector.multi_reduction <add>, %255, %cst_85 [1] : vector<8x8xf32> to vector<8xf32>
    %257 = vector.shape_cast %256 : vector<8xf32> to vector<8x1xf32>
    %258 = tpu.reciprocal %257 {approx = true} : vector<8x1xf32> -> vector<8x1xf32>
    %259 = vector.broadcast %258 : vector<8x1xf32> to vector<8x8xf32>
    %260 = arith.mulf %255, %259 : vector<8x8xf32>
    %cst_86 = arith.constant dense<0.000000e+00> : vector<8x32xf32>
    %261 = tpu.matmul %260, %246, %cst_86 {dimension_numbers = #tpu.dot_dimension_numbers<[1], [0], [0], [1], [0, 0, 1, 1], [], []>} : vector<8x8xf32>, vector<8x32xf32>, vector<8x32xf32> -> vector<8x32xf32>
    %262 = vector.extract_strided_slice %223 {offsets = [0, 64], sizes = [8, 32], strides = [1, 1]} : vector<8x128xf32> to vector<8x32xf32>
    %263 = vector.extract_strided_slice %224 {offsets = [0, 64], sizes = [8, 32], strides = [1, 1]} : vector<8x128xf32> to vector<8x32xf32>
    %264 = vector.extract_strided_slice %225 {offsets = [0, 64], sizes = [8, 32], strides = [1, 1]} : vector<8x128xf32> to vector<8x32xf32>
    "tpu.trace_start"() <{level = 10 : i32, message = "qd,kd->qk"}> : () -> ()
    %cst_87 = arith.constant dense<0.000000e+00> : vector<8x8xf32>
    %265 = tpu.matmul %262, %263, %cst_87 {dimension_numbers = #tpu.dot_dimension_numbers<[1], [1], [0], [0], [0, 0, 1, 0], [], []>} : vector<8x32xf32>, vector<8x32xf32>, vector<8x8xf32> -> vector<8x8xf32>
    "tpu.trace_stop"() : () -> ()
    %cst_88 = arith.constant 0.176776692 : f32
    %266 = vector.broadcast %cst_88 : f32 to vector<8x8xf32>
    %267 = arith.mulf %265, %266 : vector<8x8xf32>
    %268 = arith.addf %267, %7 : vector<8x8xf32>
    %cst_89 = arith.constant dense<0xFF800000> : vector<8xf32>
    %269 = vector.multi_reduction <maximumf>, %268, %cst_89 [1] : vector<8x8xf32> to vector<8xf32>
    %270 = vector.shape_cast %269 : vector<8xf32> to vector<8x1xf32>
    %271 = vector.broadcast %270 : vector<8x1xf32> to vector<8x8xf32>
    %272 = arith.subf %268, %271 : vector<8x8xf32>
    %273 = math.exp %272 : vector<8x8xf32>
    %cst_90 = arith.constant dense<0.000000e+00> : vector<8xf32>
    %274 = vector.multi_reduction <add>, %273, %cst_90 [1] : vector<8x8xf32> to vector<8xf32>
    %275 = vector.shape_cast %274 : vector<8xf32> to vector<8x1xf32>
    %276 = tpu.reciprocal %275 {approx = true} : vector<8x1xf32> -> vector<8x1xf32>
    %277 = vector.broadcast %276 : vector<8x1xf32> to vector<8x8xf32>
    %278 = arith.mulf %273, %277 : vector<8x8xf32>
    %cst_91 = arith.constant dense<0.000000e+00> : vector<8x32xf32>
    %279 = tpu.matmul %278, %264, %cst_91 {dimension_numbers = #tpu.dot_dimension_numbers<[1], [0], [0], [1], [0, 0, 1, 1], [], []>} : vector<8x8xf32>, vector<8x32xf32>, vector<8x32xf32> -> vector<8x32xf32>
    %280 = vector.extract_strided_slice %223 {offsets = [0, 96], sizes = [8, 32], strides = [1, 1]} : vector<8x128xf32> to vector<8x32xf32>
    %281 = vector.extract_strided_slice %224 {offsets = [0, 96], sizes = [8, 32], strides = [1, 1]} : vector<8x128xf32> to vector<8x32xf32>
    %282 = vector.extract_strided_slice %225 {offsets = [0, 96], sizes = [8, 32], strides = [1, 1]} : vector<8x128xf32> to vector<8x32xf32>
    "tpu.trace_start"() <{level = 10 : i32, message = "qd,kd->qk"}> : () -> ()
    %cst_92 = arith.constant dense<0.000000e+00> : vector<8x8xf32>
    %283 = tpu.matmul %280, %281, %cst_92 {dimension_numbers = #tpu.dot_dimension_numbers<[1], [1], [0], [0], [0, 0, 1, 0], [], []>} : vector<8x32xf32>, vector<8x32xf32>, vector<8x8xf32> -> vector<8x8xf32>
    "tpu.trace_stop"() : () -> ()
    %cst_93 = arith.constant 0.176776692 : f32
    %284 = vector.broadcast %cst_93 : f32 to vector<8x8xf32>
    %285 = arith.mulf %283, %284 : vector<8x8xf32>
    %286 = arith.addf %285, %7 : vector<8x8xf32>
    %cst_94 = arith.constant dense<0xFF800000> : vector<8xf32>
    %287 = vector.multi_reduction <maximumf>, %286, %cst_94 [1] : vector<8x8xf32> to vector<8xf32>
    %288 = vector.shape_cast %287 : vector<8xf32> to vector<8x1xf32>
    %289 = vector.broadcast %288 : vector<8x1xf32> to vector<8x8xf32>
    %290 = arith.subf %286, %289 : vector<8x8xf32>
    %291 = math.exp %290 : vector<8x8xf32>
    %cst_95 = arith.constant dense<0.000000e+00> : vector<8xf32>
    %292 = vector.multi_reduction <add>, %291, %cst_95 [1] : vector<8x8xf32> to vector<8xf32>
    %293 = vector.shape_cast %292 : vector<8xf32> to vector<8x1xf32>
    %294 = tpu.reciprocal %293 {approx = true} : vector<8x1xf32> -> vector<8x1xf32>
    %295 = vector.broadcast %294 : vector<8x1xf32> to vector<8x8xf32>
    %296 = arith.mulf %291, %295 : vector<8x8xf32>
    %cst_96 = arith.constant dense<0.000000e+00> : vector<8x32xf32>
    %297 = tpu.matmul %296, %282, %cst_96 {dimension_numbers = #tpu.dot_dimension_numbers<[1], [0], [0], [1], [0, 0, 1, 1], [], []>} : vector<8x8xf32>, vector<8x32xf32>, vector<8x32xf32> -> vector<8x32xf32>
    %298 = tpu.concatenate %243, %261, %279, %297 in 1 : vector<8x32xf32>, vector<8x32xf32>, vector<8x32xf32>, vector<8x32xf32> -> vector<8x128xf32>
    %299 = arith.truncf %298 : vector<8x128xf32> to vector<8x128xbf16>
    %c1_97 = arith.constant 1 : index
    %c0_98 = arith.constant 0 : index
    %c0_99 = arith.constant 0 : index
    %300 = vector.load %arg4[%c1_97, %c0_98, %c0_99] : memref<2x128x128xbf16, #tpu.memory_space<vmem>>, vector<1x128x128xbf16>
    %301 = vector.shape_cast %300 : vector<1x128x128xbf16> to vector<128x128xbf16>
    %cst_100 = arith.constant dense<0.000000e+00> : vector<8x128xf32>
    %302 = tpu.matmul %299, %301, %cst_100 {dimension_numbers = #tpu.dot_dimension_numbers<[1], [0], [0], [1], [0, 0, 1, 1], [], []>} : vector<8x128xbf16>, vector<128x128xbf16>, vector<8x128xf32> -> vector<8x128xf32>
    %c1_101 = arith.constant 1 : index
    %c0_102 = arith.constant 0 : index
    %303 = vector.load %arg5[%c1_101, %c0_102] : memref<2x128xf32, #tpu.memory_space<vmem>>, vector<1x128xf32>
    %304 = vector.shape_cast %303 : vector<1x128xf32> to vector<128xf32>
    %305 = vector.shape_cast %304 : vector<128xf32> to vector<1x128xf32>
    %306 = vector.broadcast %305 : vector<1x128xf32> to vector<8x128xf32>
    %307 = arith.addf %302, %306 : vector<8x128xf32>
    %308 = arith.addf %307, %185 : vector<8x128xf32>
    %c6 = arith.constant 6 : index
    %c0_103 = arith.constant 0 : index
    %309 = vector.load %arg10[%c6, %c0_103] : memref<8x128xf32, #tpu.memory_space<vmem>>, vector<1x128xf32>
    %310 = vector.shape_cast %309 : vector<1x128xf32> to vector<128xf32>
    %c7 = arith.constant 7 : index
    %c0_104 = arith.constant 0 : index
    %311 = vector.load %arg10[%c7, %c0_104] : memref<8x128xf32, #tpu.memory_space<vmem>>, vector<1x128xf32>
    %312 = vector.shape_cast %311 : vector<1x128xf32> to vector<128xf32>
    %cst_105 = arith.constant dense<0.000000e+00> : vector<8xf32>
    %313 = vector.multi_reduction <add>, %308, %cst_105 [1] : vector<8x128xf32> to vector<8xf32>
    %314 = vector.shape_cast %313 : vector<8xf32> to vector<8x1xf32>
    %cst_106 = arith.constant 1.280000e+02 : f32
    %315 = vector.broadcast %cst_106 : f32 to vector<8x1xf32>
    %316 = arith.divf %314, %315 : vector<8x1xf32>
    %317 = vector.broadcast %316 : vector<8x1xf32> to vector<8x128xf32>
    %318 = arith.subf %308, %317 : vector<8x128xf32>
    %319 = arith.mulf %318, %318 : vector<8x128xf32>
    %cst_107 = arith.constant dense<0.000000e+00> : vector<8xf32>
    %320 = vector.multi_reduction <add>, %319, %cst_107 [1] : vector<8x128xf32> to vector<8xf32>
    %321 = vector.shape_cast %320 : vector<8xf32> to vector<8x1xf32>
    %cst_108 = arith.constant 1.280000e+02 : f32
    %322 = vector.broadcast %cst_108 : f32 to vector<8x1xf32>
    %323 = arith.divf %321, %322 : vector<8x1xf32>
    %324 = vector.broadcast %316 : vector<8x1xf32> to vector<8x128xf32>
    %325 = arith.subf %308, %324 : vector<8x128xf32>
    %cst_109 = arith.constant 9.99999974E-6 : f32
    %326 = vector.broadcast %cst_109 : f32 to vector<8x1xf32>
    %327 = arith.addf %323, %326 : vector<8x1xf32>
    %328 = math.rsqrt %327 : vector<8x1xf32>
    %329 = vector.broadcast %328 : vector<8x1xf32> to vector<8x128xf32>
    %330 = arith.mulf %325, %329 : vector<8x128xf32>
    %331 = vector.shape_cast %310 : vector<128xf32> to vector<1x128xf32>
    %332 = vector.broadcast %331 : vector<1x128xf32> to vector<8x128xf32>
    %333 = arith.mulf %330, %332 : vector<8x128xf32>
    %334 = vector.shape_cast %312 : vector<128xf32> to vector<1x128xf32>
    %335 = vector.broadcast %334 : vector<1x128xf32> to vector<8x128xf32>
    %336 = arith.addf %333, %335 : vector<8x128xf32>
    %337 = arith.truncf %336 : vector<8x128xf32> to vector<8x128xbf16>
    %c1_110 = arith.constant 1 : index
    %c0_111 = arith.constant 0 : index
    %c0_112 = arith.constant 0 : index
    %338 = vector.load %arg6[%c1_110, %c0_111, %c0_112] : memref<2x128x512xbf16, #tpu.memory_space<vmem>>, vector<1x128x512xbf16>
    %339 = vector.shape_cast %338 : vector<1x128x512xbf16> to vector<128x512xbf16>
    %cst_113 = arith.constant dense<0.000000e+00> : vector<8x512xf32>
    %340 = tpu.matmul %337, %339, %cst_113 {dimension_numbers = #tpu.dot_dimension_numbers<[1], [0], [0], [1], [0, 0, 1, 1], [], []>} : vector<8x128xbf16>, vector<128x512xbf16>, vector<8x512xf32> -> vector<8x512xf32>
    %c1_114 = arith.constant 1 : index
    %c0_115 = arith.constant 0 : index
    %341 = vector.load %arg7[%c1_114, %c0_115] : memref<2x512xf32, #tpu.memory_space<vmem>>, vector<1x512xf32>
    %342 = vector.shape_cast %341 : vector<1x512xf32> to vector<512xf32>
    %343 = vector.shape_cast %342 : vector<512xf32> to vector<1x512xf32>
    %344 = vector.broadcast %343 : vector<1x512xf32> to vector<8x512xf32>
    %345 = arith.addf %340, %344 : vector<8x512xf32>
    %cst_116 = arith.constant 1.702000e+00 : f32
    %346 = vector.broadcast %cst_116 : f32 to vector<8x512xf32>
    %347 = arith.mulf %346, %345 : vector<8x512xf32>
    %348 = arith.negf %347 : vector<8x512xf32>
    %349 = math.exp %348 : vector<8x512xf32>
    %cst_117 = arith.constant 1.000000e+00 : f32
    %350 = vector.broadcast %cst_117 : f32 to vector<8x512xf32>
    %351 = arith.addf %350, %349 : vector<8x512xf32>
    %352 = arith.divf %350, %351 : vector<8x512xf32>
    %353 = arith.mulf %345, %352 : vector<8x512xf32>
    %354 = arith.truncf %353 : vector<8x512xf32> to vector<8x512xbf16>
    %c1_118 = arith.constant 1 : index
    %c0_119 = arith.constant 0 : index
    %c0_120 = arith.constant 0 : index
    %355 = vector.load %arg8[%c1_118, %c0_119, %c0_120] : memref<2x512x128xbf16, #tpu.memory_space<vmem>>, vector<1x512x128xbf16>
    %356 = vector.shape_cast %355 : vector<1x512x128xbf16> to vector<512x128xbf16>
    %cst_121 = arith.constant dense<0.000000e+00> : vector<8x128xf32>
    %357 = tpu.matmul %354, %356, %cst_121 {dimension_numbers = #tpu.dot_dimension_numbers<[1], [0], [0], [1], [0, 0, 1, 1], [], []>} : vector<8x512xbf16>, vector<512x128xbf16>, vector<8x128xf32> -> vector<8x128xf32>
    %c1_122 = arith.constant 1 : index
    %c0_123 = arith.constant 0 : index
    %358 = vector.load %arg9[%c1_122, %c0_123] : memref<2x128xf32, #tpu.memory_space<vmem>>, vector<1x128xf32>
    %359 = vector.shape_cast %358 : vector<1x128xf32> to vector<128xf32>
    %360 = vector.shape_cast %359 : vector<128xf32> to vector<1x128xf32>
    %361 = vector.broadcast %360 : vector<1x128xf32> to vector<8x128xf32>
    %362 = arith.addf %357, %361 : vector<8x128xf32>
    %363 = arith.addf %362, %308 : vector<8x128xf32>
    %c0_124 = arith.constant 0 : index
    %c0_125 = arith.constant 0 : index
    %364 = vector.load %arg11[%c0_124, %c0_125] : memref<2x128xf32, #tpu.memory_space<vmem>>, vector<1x128xf32>
    %365 = vector.shape_cast %364 : vector<1x128xf32> to vector<128xf32>
    %c1_126 = arith.constant 1 : index
    %c0_127 = arith.constant 0 : index
    %366 = vector.load %arg11[%c1_126, %c0_127] : memref<2x128xf32, #tpu.memory_space<vmem>>, vector<1x128xf32>
    %367 = vector.shape_cast %366 : vector<1x128xf32> to vector<128xf32>
    %cst_128 = arith.constant dense<0.000000e+00> : vector<8xf32>
    %368 = vector.multi_reduction <add>, %363, %cst_128 [1] : vector<8x128xf32> to vector<8xf32>
    %369 = vector.shape_cast %368 : vector<8xf32> to vector<8x1xf32>
    %cst_129 = arith.constant 1.280000e+02 : f32
    %370 = vector.broadcast %cst_129 : f32 to vector<8x1xf32>
    %371 = arith.divf %369, %370 : vector<8x1xf32>
    %372 = vector.broadcast %371 : vector<8x1xf32> to vector<8x128xf32>
    %373 = arith.subf %363, %372 : vector<8x128xf32>
    %374 = arith.mulf %373, %373 : vector<8x128xf32>
    %cst_130 = arith.constant dense<0.000000e+00> : vector<8xf32>
    %375 = vector.multi_reduction <add>, %374, %cst_130 [1] : vector<8x128xf32> to vector<8xf32>
    %376 = vector.shape_cast %375 : vector<8xf32> to vector<8x1xf32>
    %cst_131 = arith.constant 1.280000e+02 : f32
    %377 = vector.broadcast %cst_131 : f32 to vector<8x1xf32>
    %378 = arith.divf %376, %377 : vector<8x1xf32>
    %379 = vector.broadcast %371 : vector<8x1xf32> to vector<8x128xf32>
    %380 = arith.subf %363, %379 : vector<8x128xf32>
    %cst_132 = arith.constant 9.99999974E-6 : f32
    %381 = vector.broadcast %cst_132 : f32 to vector<8x1xf32>
    %382 = arith.addf %378, %381 : vector<8x1xf32>
    %383 = math.rsqrt %382 : vector<8x1xf32>
    %384 = vector.broadcast %383 : vector<8x1xf32> to vector<8x128xf32>
    %385 = arith.mulf %380, %384 : vector<8x128xf32>
    %386 = vector.shape_cast %365 : vector<128xf32> to vector<1x128xf32>
    %387 = vector.broadcast %386 : vector<1x128xf32> to vector<8x128xf32>
    %388 = arith.mulf %385, %387 : vector<8x128xf32>
    %389 = vector.shape_cast %367 : vector<128xf32> to vector<1x128xf32>
    %390 = vector.broadcast %389 : vector<1x128xf32> to vector<8x128xf32>
    %391 = arith.addf %388, %390 : vector<8x128xf32>
    %c0_133 = arith.constant 0 : index
    %c0_134 = arith.constant 0 : index
    %c0_135 = arith.constant 0 : index
    %392 = vector.load %arg12[%c0_133, %c0_134, %c0_135] : memref<1x8x128xf32, #tpu.memory_space<vmem>>, vector<1x8x128xf32>
    %393 = vector.shape_cast %392 : vector<1x8x128xf32> to vector<8x128xf32>
    %394 = vector.shape_cast %391 : vector<8x128xf32> to vector<1x8x128xf32>
    tpu.vector_store %arg12[%c0_133, %c0_134, %c0_135], %394 {strides = array<i32>} : memref<1x8x128xf32, #tpu.memory_space<vmem>>, vector<1x8x128xf32>,
    return
  }
  func.func @transform_0(%arg0: i32) -> (i32, i32, i32) {
    %c0_i32 = arith.constant 0 : i32
    %c0_i32_0 = arith.constant 0 : i32
    %c0_i32_1 = arith.constant 0 : i32
    return %arg0, %c0_i32, %c0_i32_0 : i32, i32, i32
  }
  func.func @transform_1(%arg0: i32) -> (i32, i32, i32) {
    %c0_i32 = arith.constant 0 : i32
    %c0_i32_0 = arith.constant 0 : i32
    %c0_i32_1 = arith.constant 0 : i32
    %c0_i32_2 = arith.constant 0 : i32
    return %c0_i32, %c0_i32_0, %c0_i32_1 : i32, i32, i32
  }
  func.func @transform_2(%arg0: i32) -> (i32, i32) {
    %c0_i32 = arith.constant 0 : i32
    %c0_i32_0 = arith.constant 0 : i32
    %c0_i32_1 = arith.constant 0 : i32
    return %c0_i32, %c0_i32_0 : i32, i32
  }
  func.func @transform_3(%arg0: i32) -> (i32, i32, i32) {
    %c0_i32 = arith.constant 0 : i32
    %c0_i32_0 = arith.constant 0 : i32
    %c0_i32_1 = arith.constant 0 : i32
    %c0_i32_2 = arith.constant 0 : i32
    return %c0_i32, %c0_i32_0, %c0_i32_1 : i32, i32, i32
  }
  func.func @transform_4(%arg0: i32) -> (i32, i32) {
    %c0_i32 = arith.constant 0 : i32
    %c0_i32_0 = arith.constant 0 : i32
    %c0_i32_1 = arith.constant 0 : i32
    return %c0_i32, %c0_i32_0 : i32, i32
  }
  func.func @transform_5(%arg0: i32) -> (i32, i32, i32) {
    %c0_i32 = arith.constant 0 : i32
    %c0_i32_0 = arith.constant 0 : i32
    %c0_i32_1 = arith.constant 0 : i32
    %c0_i32_2 = arith.constant 0 : i32
    return %c0_i32, %c0_i32_0, %c0_i32_1 : i32, i32, i32
  }
  func.func @transform_6(%arg0: i32) -> (i32, i32) {
    %c0_i32 = arith.constant 0 : i32
    %c0_i32_0 = arith.constant 0 : i32
    %c0_i32_1 = arith.constant 0 : i32
    return %c0_i32, %c0_i32_0 : i32, i32
  }
  func.func @transform_7(%arg0: i32) -> (i32, i32, i32) {
    %c0_i32 = arith.constant 0 : i32
    %c0_i32_0 = arith.constant 0 : i32
    %c0_i32_1 = arith.constant 0 : i32
    %c0_i32_2 = arith.constant 0 : i32
    return %c0_i32, %c0_i32_0, %c0_i32_1 : i32, i32, i32
  }
  func.func @transform_8(%arg0: i32) -> (i32, i32) {
    %c0_i32 = arith.constant 0 : i32
    %c0_i32_0 = arith.constant 0 : i32
    %c0_i32_1 = arith.constant 0 : i32
    return %c0_i32, %c0_i32_0 : i32, i32
  }
  func.func @transform_9(%arg0: i32) -> (i32, i32) {
    %c0_i32 = arith.constant 0 : i32
    %c0_i32_0 = arith.constant 0 : i32
    %c0_i32_1 = arith.constant 0 : i32
    return %c0_i32, %c0_i32_0 : i32, i32
  }
  func.func @transform_10(%arg0: i32) -> (i32, i32) {
    %c0_i32 = arith.constant 0 : i32
    %c0_i32_0 = arith.constant 0 : i32
    %c0_i32_1 = arith.constant 0 : i32
    return %c0_i32, %c0_i32_0 : i32, i32
  }
  func.func @transform_11(%arg0: i32) -> (i32, i32, i32) {
    %c0_i32 = arith.constant 0 : i32
    %c0_i32_0 = arith.constant 0 : i32
    %c0_i32_1 = arith.constant 0 : i32
    return %arg0, %c0_i32, %c0_i32_0 : i32, i32, i32
  }
}

</mosaic_0001>

<llo_original>
// kernel: tpu_custom_call.1
$region0: #{tpu_custom_call.1}
  #allocation0 [shape = 'u32[]', space=smem, size = 0x4, offset = 0x4, fixed_abs, tag = 'smem constant byte address 0x4 - core index']
  #allocation1 [shape = 'u32[144,128]{1,0:T(1,128)}', space=vmem, size = 0x12000, scoped, tag = 'internal scratch']
  %s0 = inlined_call_operand.hbm [shape: f32[2,8,128], index: 0, kind: input, shape index: {}]
  %s1 = inlined_call_operand.hbm [shape: bf16[2,128,384], index: 1, kind: input, shape index: {}]
  %s2 = inlined_call_operand.hbm [shape: f32[2,384], index: 2, kind: input, shape index: {}]
  %s3 = inlined_call_operand.hbm [shape: bf16[2,128,128], index: 3, kind: input, shape index: {}]
  %s4 = inlined_call_operand.vmem [shape: f32[2,128], index: 4, kind: input, shape index: {}]
  %s5 = inlined_call_operand.hbm [shape: bf16[2,128,512], index: 5, kind: input, shape index: {}]
  %s6 = inlined_call_operand.vmem [shape: f32[2,512], index: 6, kind: input, shape index: {}]
  %s7 = inlined_call_operand.hbm [shape: bf16[2,512,128], index: 7, kind: input, shape index: {}]
  %s8 = inlined_call_operand.vmem [shape: f32[2,128], index: 8, kind: input, shape index: {}]
  %s9 = inlined_call_operand.vmem [shape: f32[8,128], index: 9, kind: input, shape index: {}]
  %s10 = inlined_call_operand.vmem [shape: f32[2,128], index: 10, kind: input, shape index: {}]
  %s11 = inlined_call_operand.hbm [shape: f32[2,8,128], index: 11, kind: output, shape index: {}]
  %s12 = sld [smem:[#allocation0]]
  $region101: #{tpu_custom_call.1} parent=0
    _
  %s14 = ssub.s32 1, %s12
  %s15 = scalar_select 0, %s14, %s12
  $region1: #{tpu_custom_call.1} parent=0
    #allocation2 [shape = 'u8[8192]{0}', space=vmem, size = 0x2000, scoped, tag = 'input window, operand 0']
    #allocation3 [shape = 's32[2]{0}', space=sflag, size = 0x8, scoped, tag = 'scoped memory for tpu_custom_call.1']
    #allocation4 [shape = 's32[2]{0}', space=sflag, size = 0x8, scoped, tag = 'scoped memory for tpu_custom_call.1']
    #allocation5 [shape = 'u8[196608]{0}', space=vmem, size = 0x30000, scoped, tag = 'input window, operand 1, single buffered']
    #allocation6 [shape = 's32[1]{0}', space=sflag, size = 0x4, scoped, tag = 'scoped memory for tpu_custom_call.1']
    #allocation7 [shape = 'u8[3072]{0}', space=vmem, size = 0xc00, scoped, tag = 'input window, operand 2, single buffered']
    #allocation8 [shape = 'u8[65536]{0}', space=vmem, size = 0x10000, scoped, tag = 'input window, operand 3, single buffered']
    #allocation9 [shape = 's32[1]{0}', space=sflag, size = 0x4, scoped, tag = 'scoped memory for tpu_custom_call.1']
    #allocation10 [shape = 'u8[262144]{0}', space=vmem, size = 0x40000, scoped, tag = 'input window, operand 5, single buffered']
    #allocation11 [shape = 'u8[262144]{0}', space=vmem, size = 0x40000, scoped, tag = 'input window, operand 7, single buffered']
    #allocation12 [shape = 's32[1]{0}', space=sflag, size = 0x4, scoped, tag = 'scoped memory for tpu_custom_call.1']
    #allocation13 [shape = 'u8[8192]{0}', space=vmem, size = 0x2000, scoped, tag = 'output window, operand 0']
    %16 = vsyncpa [#allocation3], 0
    %s17 = scalar_lea.sflag [#allocation3], 1
    %18 = vsyncpa %s17, 0
    %19 = vsyncpa [#allocation6], 0
    %20 = vsyncpa [#allocation9], 0
    %21 = vsyncpa [#allocation12], 0
    %22 = vsyncpa [#allocation4], 0
    %s23 = scalar_lea.sflag [#allocation4], 1
    %24 = vsyncpa %s23, 0
    loop: start=0, step=1, limit=4
    $region2: #{tpu_custom_call.1} parent=1 // loop_pre_header
      _
    $region3: #{tpu_custom_call.1} parent=1 // loop_header
      %s26 = sphi 0, %s30
      %p27 = scmp.ge.s32.totalorder %s26, 4
      %s36 = sphi 0, %s38
      %s39 = sphi 0, %s36
      %s40 = sphi 0, %s39
      %s56 = sphi 0, %s40
      %s60 = sphi 0, %s60
      %s62 = sphi 0, %s60
      %s63 = sphi 0, %s62
      %s77 = sphi 0, %s63
      %s81 = sphi 0, %s81
      %s83 = sphi 0, %s81
      %s84 = sphi 0, %s83
      %s98 = sphi 0, %s84
      %s102 = sphi 0, %s102
      %s104 = sphi 0, %s102
      %s105 = sphi 0, %s104
      %s119 = sphi 0, %s105
      %s123 = sphi 0, %s123
      %s125 = sphi 0, %s123
      %s126 = sphi 0, %s125
      %s140 = sphi 0, %s126
      %s144 = sphi 0, %s144
      %s146 = sphi 0, %s144
      %s147 = sphi 0, %s146
      %s161 = sphi 0, %s147
      %s165 = sphi 0, %s165
      %s167 = sphi 0, %s165
      %s168 = sphi 0, %s167
      %s182 = sphi 0, %s168
      %s186 = sphi 0, %s186
      %s188 = sphi 0, %s186
      %s189 = sphi 0, %s188
      %s203 = sphi 0, %s189
      %s207 = sphi 0, %s207
      %s209 = sphi 0, %s207
      %s210 = sphi 0, %s209
      %s224 = sphi 0, %s210
      %s228 = sphi 0, %s228
      %s230 = sphi 0, %s228
      %s231 = sphi 0, %s230
      %s245 = sphi 0, %s231
      %s249 = sphi 0, %s249
      %s251 = sphi 0, %s249
      %s252 = sphi 0, %s251
      %s266 = sphi 0, %s252
      %s272 = sphi 0, %s274
      %s275 = sphi 0, %s272
      %s276 = sphi 0, %s275
      %s292 = sphi 0, %s276
    $region4: #{tpu_custom_call.1} parent=1 // loop_header_branch
      %29 = sbr.rel (%p27) target = $region8
    $region5: #{tpu_custom_call.1} parent=1 // loop_body
      %s31 = ssub.s32 %s26, 1
      %s32 = ssub.s32 %s26, 2
      %s33 = sadd.s32 %s26, 1
      %s34 = ssub.s32 %s26, %s33
      %p35 = scmp.eq.s32.totalorder %s34, 0
      %s37 = sadd.s32 %s36, 1
      %s38 = scalar_select %p35, %s36, %s37
      %p41 = pneg %p35
      %p42 = scmp.eq.s32.totalorder %s26, 1
      %p43 = por %p41, %p42
      %p44 = scmp.ne.s32.totalorder %s36, %s39
      %p45 = scmp.eq.s32.totalorder %s26, 0
      %p46 = por %p44, %p45
      %p47 = scmp.ne.s32.totalorder %s36, %s39
      %p48 = scmp.eq.s32.totalorder %s31, 1
      %p49 = por %p47, %p48
      %p50 = scmp.ne.s32.totalorder %s39, %s40
      %p51 = scmp.eq.s32.totalorder %s31, 0
      %p52 = por %p50, %p51
      %p53 = scmp.ne.s32.totalorder %s39, %s40
      %p54 = scmp.eq.s32.totalorder %s32, 1
      %p55 = por %p53, %p54
      %p57 = scmp.ne.s32.totalorder %s40, %s56
      %p58 = scmp.eq.s32.totalorder %s32, 0
      %p59 = por %p57, %p58
      %s61 = sadd.s32 %s60, 1
      %p64 = scmp.eq.s32.totalorder %s26, 1
      %p65 = scmp.ne.s32.totalorder %s60, %s62
      %p66 = scmp.eq.s32.totalorder %s26, 0
      %p67 = por %p65, %p66
      %p68 = scmp.ne.s32.totalorder %s60, %s62
      %p69 = scmp.eq.s32.totalorder %s31, 1
      %p70 = por %p68, %p69
      %p71 = scmp.ne.s32.totalorder %s62, %s63
      %p72 = scmp.eq.s32.totalorder %s31, 0
      %p73 = por %p71, %p72
      %p74 = scmp.ne.s32.totalorder %s62, %s63
      %p75 = scmp.eq.s32.totalorder %s32, 1
      %p76 = por %p74, %p75
      %p78 = scmp.ne.s32.totalorder %s63, %s77
      %p79 = scmp.eq.s32.totalorder %s32, 0
      %p80 = por %p78, %p79
      %s82 = sadd.s32 %s81, 1
      %p85 = scmp.eq.s32.totalorder %s26, 1
      %p86 = scmp.ne.s32.totalorder %s81, %s83
      %p87 = scmp.eq.s32.totalorder %s26, 0
      %p88 = por %p86, %p87
      %p89 = scmp.ne.s32.totalorder %s81, %s83
      %p90 = scmp.eq.s32.totalorder %s31, 1
      %p91 = por %p89, %p90
      %p92 = scmp.ne.s32.totalorder %s83, %s84
      %p93 = scmp.eq.s32.totalorder %s31, 0
      %p94 = por %p92, %p93
      %p95 = scmp.ne.s32.totalorder %s83, %s84
      %p96 = scmp.eq.s32.totalorder %s32, 1
      %p97 = por %p95, %p96
      %p99 = scmp.ne.s32.totalorder %s84, %s98
      %p100 = scmp.eq.s32.totalorder %s32, 0
      %p101 = por %p99, %p100
      %s103 = sadd.s32 %s102, 1
      %p106 = scmp.eq.s32.totalorder %s26, 1
      %p107 = scmp.ne.s32.totalorder %s102, %s104
      %p108 = scmp.eq.s32.totalorder %s26, 0
      %p109 = por %p107, %p108
      %p110 = scmp.ne.s32.totalorder %s102, %s104
      %p111 = scmp.eq.s32.totalorder %s31, 1
      %p112 = por %p110, %p111
      %p113 = scmp.ne.s32.totalorder %s104, %s105
      %p114 = scmp.eq.s32.totalorder %s31, 0
      %p115 = por %p113, %p114
      %p116 = scmp.ne.s32.totalorder %s104, %s105
      %p117 = scmp.eq.s32.totalorder %s32, 1
      %p118 = por %p116, %p117
      %p120 = scmp.ne.s32.totalorder %s105, %s119
      %p121 = scmp.eq.s32.totalorder %s32, 0
      %p122 = por %p120, %p121
      %s124 = sadd.s32 %s123, 1
      %p127 = scmp.eq.s32.totalorder %s26, 1
      %p128 = scmp.ne.s32.totalorder %s123, %s125
      %p129 = scmp.eq.s32.totalorder %s26, 0
      %p130 = por %p128, %p129
      %p131 = scmp.ne.s32.totalorder %s123, %s125
      %p132 = scmp.eq.s32.totalorder %s31, 1
      %p133 = por %p131, %p132
      %p134 = scmp.ne.s32.totalorder %s125, %s126
      %p135 = scmp.eq.s32.totalorder %s31, 0
      %p136 = por %p134, %p135
      %p137 = scmp.ne.s32.totalorder %s125, %s126
      %p138 = scmp.eq.s32.totalorder %s32, 1
      %p139 = por %p137, %p138
      %p141 = scmp.ne.s32.totalorder %s126, %s140
      %p142 = scmp.eq.s32.totalorder %s32, 0
      %p143 = por %p141, %p142
      %s145 = sadd.s32 %s144, 1
      %p148 = scmp.eq.s32.totalorder %s26, 1
      %p149 = scmp.ne.s32.totalorder %s144, %s146
      %p150 = scmp.eq.s32.totalorder %s26, 0
      %p151 = por %p149, %p150
      %p152 = scmp.ne.s32.totalorder %s144, %s146
      %p153 = scmp.eq.s32.totalorder %s31, 1
      %p154 = por %p152, %p153
      %p155 = scmp.ne.s32.totalorder %s146, %s147
      %p156 = scmp.eq.s32.totalorder %s31, 0
      %p157 = por %p155, %p156
      %p158 = scmp.ne.s32.totalorder %s146, %s147
      %p159 = scmp.eq.s32.totalorder %s32, 1
      %p160 = por %p158, %p159
      %p162 = scmp.ne.s32.totalorder %s147, %s161
      %p163 = scmp.eq.s32.totalorder %s32, 0
      %p164 = por %p162, %p163
      %s166 = sadd.s32 %s165, 1
      %p169 = scmp.eq.s32.totalorder %s26, 1
      %p170 = scmp.ne.s32.totalorder %s165, %s167
      %p171 = scmp.eq.s32.totalorder %s26, 0
      %p172 = por %p170, %p171
      %p173 = scmp.ne.s32.totalorder %s165, %s167
      %p174 = scmp.eq.s32.totalorder %s31, 1
      %p175 = por %p173, %p174
      %p176 = scmp.ne.s32.totalorder %s167, %s168
      %p177 = scmp.eq.s32.totalorder %s31, 0
      %p178 = por %p176, %p177
      %p179 = scmp.ne.s32.totalorder %s167, %s168
      %p180 = scmp.eq.s32.totalorder %s32, 1
      %p181 = por %p179, %p180
      %p183 = scmp.ne.s32.totalorder %s168, %s182
      %p184 = scmp.eq.s32.totalorder %s32, 0
      %p185 = por %p183, %p184
      %s187 = sadd.s32 %s186, 1
      %p190 = scmp.eq.s32.totalorder %s26, 1
      %p191 = scmp.ne.s32.totalorder %s186, %s188
      %p192 = scmp.eq.s32.totalorder %s26, 0
      %p193 = por %p191, %p192
      %p194 = scmp.ne.s32.totalorder %s186, %s188
      %p195 = scmp.eq.s32.totalorder %s31, 1
      %p196 = por %p194, %p195
      %p197 = scmp.ne.s32.totalorder %s188, %s189
      %p198 = scmp.eq.s32.totalorder %s31, 0
      %p199 = por %p197, %p198
      %p200 = scmp.ne.s32.totalorder %s188, %s189
      %p201 = scmp.eq.s32.totalorder %s32, 1
      %p202 = por %p200, %p201
      %p204 = scmp.ne.s32.totalorder %s189, %s203
      %p205 = scmp.eq.s32.totalorder %s32, 0
      %p206 = por %p204, %p205
      %s208 = sadd.s32 %s207, 1
      %p211 = scmp.eq.s32.totalorder %s26, 1
      %p212 = scmp.ne.s32.totalorder %s207, %s209
      %p213 = scmp.eq.s32.totalorder %s26, 0
      %p214 = por %p212, %p213
      %p215 = scmp.ne.s32.totalorder %s207, %s209
      %p216 = scmp.eq.s32.totalorder %s31, 1
      %p217 = por %p215, %p216
      %p218 = scmp.ne.s32.totalorder %s209, %s210
      %p219 = scmp.eq.s32.totalorder %s31, 0
      %p220 = por %p218, %p219
      %p221 = scmp.ne.s32.totalorder %s209, %s210
      %p222 = scmp.eq.s32.totalorder %s32, 1
      %p223 = por %p221, %p222
      %p225 = scmp.ne.s32.totalorder %s210, %s224
      %p226 = scmp.eq.s32.totalorder %s32, 0
      %p227 = por %p225, %p226
      %s229 = sadd.s32 %s228, 1
      %p232 = scmp.eq.s32.totalorder %s26, 1
      %p233 = scmp.ne.s32.totalorder %s228, %s230
      %p234 = scmp.eq.s32.totalorder %s26, 0
      %p235 = por %p233, %p234
      %p236 = scmp.ne.s32.totalorder %s228, %s230
      %p237 = scmp.eq.s32.totalorder %s31, 1
      %p238 = por %p236, %p237
      %p239 = scmp.ne.s32.totalorder %s230, %s231
      %p240 = scmp.eq.s32.totalorder %s31, 0
      %p241 = por %p239, %p240
      %p242 = scmp.ne.s32.totalorder %s230, %s231
      %p243 = scmp.eq.s32.totalorder %s32, 1
      %p244 = por %p242, %p243
      %p246 = scmp.ne.s32.totalorder %s231, %s245
      %p247 = scmp.eq.s32.totalorder %s32, 0
      %p248 = por %p246, %p247
      %s250 = sadd.s32 %s249, 1
      %p253 = scmp.eq.s32.totalorder %s26, 1
      %p254 = scmp.ne.s32.totalorder %s249, %s251
      %p255 = scmp.eq.s32.totalorder %s26, 0
      %p256 = por %p254, %p255
      %p257 = scmp.ne.s32.totalorder %s249, %s251
      %p258 = scmp.eq.s32.totalorder %s31, 1
      %p259 = por %p257, %p258
      %p260 = scmp.ne.s32.totalorder %s251, %s252
      %p261 = scmp.eq.s32.totalorder %s31, 0
      %p262 = por %p260, %p261
      %p263 = scmp.ne.s32.totalorder %s251, %s252
      %p264 = scmp.eq.s32.totalorder %s32, 1
      %p265 = por %p263, %p264
      %p267 = scmp.ne.s32.totalorder %s252, %s266
      %p268 = scmp.eq.s32.totalorder %s32, 0
      %p269 = por %p267, %p268
      %s270 = ssub.s32 %s26, %s33
      %p271 = scmp.eq.s32.totalorder %s270, 0
      %s273 = sadd.s32 %s272, 1
      %s274 = scalar_select %p271, %s272, %s273
      %p277 = pneg %p271
      %p278 = scmp.eq.s32.totalorder %s26, 1
      %p279 = por %p277, %p278
      %p280 = scmp.ne.s32.totalorder %s272, %s275
      %p281 = scmp.eq.s32.totalorder %s26, 0
      %p282 = por %p280, %p281
      %p283 = scmp.ne.s32.totalorder %s272, %s275
      %p284 = scmp.eq.s32.totalorder %s31, 1
      %p285 = por %p283, %p284
      %p286 = scmp.ne.s32.totalorder %s275, %s276
      %p287 = scmp.eq.s32.totalorder %s31, 0
      %p288 = por %p286, %p287
      %p289 = scmp.ne.s32.totalorder %s275, %s276
      %p290 = scmp.eq.s32.totalorder %s32, 1
      %p291 = por %p289, %p290
      %p293 = scmp.ne.s32.totalorder %s276, %s292
      %p294 = scmp.eq.s32.totalorder %s32, 0
      %p295 = por %p293, %p294
      %p296 = scmp.le.s32.totalorder 1, %s26
      %p297 = scmp.lt.s32.totalorder %s26, 3
      %p298 = pnand %p296, %p297
      %p299 = pneg %p298
      // Predicated region
      $region9: #{tpu_custom_call.1} parent=5 // pred_check
        _
      $region10: #{tpu_custom_call.1} parent=5 // pred_check_branch
        %301 = sbr.rel (%p298) target = $region12
      $region11: #{tpu_custom_call.1} parent=5 // pred_region
        %s302 = ssub.s32 %s26, 1
        // Predicated region
        $region13: #{tpu_custom_call.1} parent=11 // pred_check
          %p303 = pneg %p73
        $region14: #{tpu_custom_call.1} parent=11 // pred_check_branch
          %305 = sbr.rel (%p303) target = $region16
        $region15: #{tpu_custom_call.1} parent=11 // pred_region
          %s307 = ssub.s32 6144, 6144
          %308 = vsyncadd [#allocation6], %s307
          %s309 = sshll.u32 [#allocation5], 4
          %s310 = int_to_ptr.vmem [resolvable:$true] %s309
          %315 = dma.hbm_to_vmem [thread:$0]  %s1, 6144, %s310, [#allocation6], 192, 192, 12
        $region16: #{tpu_custom_call.1} parent=11 // pred_fallthru
          _
        // Predicated region
        $region17: #{tpu_custom_call.1} parent=11 // pred_check
          %p316 = pneg %p94
        $region18: #{tpu_custom_call.1} parent=11 // pred_check_branch
          %318 = sbr.rel (%p316) target = $region20
        $region19: #{tpu_custom_call.1} parent=11 // pred_region
          %s320 = ssub.s32 96, 96
          %321 = vsyncadd [#allocation6], %s320
          %s323 = sshll.u32 [#allocation7], 4
          %s324 = int_to_ptr.vmem [resolvable:$true] %s323
          %326 = dma.hbm_to_vmem [thread:$0]  %s2, 96, %s324, [#allocation6]
        $region20: #{tpu_custom_call.1} parent=11 // pred_fallthru
          _
        // Predicated region
        $region21: #{tpu_custom_call.1} parent=11 // pred_check
          %p327 = pneg %p115
        $region22: #{tpu_custom_call.1} parent=11 // pred_check_branch
          %329 = sbr.rel (%p327) target = $region24
        $region23: #{tpu_custom_call.1} parent=11 // pred_region
          %s331 = ssub.s32 2048, 2048
          %332 = vsyncadd [#allocation9], %s331
          %s333 = sshll.u32 [#allocation8], 4
          %s334 = int_to_ptr.vmem [resolvable:$true] %s333
          %339 = dma.hbm_to_vmem [thread:$0]  %s3, 2048, %s334, [#allocation9], 64, 64, 4
        $region24: #{tpu_custom_call.1} parent=11 // pred_fallthru
          _
        // Predicated region
        $region25: #{tpu_custom_call.1} parent=11 // pred_check
          %p340 = pneg %p136
        $region26: #{tpu_custom_call.1} parent=11 // pred_check_branch
          %342 = sbr.rel (%p340) target = $region28
        $region27: #{tpu_custom_call.1} parent=11 // pred_region
          _
        $region28: #{tpu_custom_call.1} parent=11 // pred_fallthru
          _
        // Predicated region
        $region29: #{tpu_custom_call.1} parent=11 // pred_check
          %p343 = pneg %p157
        $region30: #{tpu_custom_call.1} parent=11 // pred_check_branch
          %345 = sbr.rel (%p343) target = $region32
        $region31: #{tpu_custom_call.1} parent=11 // pred_region
          %s347 = ssub.s32 8192, 8192
          %348 = vsyncadd [#allocation9], %s347
          %s349 = sshll.u32 [#allocation10], 4
          %s350 = int_to_ptr.vmem [resolvable:$true] %s349
          %355 = dma.hbm_to_vmem [thread:$0]  %s5, 8192, %s350, [#allocation9], 256, 256, 16
        $region32: #{tpu_custom_call.1} parent=11 // pred_fallthru
          _
        // Predicated region
        $region33: #{tpu_custom_call.1} parent=11 // pred_check
          %p356 = pneg %p178
        $region34: #{tpu_custom_call.1} parent=11 // pred_check_branch
          %358 = sbr.rel (%p356) target = $region36
        $region35: #{tpu_custom_call.1} parent=11 // pred_region
          _
        $region36: #{tpu_custom_call.1} parent=11 // pred_fallthru
          _
        // Predicated region
        $region37: #{tpu_custom_call.1} parent=11 // pred_check
          %p359 = pneg %p199
        $region38: #{tpu_custom_call.1} parent=11 // pred_check_branch
          %361 = sbr.rel (%p359) target = $region40
        $region39: #{tpu_custom_call.1} parent=11 // pred_region
          %s363 = ssub.s32 8192, 8192
          %364 = vsyncadd [#allocation12], %s363
          %s365 = sshll.u32 [#allocation11], 4
          %s366 = int_to_ptr.vmem [resolvable:$true] %s365
          %371 = dma.hbm_to_vmem [thread:$0]  %s7, 8192, %s366, [#allocation12], 64, 64, 4
        $region40: #{tpu_custom_call.1} parent=11 // pred_fallthru
          _
        // Predicated region
        $region41: #{tpu_custom_call.1} parent=11 // pred_check
          %p372 = pneg %p220
        $region42: #{tpu_custom_call.1} parent=11 // pred_check_branch
          %374 = sbr.rel (%p372) target = $region44
        $region43: #{tpu_custom_call.1} parent=11 // pred_region
          _
        $region44: #{tpu_custom_call.1} parent=11 // pred_fallthru
          _
        // Predicated region
        $region45: #{tpu_custom_call.1} parent=11 // pred_check
          %p375 = pneg %p241
        $region46: #{tpu_custom_call.1} parent=11 // pred_check_branch
          %377 = sbr.rel (%p375) target = $region48
        $region47: #{tpu_custom_call.1} parent=11 // pred_region
          _
        $region48: #{tpu_custom_call.1} parent=11 // pred_fallthru
          _
        // Predicated region
        $region49: #{tpu_custom_call.1} parent=11 // pred_check
          %p378 = pneg %p262
        $region50: #{tpu_custom_call.1} parent=11 // pred_check_branch
          %380 = sbr.rel (%p378) target = $region52
        $region51: #{tpu_custom_call.1} parent=11 // pred_region
          _
        $region52: #{tpu_custom_call.1} parent=11 // pred_fallthru
          _
      $region12: #{tpu_custom_call.1} parent=5 // pred_fallthru
        _
      %p381 = scmp.lt.s32.totalorder %s26, 2
      // Predicated region
      $region53: #{tpu_custom_call.1} parent=5 // pred_check
        %p382 = pneg %p381
      $region54: #{tpu_custom_call.1} parent=5 // pred_check_branch
        %384 = sbr.rel (%p382) target = $region56
      $region55: #{tpu_custom_call.1} parent=5 // pred_region
        // Predicated region
        $region57: #{tpu_custom_call.1} parent=55 // pred_check
          %p385 = pneg %p46
        $region58: #{tpu_custom_call.1} parent=55 // pred_check_branch
          %387 = sbr.rel (%p385) target = $region60
        $region59: #{tpu_custom_call.1} parent=55 // pred_region
          %s388 = sand.u32 %s36, 1
          %s389 = scalar_lea.sflag [#allocation3], %s388
          %s390 = sand.u32 %s36, 1
          %s391 = smul.addr %s390, 8
          %s392 = scalar_lea.vmem [#allocation2], %s391
          %s394 = ssub.s32 128, 128
          %395 = vsyncadd %s389, %s394
          %s396 = smul.addr %s26, 128
          %s397 = scalar_lea.hbm %s0, %s396
          %s399 = sshll.u32 %s392, 4
          %s400 = int_to_ptr.vmem [resolvable:$true] %s399
          %402 = dma.hbm_to_vmem [thread:$0]  %s397, 128, %s400, %s389
        $region60: #{tpu_custom_call.1} parent=55 // pred_fallthru
          _
      $region56: #{tpu_custom_call.1} parent=5 // pred_fallthru
        _
      %p403 = scmp.le.s32.totalorder 1, %s26
      %p404 = scmp.lt.s32.totalorder %s26, 3
      %p405 = pnand %p403, %p404
      %p406 = pneg %p405
      // Predicated region
      $region61: #{tpu_custom_call.1} parent=5 // pred_check
        _
      $region62: #{tpu_custom_call.1} parent=5 // pred_check_branch
        %408 = sbr.rel (%p405) target = $region64
      $region63: #{tpu_custom_call.1} parent=5 // pred_region
        %s409 = ssub.s32 %s26, 1
        %s410 = sand.u32 %s39, 1
        %s411 = scalar_lea.sflag [#allocation3], %s410
        %s412 = sand.u32 %s39, 1
        %s413 = smul.addr %s412, 8
        %s414 = scalar_lea.vmem [#allocation2], %s413
        // Predicated region
        $region65: #{tpu_custom_call.1} parent=63 // pred_check
          %p415 = pneg %p52
        $region66: #{tpu_custom_call.1} parent=63 // pred_check_branch
          %417 = sbr.rel (%p415) target = $region68
        $region67: #{tpu_custom_call.1} parent=63 // pred_region
          %418 = dma.done %s411, 128
        $region68: #{tpu_custom_call.1} parent=63 // pred_fallthru
          _
        // Predicated region
        $region69: #{tpu_custom_call.1} parent=63 // pred_check
          %p419 = pneg %p73
        $region70: #{tpu_custom_call.1} parent=63 // pred_check_branch
          %421 = sbr.rel (%p419) target = $region72
        $region71: #{tpu_custom_call.1} parent=63 // pred_region
          %422 = dma.done [#allocation6], 6144
        $region72: #{tpu_custom_call.1} parent=63 // pred_fallthru
          _
        // Predicated region
        $region73: #{tpu_custom_call.1} parent=63 // pred_check
          %p423 = pneg %p94
        $region74: #{tpu_custom_call.1} parent=63 // pred_check_branch
          %425 = sbr.rel (%p423) target = $region76
        $region75: #{tpu_custom_call.1} parent=63 // pred_region
          %426 = dma.done [#allocation6], 96
        $region76: #{tpu_custom_call.1} parent=63 // pred_fallthru
          _
        // Predicated region
        $region77: #{tpu_custom_call.1} parent=63 // pred_check
          %p427 = pneg %p115
        $region78: #{tpu_custom_call.1} parent=63 // pred_check_branch
          %429 = sbr.rel (%p427) target = $region80
        $region79: #{tpu_custom_call.1} parent=63 // pred_region
          %430 = dma.done [#allocation9], 2048
        $region80: #{tpu_custom_call.1} parent=63 // pred_fallthru
          _
        // Predicated region
        $region81: #{tpu_custom_call.1} parent=63 // pred_check
          %p431 = pneg %p157
        $region82: #{tpu_custom_call.1} parent=63 // pred_check_branch
          %433 = sbr.rel (%p431) target = $region84
        $region83: #{tpu_custom_call.1} parent=63 // pred_region
          %434 = dma.done [#allocation9], 8192
        $region84: #{tpu_custom_call.1} parent=63 // pred_fallthru
          _
        // Predicated region
        $region85: #{tpu_custom_call.1} parent=63 // pred_check
          %p435 = pneg %p199
        $region86: #{tpu_custom_call.1} parent=63 // pred_check_branch
          %437 = sbr.rel (%p435) target = $region88
        $region87: #{tpu_custom_call.1} parent=63 // pred_region
          %438 = dma.done [#allocation12], 8192
        $region88: #{tpu_custom_call.1} parent=63 // pred_fallthru
          _
        %s439 = sand.u32 %s39, 1
        %s440 = scalar_lea.sflag [#allocation3], %s439
        %s441 = sand.u32 %s39, 1
        %s442 = smul.addr %s441, 8
        %s443 = scalar_lea.vmem [#allocation2], %s442
        %p444 = pneg %p52
        %p445 = pneg %p49
        %p446 = pneg %p73
        %p447 = pneg %p70
        %p448 = pneg %p94
        %p449 = pneg %p91
        %p450 = pneg %p115
        %p451 = pneg %p112
        %p452 = pneg %p136
        %p453 = pneg %p133
        %p454 = pneg %p157
        %p455 = pneg %p154
        %p456 = pneg %p178
        %p457 = pneg %p175
        %p458 = pneg %p199
        %p459 = pneg %p196
        %p460 = pneg %p220
        %p461 = pneg %p217
        %p462 = pneg %p241
        %p463 = pneg %p238
        %p464 = pneg %p262
        %p465 = pneg %p259
        %p466 = pneg %p288
        %p467 = pneg %p285
        %s468 = sand.u32 %s275, 1
        %s469 = scalar_lea.sflag [#allocation4], %s468
        %s470 = sand.u32 %s275, 1
        %s471 = smul.addr %s470, 8
        %s472 = scalar_lea.vmem [#allocation13], %s471
        %v474 = vld [vmem:[%s414] sm:$0xff]
        %v475 = vlaneseq
        %v476 = vshrl.u32 %v475, 7
        %v477 = vlaneseq
        %v478 = vand.u32 %v477, 127
        %vm479 = vcmp.le.s32.totalorder %v478, %v476
        %v480 = vsel %vm479, 0.0, -1e+30
        %v481 = vld [vmem:[%s9] sm:$0x1]
        %v482 = vld [vmem:[%s9 + $0x1] sm:$0x1]
        %483 = vadd.xlane.f32.xlu0 %v474
        %v484 = vpop.xlane.xlu0 %483
        %v485 = vrcp.pop 128.0
        %v486 = vmul.f32 %v484, %v485
        %v487 = vsub.f32 %v474, %v486
        %v488 = vmul.f32 %v487, %v487
        %489 = vadd.xlane.f32.xlu0 %v488
        %v490 = vpop.xlane.xlu0 %489
        %v491 = vmul.f32 %v490, %v485
        %v492 = vadd.f32 %v491, 1e-05
        %v493 = vrsqrt.pop %v492
        %v494 = vmul.f32 %v487, %v493
        %v495 = vlaneseq
        %v496 = vshrl.u32 %v495, 7
        %v497 = vsub.s32 0, %v496
        %v498 = vrot.slane %v481, %v497
        %v499 = vmul.f32 %v494, %v498
        %v500 = vlaneseq
        %v501 = vshrl.u32 %v500, 7
        %v502 = vsub.s32 0, %v501
        %v503 = vrot.slane %v482, %v502
        %v504 = vadd.f32 %v499, %v503
        %v505 = vpack.c.bf16 %v504, %v504
        %v506 = vld [vmem:[#allocation5] sm:$0xff]
        %v507 = vld [vmem:[#allocation5 + $0x8] sm:$0xf]
        %v508 = vld [vmem:[#allocation5 + $0xc] sm:$0xff]
        %v509 = vld [vmem:[#allocation5 + $0x14] sm:$0xf]
        %v510 = vld [vmem:[#allocation5 + $0x18] sm:$0xff]
        %v511 = vld [vmem:[#allocation5 + $0x20] sm:$0xf]
        %v512 = vld [vmem:[#allocation5 + $0x24] sm:$0xff]
        %v513 = vld [vmem:[#allocation5 + $0x2c] sm:$0xf]
        %v514 = vld [vmem:[#allocation5 + $0x30] sm:$0xff]
        %v515 = vld [vmem:[#allocation5 + $0x38] sm:$0xf]
        %v516 = vld [vmem:[#allocation5 + $0x3c] sm:$0xff]
        %v517 = vld [vmem:[#allocation5 + $0x44] sm:$0xf]
        %v518 = vld [vmem:[#allocation5 + $0x48] sm:$0xff]
        %v519 = vld [vmem:[#allocation5 + $0x50] sm:$0xf]
        %v520 = vld [vmem:[#allocation5 + $0x54] sm:$0xff]
        %v521 = vld [vmem:[#allocation5 + $0x5c] sm:$0xf]
        %v522 = vld [vmem:[#allocation5 + $0x60] sm:$0xff]
        %v523 = vld [vmem:[#allocation5 + $0x68] sm:$0xf]
        %v524 = vld [vmem:[#allocation5 + $0x6c] sm:$0xff]
        %v525 = vld [vmem:[#allocation5 + $0x74] sm:$0xf]
        %v526 = vld [vmem:[#allocation5 + $0x78] sm:$0xff]
        %v527 = vld [vmem:[#allocation5 + $0x80] sm:$0xf]
        %v528 = vld [vmem:[#allocation5 + $0x84] sm:$0xff]
        %v529 = vld [vmem:[#allocation5 + $0x8c] sm:$0xf]
        %v530 = vld [vmem:[#allocation5 + $0x90] sm:$0xff]
        %v531 = vld [vmem:[#allocation5 + $0x98] sm:$0xf]
        %v532 = vld [vmem:[#allocation5 + $0x9c] sm:$0xff]
        %v533 = vld [vmem:[#allocation5 + $0xa4] sm:$0xf]
        %v534 = vld [vmem:[#allocation5 + $0xa8] sm:$0xff]
        %v535 = vld [vmem:[#allocation5 + $0xb0] sm:$0xf]
        %v536 = vld [vmem:[#allocation5 + $0xb4] sm:$0xff]
        %v537 = vld [vmem:[#allocation5 + $0xbc] sm:$0xf]
        %v538 = vld [vmem:[#allocation7] ss:$2 sm:$0x7]
        %v540 = vlaneseq
        %v541 = vshrl.u32 %v540, 7
        %v542 = vsub.s32 0, %v541
        %v543 = vrot.slane %v538, %v542
        %v544 = vlaneseq
        %v545 = vshrl.u32 %v544, 7
        %v546 = vsub.s32 1, %v545
        %v547 = vrot.slane %v538, %v546
        %v548 = vlaneseq
        %v549 = vshrl.u32 %v548, 7
        %v550 = vsub.s32 2, %v549
        %v551 = vrot.slane %v538, %v550
        %v587 = vunpack.c.l.b16 %v506
        %v588 = vunpack.c.h.b16 %v506
        %v589 = vunpack.c.l.b16 %v507
        %v590 = vunpack.c.l.b16 %v508
        %v591 = vunpack.c.h.b16 %v508
        %v592 = vunpack.c.l.b16 %v509
        %v593 = vunpack.c.l.b16 %v510
        %v594 = vunpack.c.h.b16 %v510
        %v595 = vunpack.c.l.b16 %v511
        %v596 = vunpack.c.l.b16 %v512
        %v597 = vunpack.c.h.b16 %v512
        %v598 = vunpack.c.l.b16 %v513
        %v599 = vunpack.c.l.b16 %v514
        %v600 = vunpack.c.h.b16 %v514
        %v601 = vunpack.c.l.b16 %v515
        %v602 = vunpack.c.l.b16 %v516
        %v603 = vunpack.c.h.b16 %v516
        %v604 = vunpack.c.l.b16 %v517
        %v605 = vunpack.c.l.b16 %v518
        %v606 = vunpack.c.h.b16 %v518
        %v607 = vunpack.c.l.b16 %v519
        %v608 = vunpack.c.l.b16 %v520
        %v609 = vunpack.c.h.b16 %v520
        %v610 = vunpack.c.l.b16 %v521
        %v611 = vunpack.c.l.b16 %v522
        %v612 = vunpack.c.h.b16 %v522
        %v613 = vunpack.c.l.b16 %v523
        %v614 = vunpack.c.l.b16 %v524
        %v615 = vunpack.c.h.b16 %v524
        %v616 = vunpack.c.l.b16 %v525
        %v617 = vunpack.c.l.b16 %v526
        %v618 = vunpack.c.h.b16 %v526
        %v619 = vunpack.c.l.b16 %v527
        %v620 = vunpack.c.l.b16 %v528
        %v621 = vunpack.c.h.b16 %v528
        %v622 = vunpack.c.l.b16 %v529
        %v623 = vunpack.c.l.b16 %v530
        %v624 = vunpack.c.h.b16 %v530
        %v625 = vunpack.c.l.b16 %v531
        %v626 = vunpack.c.l.b16 %v532
        %v627 = vunpack.c.h.b16 %v532
        %v628 = vunpack.c.l.b16 %v533
        %v629 = vunpack.c.l.b16 %v534
        %v630 = vunpack.c.h.b16 %v534
        %v631 = vunpack.c.l.b16 %v535
        %v632 = vunpack.c.l.b16 %v536
        %v633 = vunpack.c.h.b16 %v536
        %v634 = vunpack.c.l.b16 %v537
        %v635 = vpack.c.b16 %v590, %v587
        %v636 = vpack.c.b16 %v591, %v588
        %v637 = vpack.c.b16 %v592, %v589
        %v638 = vpack.c.b16 %v596, %v593
        %v639 = vpack.c.b16 %v597, %v594
        %v640 = vpack.c.b16 %v598, %v595
        %v641 = vpack.c.b16 %v602, %v599
        %v642 = vpack.c.b16 %v603, %v600
        %v643 = vpack.c.b16 %v604, %v601
        %v644 = vpack.c.b16 %v608, %v605
        %v645 = vpack.c.b16 %v609, %v606
        %v646 = vpack.c.b16 %v610, %v607
        %v647 = vpack.c.b16 %v614, %v611
        %v648 = vpack.c.b16 %v615, %v612
        %v649 = vpack.c.b16 %v616, %v613
        %v650 = vpack.c.b16 %v620, %v617
        %v651 = vpack.c.b16 %v621, %v618
        %v652 = vpack.c.b16 %v622, %v619
        %v653 = vpack.c.b16 %v626, %v623
        %v654 = vpack.c.b16 %v627, %v624
        %v655 = vpack.c.b16 %v628, %v625
        %v656 = vpack.c.b16 %v632, %v629
        %v657 = vpack.c.b16 %v633, %v630
        %v658 = vpack.c.b16 %v634, %v631
        %683 = vmatprep.subr.bf16.mxu0 %v636
        %684 = vmatpush1.bf16.msra.mxu0 %v635
        %685 = vmatprep.subr.bf16.mxu0 %v639
        %686 = vmatpush1.bf16.msra.mxu0 %v638
        %687 = vmatprep.subr.bf16.mxu0 %v642
        %688 = vmatpush1.bf16.msra.mxu0 %v641
        %689 = vmatprep.subr.bf16.mxu0 %v645
        %690 = vmatpush1.bf16.msra.mxu0 %v644
        %691 = vmatprep.subr.bf16.mxu0 %v648
        %692 = vmatpush1.bf16.msra.mxu0 %v647
        %693 = vmatprep.subr.bf16.mxu0 %v651
        %694 = vmatpush1.bf16.msra.mxu0 %v650
        %695 = vmatprep.subr.bf16.mxu0 %v654
        %696 = vmatpush1.bf16.msra.mxu0 %v653
        %697 = vmatprep.subr.bf16.mxu0 %v657
        %698 = vmatpush1.bf16.msra.mxu0 %v656
        %699 = vmatprep.subr.bf16.mxu0 0
        %700 = vmatpush1.bf16.msra.mxu0 0
        %701 = vmatprep.subr.bf16.mxu0 0
        %702 = vmatpush1.bf16.msra.mxu0 0
        %703 = vmatprep.subr.bf16.mxu0 0
        %704 = vmatpush1.bf16.msra.mxu0 0
        %705 = vmatprep.subr.bf16.mxu0 0
        %706 = vmatpush1.bf16.msra.mxu0 0
        %707 = vmatprep.subr.bf16.mxu0 0
        %708 = vmatpush1.bf16.msra.mxu0 0
        %709 = vmatprep.subr.bf16.mxu0 0
        %710 = vmatpush1.bf16.msra.mxu0 0
        %711 = vmatprep.subr.bf16.mxu0 0
        %712 = vmatpush1.bf16.msra.mxu0 0
        %713 = vmatprep.subr.bf16.mxu0 0
        %714 = vmatpush1.bf16.msra.mxu0 0
        %715 = vmatprep.mubr.bf16.mxu0 0
        %716 = vmatmul.mubr.bf16.gmra.mrb[0].mxu0 %v505
        %v717 = vpop.f32.mrb[0].mxu0
        %v718 = vadd.f32 %v543, %v717
        %v719 = vpop.f32.mrb[0].mxu0
        %v720 = vadd.f32 %v547, %v719
        %v721 = vpop.f32.mrb[0].mxu0
        %v722 = vpop.f32.mrb[0].mxu0
        %723 = vdwg.mxu0
        %724 = vmatprep.subr.bf16.mxu0 0
        %725 = vmatpush1.bf16.msra.mxu0 %v637
        %726 = vmatprep.subr.bf16.mxu0 0
        %727 = vmatpush1.bf16.msra.mxu0 %v640
        %728 = vmatprep.subr.bf16.mxu0 0
        %729 = vmatpush1.bf16.msra.mxu0 %v643
        %730 = vmatprep.subr.bf16.mxu0 0
        %731 = vmatpush1.bf16.msra.mxu0 %v646
        %732 = vmatprep.subr.bf16.mxu0 0
        %733 = vmatpush1.bf16.msra.mxu0 %v649
        %734 = vmatprep.subr.bf16.mxu0 0
        %735 = vmatpush1.bf16.msra.mxu0 %v652
        %736 = vmatprep.subr.bf16.mxu0 0
        %737 = vmatpush1.bf16.msra.mxu0 %v655
        %738 = vmatprep.subr.bf16.mxu0 0
        %739 = vmatpush1.bf16.msra.mxu0 %v658
        %740 = vmatprep.subr.bf16.mxu0 0
        %741 = vmatpush1.bf16.msra.mxu0 0
        %742 = vmatprep.subr.bf16.mxu0 0
        %743 = vmatpush1.bf16.msra.mxu0 0
        %744 = vmatprep.subr.bf16.mxu0 0
        %745 = vmatpush1.bf16.msra.mxu0 0
        %746 = vmatprep.subr.bf16.mxu0 0
        %747 = vmatpush1.bf16.msra.mxu0 0
        %748 = vmatprep.subr.bf16.mxu0 0
        %749 = vmatpush1.bf16.msra.mxu0 0
        %750 = vmatprep.subr.bf16.mxu0 0
        %751 = vmatpush1.bf16.msra.mxu0 0
        %752 = vmatprep.subr.bf16.mxu0 0
        %753 = vmatpush1.bf16.msra.mxu0 0
        %754 = vmatprep.subr.bf16.mxu0 0
        %755 = vmatpush1.bf16.msra.mxu0 0
        %756 = vmatprep.mubr.bf16.mxu0 0
        %757 = vmatmul.mubr.bf16.gmra.mrb[0].mxu0 %v505
        %v758 = vpop.f32.mrb[0].mxu0
        %v759 = vadd.f32 %v551, %v758
        %v760 = vpop.f32.mrb[0].mxu0
        %v761 = vpop.f32.mrb[0].mxu0
        %v762 = vpop.f32.mrb[0].mxu0
        %763 = vdwg.mxu0
        %vm764 = vcmask 261120
        %v766 = vsel %vm764, %v718, 0
        %v769 = vsel %vm764, %v720, 0
        %771 = vmatprep.subr.mxu0 0.0
        %772 = vmatpush1.xpose.msra.mxu0 %v769
        %773 = vmatprep.subr.mxu0 0.0
        %774 = vmatpush1.xpose.msra.mxu0 0.0
        %775 = vmatprep.subr.mxu0 0.0
        %776 = vmatpush1.xpose.msra.mxu0 0.0
        %777 = vmatprep.subr.mxu0 0.0
        %778 = vmatpush1.xpose.msra.mxu0 0.0
        %779 = vmatprep.subr.mxu0 0.0
        %780 = vmatpush1.xpose.msra.mxu0 0.0
        %781 = vmatprep.subr.mxu0 0.0
        %782 = vmatpush1.xpose.msra.mxu0 0.0
        %783 = vmatprep.subr.mxu0 0.0
        %784 = vmatpush1.xpose.msra.mxu0 0.0
        %785 = vmatprep.subr.mxu0 0.0
        %786 = vmatpush1.xpose.msra.mxu0 0.0
        %787 = vmatprep.subr.mxu0 0.0
        %788 = vmatpush1.xpose.msra.mxu0 0.0
        %789 = vmatprep.subr.mxu0 0.0
        %790 = vmatpush1.xpose.msra.mxu0 0.0
        %791 = vmatprep.subr.mxu0 0.0
        %792 = vmatpush1.xpose.msra.mxu0 0.0
        %793 = vmatprep.subr.mxu0 0.0
        %794 = vmatpush1.xpose.msra.mxu0 0.0
        %795 = vmatprep.subr.mxu0 0.0
        %796 = vmatpush1.xpose.msra.mxu0 0.0
        %797 = vmatprep.subr.mxu0 0.0
        %798 = vmatpush1.xpose.msra.mxu0 0.0
        %799 = vmatprep.subr.mxu0 0.0
        %800 = vmatpush1.xpose.msra.mxu0 0.0
        %801 = vmatprep.subr.mxu0 0.0
        %802 = vmatpush1.xpose.msra.mxu0 0.0
        %803 = vmatprep.subr.mxu0 0.0
        %804 = vmatpush1.xpose.msra.mxu0 0.0
        %805 = vmatprep.subr.mxu0 0.0
        %806 = vmatpush1.xpose.msra.mxu0 0.0
        %807 = vmatprep.subr.mxu0 0.0
        %808 = vmatpush1.xpose.msra.mxu0 0.0
        %809 = vmatprep.subr.mxu0 0.0
        %810 = vmatpush1.xpose.msra.mxu0 0.0
        %811 = vmatprep.subr.mxu0 0.0
        %812 = vmatpush1.xpose.msra.mxu0 0.0
        %813 = vmatprep.subr.mxu0 0.0
        %814 = vmatpush1.xpose.msra.mxu0 0.0
        %815 = vmatprep.subr.mxu0 0.0
        %816 = vmatpush1.xpose.msra.mxu0 0.0
        %817 = vmatprep.subr.mxu0 0.0
        %818 = vmatpush1.xpose.msra.mxu0 0.0
        %819 = vmatprep.subr.mxu0 0.0
        %820 = vmatpush1.xpose.msra.mxu0 0.0
        %821 = vmatprep.subr.mxu0 0.0
        %822 = vmatpush1.xpose.msra.mxu0 0.0
        %823 = vmatprep.subr.mxu0 0.0
        %824 = vmatpush1.xpose.msra.mxu0 0.0
        %825 = vmatprep.subr.mxu0 0.0
        %826 = vmatpush1.xpose.msra.mxu0 0.0
        %827 = vmatprep.subr.mxu0 0.0
        %828 = vmatpush1.xpose.msra.mxu0 0.0
        %829 = vmatprep.subr.mxu0 0.0
        %830 = vmatpush1.xpose.msra.mxu0 0.0
        %831 = vmatprep.subr.mxu0 0.0
        %832 = vmatpush1.xpose.msra.mxu0 0.0
        %833 = vmatprep.subr.mxu0 0.0
        %834 = vmatpush1.xpose.msra.mxu0 0.0
        %835 = vmatprep.mubr.f32.mxu0 0.0
        %836 = vmatmul.mubr.f32.gmra.mrb[0].mxu0 %v766
        %v837 = vpop.f32.mrb[0].mxu0
        %v838 = vadd.f32 0.0, %v837
        %v839 = vpop.f32.mrb[0].mxu0
        %840 = vdwg.mxu0
        %v841 = vmul.f32 %v838, 0.17677669
        %v842 = vadd.f32 %v841, %v480
        %vm843 = vcmask 64512
        %v844 = vsel %vm843, %v842, -inf
        %845 = vmax.xlane.f32.xlu0 %v844
        %v846 = vpop.xlane.xlu0 %845
        %v847 = vsub.f32 %v842, %v846
        %v848 = vmul.f32 %v847, 1.442695
        %v849 = vpow.pop %v848
        %v850 = vsel %vm843, %v849, 0.0
        %851 = vadd.xlane.f32.xlu0 %v850
        %v852 = vpop.xlane.xlu0 %851
        %v853 = vrcp.pop %v852
        %v854 = vmul.f32 %v849, %v853
        %v856 = vsel %vm843, %v854, 0
        %858 = vmatprep.subr.mxu0 0.0
        %859 = vmatpush1.msra.mxu0 %v759
        %860 = vmatprep.subr.mxu0 0.0
        %861 = vmatpush1.msra.mxu0 0.0
        %862 = vmatprep.subr.mxu0 0.0
        %863 = vmatpush1.msra.mxu0 0.0
        %864 = vmatprep.subr.mxu0 0.0
        %865 = vmatpush1.msra.mxu0 0.0
        %866 = vmatprep.subr.mxu0 0.0
        %867 = vmatpush1.msra.mxu0 0.0
        %868 = vmatprep.subr.mxu0 0.0
        %869 = vmatpush1.msra.mxu0 0.0
        %870 = vmatprep.subr.mxu0 0.0
        %871 = vmatpush1.msra.mxu0 0.0
        %872 = vmatprep.subr.mxu0 0.0
        %873 = vmatpush1.msra.mxu0 0.0
        %874 = vmatprep.subr.mxu0 0.0
        %875 = vmatpush1.msra.mxu0 0.0
        %876 = vmatprep.subr.mxu0 0.0
        %877 = vmatpush1.msra.mxu0 0.0
        %878 = vmatprep.subr.mxu0 0.0
        %879 = vmatpush1.msra.mxu0 0.0
        %880 = vmatprep.subr.mxu0 0.0
        %881 = vmatpush1.msra.mxu0 0.0
        %882 = vmatprep.subr.mxu0 0.0
        %883 = vmatpush1.msra.mxu0 0.0
        %884 = vmatprep.subr.mxu0 0.0
        %885 = vmatpush1.msra.mxu0 0.0
        %886 = vmatprep.subr.mxu0 0.0
        %887 = vmatpush1.msra.mxu0 0.0
        %888 = vmatprep.subr.mxu0 0.0
        %889 = vmatpush1.msra.mxu0 0.0
        %890 = vmatprep.subr.mxu0 0.0
        %891 = vmatpush1.msra.mxu0 0.0
        %892 = vmatprep.subr.mxu0 0.0
        %893 = vmatpush1.msra.mxu0 0.0
        %894 = vmatprep.subr.mxu0 0.0
        %895 = vmatpush1.msra.mxu0 0.0
        %896 = vmatprep.subr.mxu0 0.0
        %897 = vmatpush1.msra.mxu0 0.0
        %898 = vmatprep.subr.mxu0 0.0
        %899 = vmatpush1.msra.mxu0 0.0
        %900 = vmatprep.subr.mxu0 0.0
        %901 = vmatpush1.msra.mxu0 0.0
        %902 = vmatprep.subr.mxu0 0.0
        %903 = vmatpush1.msra.mxu0 0.0
        %904 = vmatprep.subr.mxu0 0.0
        %905 = vmatpush1.msra.mxu0 0.0
        %906 = vmatprep.subr.mxu0 0.0
        %907 = vmatpush1.msra.mxu0 0.0
        %908 = vmatprep.subr.mxu0 0.0
        %909 = vmatpush1.msra.mxu0 0.0
        %910 = vmatprep.subr.mxu0 0.0
        %911 = vmatpush1.msra.mxu0 0.0
        %912 = vmatprep.subr.mxu0 0.0
        %913 = vmatpush1.msra.mxu0 0.0
        %914 = vmatprep.subr.mxu0 0.0
        %915 = vmatpush1.msra.mxu0 0.0
        %916 = vmatprep.subr.mxu0 0.0
        %917 = vmatpush1.msra.mxu0 0.0
        %918 = vmatprep.subr.mxu0 0.0
        %919 = vmatpush1.msra.mxu0 0.0
        %920 = vmatprep.subr.mxu0 0.0
        %921 = vmatpush1.msra.mxu0 0.0
        %922 = vmatprep.mubr.f32.mxu0 0.0
        %923 = vmatmul.mubr.f32.gmra.mrb[0].mxu0 %v856
        %v924 = vpop.f32.mrb[0].mxu0
        %v925 = vadd.f32 0.0, %v924
        %v926 = vpop.f32.mrb[0].mxu0
        %927 = vdwg.mxu0
        %928 = vrot.lane.b32.xlu0 %v718, 96
        %v929 = vpop.permute.xlu0 %928
        %930 = vrot.lane.b32.xlu0 %v720, 96
        %v931 = vpop.permute.xlu0 %930
        %v932 = vsel %vm764, %v929, 0
        %v934 = vsel %vm764, %v931, 0
        %936 = vmatprep.subr.mxu0 0.0
        %937 = vmatpush1.xpose.msra.mxu0 %v934
        %938 = vmatprep.subr.mxu0 0.0
        %939 = vmatpush1.xpose.msra.mxu0 0.0
        %940 = vmatprep.subr.mxu0 0.0
        %941 = vmatpush1.xpose.msra.mxu0 0.0
        %942 = vmatprep.subr.mxu0 0.0
        %943 = vmatpush1.xpose.msra.mxu0 0.0
        %944 = vmatprep.subr.mxu0 0.0
        %945 = vmatpush1.xpose.msra.mxu0 0.0
        %946 = vmatprep.subr.mxu0 0.0
        %947 = vmatpush1.xpose.msra.mxu0 0.0
        %948 = vmatprep.subr.mxu0 0.0
        %949 = vmatpush1.xpose.msra.mxu0 0.0
        %950 = vmatprep.subr.mxu0 0.0
        %951 = vmatpush1.xpose.msra.mxu0 0.0
        %952 = vmatprep.subr.mxu0 0.0
        %953 = vmatpush1.xpose.msra.mxu0 0.0
        %954 = vmatprep.subr.mxu0 0.0
        %955 = vmatpush1.xpose.msra.mxu0 0.0
        %956 = vmatprep.subr.mxu0 0.0
        %957 = vmatpush1.xpose.msra.mxu0 0.0
        %958 = vmatprep.subr.mxu0 0.0
        %959 = vmatpush1.xpose.msra.mxu0 0.0
        %960 = vmatprep.subr.mxu0 0.0
        %961 = vmatpush1.xpose.msra.mxu0 0.0
        %962 = vmatprep.subr.mxu0 0.0
        %963 = vmatpush1.xpose.msra.mxu0 0.0
        %964 = vmatprep.subr.mxu0 0.0
        %965 = vmatpush1.xpose.msra.mxu0 0.0
        %966 = vmatprep.subr.mxu0 0.0
        %967 = vmatpush1.xpose.msra.mxu0 0.0
        %968 = vmatprep.subr.mxu0 0.0
        %969 = vmatpush1.xpose.msra.mxu0 0.0
        %970 = vmatprep.subr.mxu0 0.0
        %971 = vmatpush1.xpose.msra.mxu0 0.0
        %972 = vmatprep.subr.mxu0 0.0
        %973 = vmatpush1.xpose.msra.mxu0 0.0
        %974 = vmatprep.subr.mxu0 0.0
        %975 = vmatpush1.xpose.msra.mxu0 0.0
        %976 = vmatprep.subr.mxu0 0.0
        %977 = vmatpush1.xpose.msra.mxu0 0.0
        %978 = vmatprep.subr.mxu0 0.0
        %979 = vmatpush1.xpose.msra.mxu0 0.0
        %980 = vmatprep.subr.mxu0 0.0
        %981 = vmatpush1.xpose.msra.mxu0 0.0
        %982 = vmatprep.subr.mxu0 0.0
        %983 = vmatpush1.xpose.msra.mxu0 0.0
        %984 = vmatprep.subr.mxu0 0.0
        %985 = vmatpush1.xpose.msra.mxu0 0.0
        %986 = vmatprep.subr.mxu0 0.0
        %987 = vmatpush1.xpose.msra.mxu0 0.0
        %988 = vmatprep.subr.mxu0 0.0
        %989 = vmatpush1.xpose.msra.mxu0 0.0
        %990 = vmatprep.subr.mxu0 0.0
        %991 = vmatpush1.xpose.msra.mxu0 0.0
        %992 = vmatprep.subr.mxu0 0.0
        %993 = vmatpush1.xpose.msra.mxu0 0.0
        %994 = vmatprep.subr.mxu0 0.0
        %995 = vmatpush1.xpose.msra.mxu0 0.0
        %996 = vmatprep.subr.mxu0 0.0
        %997 = vmatpush1.xpose.msra.mxu0 0.0
        %998 = vmatprep.subr.mxu0 0.0
        %999 = vmatpush1.xpose.msra.mxu0 0.0
        %1000 = vmatprep.mubr.f32.mxu0 0.0
        %1001 = vmatmul.mubr.f32.gmra.mrb[0].mxu0 %v932
        %v1002 = vpop.f32.mrb[0].mxu0
        %v1003 = vadd.f32 0.0, %v1002
        %v1004 = vpop.f32.mrb[0].mxu0
        %1005 = vdwg.mxu0
        %v1006 = vmul.f32 %v1003, 0.17677669
        %v1007 = vadd.f32 %v1006, %v480
        %v1008 = vsel %vm843, %v1007, -inf
        %1009 = vmax.xlane.f32.xlu0 %v1008
        %v1010 = vpop.xlane.xlu0 %1009
        %v1011 = vsub.f32 %v1007, %v1010
        %v1012 = vmul.f32 %v1011, 1.442695
        %v1013 = vpow.pop %v1012
        %v1014 = vsel %vm843, %v1013, 0.0
        %1015 = vadd.xlane.f32.xlu0 %v1014
        %v1016 = vpop.xlane.xlu0 %1015
        %v1017 = vrcp.pop %v1016
        %v1018 = vmul.f32 %v1013, %v1017
        %1020 = vrot.lane.b32.xlu0 %v759, 96
        %v1021 = vpop.permute.xlu0 %1020
        %v1024 = vsel %vm843, %v1018, 0
        %1026 = vmatprep.subr.mxu0 0.0
        %1027 = vmatpush1.msra.mxu0 %v1021
        %1028 = vmatprep.subr.mxu0 0.0
        %1029 = vmatpush1.msra.mxu0 0.0
        %1030 = vmatprep.subr.mxu0 0.0
        %1031 = vmatpush1.msra.mxu0 0.0
        %1032 = vmatprep.subr.mxu0 0.0
        %1033 = vmatpush1.msra.mxu0 0.0
        %1034 = vmatprep.subr.mxu0 0.0
        %1035 = vmatpush1.msra.mxu0 0.0
        %1036 = vmatprep.subr.mxu0 0.0
        %1037 = vmatpush1.msra.mxu0 0.0
        %1038 = vmatprep.subr.mxu0 0.0
        %1039 = vmatpush1.msra.mxu0 0.0
        %1040 = vmatprep.subr.mxu0 0.0
        %1041 = vmatpush1.msra.mxu0 0.0
        %1042 = vmatprep.subr.mxu0 0.0
        %1043 = vmatpush1.msra.mxu0 0.0
        %1044 = vmatprep.subr.mxu0 0.0
        %1045 = vmatpush1.msra.mxu0 0.0
        %1046 = vmatprep.subr.mxu0 0.0
        %1047 = vmatpush1.msra.mxu0 0.0
        %1048 = vmatprep.subr.mxu0 0.0
        %1049 = vmatpush1.msra.mxu0 0.0
        %1050 = vmatprep.subr.mxu0 0.0
        %1051 = vmatpush1.msra.mxu0 0.0
        %1052 = vmatprep.subr.mxu0 0.0
        %1053 = vmatpush1.msra.mxu0 0.0
        %1054 = vmatprep.subr.mxu0 0.0
        %1055 = vmatpush1.msra.mxu0 0.0
        %1056 = vmatprep.subr.mxu0 0.0
        %1057 = vmatpush1.msra.mxu0 0.0
        %1058 = vmatprep.subr.mxu0 0.0
        %1059 = vmatpush1.msra.mxu0 0.0
        %1060 = vmatprep.subr.mxu0 0.0
        %1061 = vmatpush1.msra.mxu0 0.0
        %1062 = vmatprep.subr.mxu0 0.0
        %1063 = vmatpush1.msra.mxu0 0.0
        %1064 = vmatprep.subr.mxu0 0.0
        %1065 = vmatpush1.msra.mxu0 0.0
        %1066 = vmatprep.subr.mxu0 0.0
        %1067 = vmatpush1.msra.mxu0 0.0
        %1068 = vmatprep.subr.mxu0 0.0
        %1069 = vmatpush1.msra.mxu0 0.0
        %1070 = vmatprep.subr.mxu0 0.0
        %1071 = vmatpush1.msra.mxu0 0.0
        %1072 = vmatprep.subr.mxu0 0.0
        %1073 = vmatpush1.msra.mxu0 0.0
        %1074 = vmatprep.subr.mxu0 0.0
        %1075 = vmatpush1.msra.mxu0 0.0
        %1076 = vmatprep.subr.mxu0 0.0
        %1077 = vmatpush1.msra.mxu0 0.0
        %1078 = vmatprep.subr.mxu0 0.0
        %1079 = vmatpush1.msra.mxu0 0.0
        %1080 = vmatprep.subr.mxu0 0.0
        %1081 = vmatpush1.msra.mxu0 0.0
        %1082 = vmatprep.subr.mxu0 0.0
        %1083 = vmatpush1.msra.mxu0 0.0
        %1084 = vmatprep.subr.mxu0 0.0
        %1085 = vmatpush1.msra.mxu0 0.0
        %1086 = vmatprep.subr.mxu0 0.0
        %1087 = vmatpush1.msra.mxu0 0.0
        %1088 = vmatprep.subr.mxu0 0.0
        %1089 = vmatpush1.msra.mxu0 0.0
        %1090 = vmatprep.mubr.f32.mxu0 0.0
        %1091 = vmatmul.mubr.f32.gmra.mrb[0].mxu0 %v1024
        %v1092 = vpop.f32.mrb[0].mxu0
        %v1093 = vadd.f32 0.0, %v1092
        %v1094 = vpop.f32.mrb[0].mxu0
        %1095 = vdwg.mxu0
        %1096 = vrot.lane.b32.xlu0 %v718, 64
        %v1097 = vpop.permute.xlu0 %1096
        %1098 = vrot.lane.b32.xlu0 %v720, 64
        %v1099 = vpop.permute.xlu0 %1098
        %v1100 = vsel %vm764, %v1097, 0
        %v1102 = vsel %vm764, %v1099, 0
        %1104 = vmatprep.subr.mxu0 0.0
        %1105 = vmatpush1.xpose.msra.mxu0 %v1102
        %1106 = vmatprep.subr.mxu0 0.0
        %1107 = vmatpush1.xpose.msra.mxu0 0.0
        %1108 = vmatprep.subr.mxu0 0.0
        %1109 = vmatpush1.xpose.msra.mxu0 0.0
        %1110 = vmatprep.subr.mxu0 0.0
        %1111 = vmatpush1.xpose.msra.mxu0 0.0
        %1112 = vmatprep.subr.mxu0 0.0
        %1113 = vmatpush1.xpose.msra.mxu0 0.0
        %1114 = vmatprep.subr.mxu0 0.0
        %1115 = vmatpush1.xpose.msra.mxu0 0.0
        %1116 = vmatprep.subr.mxu0 0.0
        %1117 = vmatpush1.xpose.msra.mxu0 0.0
        %1118 = vmatprep.subr.mxu0 0.0
        %1119 = vmatpush1.xpose.msra.mxu0 0.0
        %1120 = vmatprep.subr.mxu0 0.0
        %1121 = vmatpush1.xpose.msra.mxu0 0.0
        %1122 = vmatprep.subr.mxu0 0.0
        %1123 = vmatpush1.xpose.msra.mxu0 0.0
        %1124 = vmatprep.subr.mxu0 0.0
        %1125 = vmatpush1.xpose.msra.mxu0 0.0
        %1126 = vmatprep.subr.mxu0 0.0
        %1127 = vmatpush1.xpose.msra.mxu0 0.0
        %1128 = vmatprep.subr.mxu0 0.0
        %1129 = vmatpush1.xpose.msra.mxu0 0.0
        %1130 = vmatprep.subr.mxu0 0.0
        %1131 = vmatpush1.xpose.msra.mxu0 0.0
        %1132 = vmatprep.subr.mxu0 0.0
        %1133 = vmatpush1.xpose.msra.mxu0 0.0
        %1134 = vmatprep.subr.mxu0 0.0
        %1135 = vmatpush1.xpose.msra.mxu0 0.0
        %1136 = vmatprep.subr.mxu0 0.0
        %1137 = vmatpush1.xpose.msra.mxu0 0.0
        %1138 = vmatprep.subr.mxu0 0.0
        %1139 = vmatpush1.xpose.msra.mxu0 0.0
        %1140 = vmatprep.subr.mxu0 0.0
        %1141 = vmatpush1.xpose.msra.mxu0 0.0
        %1142 = vmatprep.subr.mxu0 0.0
        %1143 = vmatpush1.xpose.msra.mxu0 0.0
        %1144 = vmatprep.subr.mxu0 0.0
        %1145 = vmatpush1.xpose.msra.mxu0 0.0
        %1146 = vmatprep.subr.mxu0 0.0
        %1147 = vmatpush1.xpose.msra.mxu0 0.0
        %1148 = vmatprep.subr.mxu0 0.0
        %1149 = vmatpush1.xpose.msra.mxu0 0.0
        %1150 = vmatprep.subr.mxu0 0.0
        %1151 = vmatpush1.xpose.msra.mxu0 0.0
        %1152 = vmatprep.subr.mxu0 0.0
        %1153 = vmatpush1.xpose.msra.mxu0 0.0
        %1154 = vmatprep.subr.mxu0 0.0
        %1155 = vmatpush1.xpose.msra.mxu0 0.0
        %1156 = vmatprep.subr.mxu0 0.0
        %1157 = vmatpush1.xpose.msra.mxu0 0.0
        %1158 = vmatprep.subr.mxu0 0.0
        %1159 = vmatpush1.xpose.msra.mxu0 0.0
        %1160 = vmatprep.subr.mxu0 0.0
        %1161 = vmatpush1.xpose.msra.mxu0 0.0
        %1162 = vmatprep.subr.mxu0 0.0
        %1163 = vmatpush1.xpose.msra.mxu0 0.0
        %1164 = vmatprep.subr.mxu0 0.0
        %1165 = vmatpush1.xpose.msra.mxu0 0.0
        %1166 = vmatprep.subr.mxu0 0.0
        %1167 = vmatpush1.xpose.msra.mxu0 0.0
        %1168 = vmatprep.mubr.f32.mxu0 0.0
        %1169 = vmatmul.mubr.f32.gmra.mrb[0].mxu0 %v1100
        %v1170 = vpop.f32.mrb[0].mxu0
        %v1171 = vadd.f32 0.0, %v1170
        %v1172 = vpop.f32.mrb[0].mxu0
        %1173 = vdwg.mxu0
        %v1174 = vmul.f32 %v1171, 0.17677669
        %v1175 = vadd.f32 %v1174, %v480
        %v1176 = vsel %vm843, %v1175, -inf
        %1177 = vmax.xlane.f32.xlu0 %v1176
        %v1178 = vpop.xlane.xlu0 %1177
        %v1179 = vsub.f32 %v1175, %v1178
        %v1180 = vmul.f32 %v1179, 1.442695
        %v1181 = vpow.pop %v1180
        %v1182 = vsel %vm843, %v1181, 0.0
        %1183 = vadd.xlane.f32.xlu0 %v1182
        %v1184 = vpop.xlane.xlu0 %1183
        %v1185 = vrcp.pop %v1184
        %v1186 = vmul.f32 %v1181, %v1185
        %1187 = vrot.lane.b32.xlu0 %v759, 64
        %v1188 = vpop.permute.xlu0 %1187
        %v1191 = vsel %vm843, %v1186, 0
        %1193 = vmatprep.subr.mxu0 0.0
        %1194 = vmatpush1.msra.mxu0 %v1188
        %1195 = vmatprep.subr.mxu0 0.0
        %1196 = vmatpush1.msra.mxu0 0.0
        %1197 = vmatprep.subr.mxu0 0.0
        %1198 = vmatpush1.msra.mxu0 0.0
        %1199 = vmatprep.subr.mxu0 0.0
        %1200 = vmatpush1.msra.mxu0 0.0
        %1201 = vmatprep.subr.mxu0 0.0
        %1202 = vmatpush1.msra.mxu0 0.0
        %1203 = vmatprep.subr.mxu0 0.0
        %1204 = vmatpush1.msra.mxu0 0.0
        %1205 = vmatprep.subr.mxu0 0.0
        %1206 = vmatpush1.msra.mxu0 0.0
        %1207 = vmatprep.subr.mxu0 0.0
        %1208 = vmatpush1.msra.mxu0 0.0
        %1209 = vmatprep.subr.mxu0 0.0
        %1210 = vmatpush1.msra.mxu0 0.0
        %1211 = vmatprep.subr.mxu0 0.0
        %1212 = vmatpush1.msra.mxu0 0.0
        %1213 = vmatprep.subr.mxu0 0.0
        %1214 = vmatpush1.msra.mxu0 0.0
        %1215 = vmatprep.subr.mxu0 0.0
        %1216 = vmatpush1.msra.mxu0 0.0
        %1217 = vmatprep.subr.mxu0 0.0
        %1218 = vmatpush1.msra.mxu0 0.0
        %1219 = vmatprep.subr.mxu0 0.0
        %1220 = vmatpush1.msra.mxu0 0.0
        %1221 = vmatprep.subr.mxu0 0.0
        %1222 = vmatpush1.msra.mxu0 0.0
        %1223 = vmatprep.subr.mxu0 0.0
        %1224 = vmatpush1.msra.mxu0 0.0
        %1225 = vmatprep.subr.mxu0 0.0
        %1226 = vmatpush1.msra.mxu0 0.0
        %1227 = vmatprep.subr.mxu0 0.0
        %1228 = vmatpush1.msra.mxu0 0.0
        %1229 = vmatprep.subr.mxu0 0.0
        %1230 = vmatpush1.msra.mxu0 0.0
        %1231 = vmatprep.subr.mxu0 0.0
        %1232 = vmatpush1.msra.mxu0 0.0
        %1233 = vmatprep.subr.mxu0 0.0
        %1234 = vmatpush1.msra.mxu0 0.0
        %1235 = vmatprep.subr.mxu0 0.0
        %1236 = vmatpush1.msra.mxu0 0.0
        %1237 = vmatprep.subr.mxu0 0.0
        %1238 = vmatpush1.msra.mxu0 0.0
        %1239 = vmatprep.subr.mxu0 0.0
        %1240 = vmatpush1.msra.mxu0 0.0
        %1241 = vmatprep.subr.mxu0 0.0
        %1242 = vmatpush1.msra.mxu0 0.0
        %1243 = vmatprep.subr.mxu0 0.0
        %1244 = vmatpush1.msra.mxu0 0.0
        %1245 = vmatprep.subr.mxu0 0.0
        %1246 = vmatpush1.msra.mxu0 0.0
        %1247 = vmatprep.subr.mxu0 0.0
        %1248 = vmatpush1.msra.mxu0 0.0
        %1249 = vmatprep.subr.mxu0 0.0
        %1250 = vmatpush1.msra.mxu0 0.0
        %1251 = vmatprep.subr.mxu0 0.0
        %1252 = vmatpush1.msra.mxu0 0.0
        %1253 = vmatprep.subr.mxu0 0.0
        %1254 = vmatpush1.msra.mxu0 0.0
        %1255 = vmatprep.subr.mxu0 0.0
        %1256 = vmatpush1.msra.mxu0 0.0
        %1257 = vmatprep.mubr.f32.mxu0 0.0
        %1258 = vmatmul.mubr.f32.gmra.mrb[0].mxu0 %v1191
        %v1259 = vpop.f32.mrb[0].mxu0
        %v1260 = vadd.f32 0.0, %v1259
        %v1261 = vpop.f32.mrb[0].mxu0
        %1262 = vdwg.mxu0
        %1263 = vrot.lane.b32.xlu0 %v718, 32
        %v1264 = vpop.permute.xlu0 %1263
        %1265 = vrot.lane.b32.xlu0 %v720, 32
        %v1266 = vpop.permute.xlu0 %1265
        %v1267 = vsel %vm764, %v1264, 0
        %v1269 = vsel %vm764, %v1266, 0
        %1271 = vmatprep.subr.mxu0 0.0
        %1272 = vmatpush1.xpose.msra.mxu0 %v1269
        %1273 = vmatprep.subr.mxu0 0.0
        %1274 = vmatpush1.xpose.msra.mxu0 0.0
        %1275 = vmatprep.subr.mxu0 0.0
        %1276 = vmatpush1.xpose.msra.mxu0 0.0
        %1277 = vmatprep.subr.mxu0 0.0
        %1278 = vmatpush1.xpose.msra.mxu0 0.0
        %1279 = vmatprep.subr.mxu0 0.0
        %1280 = vmatpush1.xpose.msra.mxu0 0.0
        %1281 = vmatprep.subr.mxu0 0.0
        %1282 = vmatpush1.xpose.msra.mxu0 0.0
        %1283 = vmatprep.subr.mxu0 0.0
        %1284 = vmatpush1.xpose.msra.mxu0 0.0
        %1285 = vmatprep.subr.mxu0 0.0
        %1286 = vmatpush1.xpose.msra.mxu0 0.0
        %1287 = vmatprep.subr.mxu0 0.0
        %1288 = vmatpush1.xpose.msra.mxu0 0.0
        %1289 = vmatprep.subr.mxu0 0.0
        %1290 = vmatpush1.xpose.msra.mxu0 0.0
        %1291 = vmatprep.subr.mxu0 0.0
        %1292 = vmatpush1.xpose.msra.mxu0 0.0
        %1293 = vmatprep.subr.mxu0 0.0
        %1294 = vmatpush1.xpose.msra.mxu0 0.0
        %1295 = vmatprep.subr.mxu0 0.0
        %1296 = vmatpush1.xpose.msra.mxu0 0.0
        %1297 = vmatprep.subr.mxu0 0.0
        %1298 = vmatpush1.xpose.msra.mxu0 0.0
        %1299 = vmatprep.subr.mxu0 0.0
        %1300 = vmatpush1.xpose.msra.mxu0 0.0
        %1301 = vmatprep.subr.mxu0 0.0
        %1302 = vmatpush1.xpose.msra.mxu0 0.0
        %1303 = vmatprep.subr.mxu0 0.0
        %1304 = vmatpush1.xpose.msra.mxu0 0.0
        %1305 = vmatprep.subr.mxu0 0.0
        %1306 = vmatpush1.xpose.msra.mxu0 0.0
        %1307 = vmatprep.subr.mxu0 0.0
        %1308 = vmatpush1.xpose.msra.mxu0 0.0
        %1309 = vmatprep.subr.mxu0 0.0
        %1310 = vmatpush1.xpose.msra.mxu0 0.0
        %1311 = vmatprep.subr.mxu0 0.0
        %1312 = vmatpush1.xpose.msra.mxu0 0.0
        %1313 = vmatprep.subr.mxu0 0.0
        %1314 = vmatpush1.xpose.msra.mxu0 0.0
        %1315 = vmatprep.subr.mxu0 0.0
        %1316 = vmatpush1.xpose.msra.mxu0 0.0
        %1317 = vmatprep.subr.mxu0 0.0
        %1318 = vmatpush1.xpose.msra.mxu0 0.0
        %1319 = vmatprep.subr.mxu0 0.0
        %1320 = vmatpush1.xpose.msra.mxu0 0.0
        %1321 = vmatprep.subr.mxu0 0.0
        %1322 = vmatpush1.xpose.msra.mxu0 0.0
        %1323 = vmatprep.subr.mxu0 0.0
        %1324 = vmatpush1.xpose.msra.mxu0 0.0
        %1325 = vmatprep.subr.mxu0 0.0
        %1326 = vmatpush1.xpose.msra.mxu0 0.0
        %1327 = vmatprep.subr.mxu0 0.0
        %1328 = vmatpush1.xpose.msra.mxu0 0.0
        %1329 = vmatprep.subr.mxu0 0.0
        %1330 = vmatpush1.xpose.msra.mxu0 0.0
        %1331 = vmatprep.subr.mxu0 0.0
        %1332 = vmatpush1.xpose.msra.mxu0 0.0
        %1333 = vmatprep.subr.mxu0 0.0
        %1334 = vmatpush1.xpose.msra.mxu0 0.0
        %1335 = vmatprep.mubr.f32.mxu0 0.0
        %1336 = vmatmul.mubr.f32.gmra.mrb[0].mxu0 %v1267
        %v1337 = vpop.f32.mrb[0].mxu0
        %v1338 = vadd.f32 0.0, %v1337
        %v1339 = vpop.f32.mrb[0].mxu0
        %1340 = vdwg.mxu0
        %v1341 = vmul.f32 %v1338, 0.17677669
        %v1342 = vadd.f32 %v1341, %v480
        %v1343 = vsel %vm843, %v1342, -inf
        %1344 = vmax.xlane.f32.xlu0 %v1343
        %v1345 = vpop.xlane.xlu0 %1344
        %v1346 = vsub.f32 %v1342, %v1345
        %v1347 = vmul.f32 %v1346, 1.442695
        %v1348 = vpow.pop %v1347
        %v1349 = vsel %vm843, %v1348, 0.0
        %1350 = vadd.xlane.f32.xlu0 %v1349
        %v1351 = vpop.xlane.xlu0 %1350
        %v1352 = vrcp.pop %v1351
        %v1353 = vmul.f32 %v1348, %v1352
        %1354 = vrot.lane.b32.xlu0 %v759, 32
        %v1355 = vpop.permute.xlu0 %1354
        %v1358 = vsel %vm843, %v1353, 0
        %1360 = vmatprep.subr.mxu0 0.0
        %1361 = vmatpush1.msra.mxu0 %v1355
        %1362 = vmatprep.subr.mxu0 0.0
        %1363 = vmatpush1.msra.mxu0 0.0
        %1364 = vmatprep.subr.mxu0 0.0
        %1365 = vmatpush1.msra.mxu0 0.0
        %1366 = vmatprep.subr.mxu0 0.0
        %1367 = vmatpush1.msra.mxu0 0.0
        %1368 = vmatprep.subr.mxu0 0.0
        %1369 = vmatpush1.msra.mxu0 0.0
        %1370 = vmatprep.subr.mxu0 0.0
        %1371 = vmatpush1.msra.mxu0 0.0
        %1372 = vmatprep.subr.mxu0 0.0
        %1373 = vmatpush1.msra.mxu0 0.0
        %1374 = vmatprep.subr.mxu0 0.0
        %1375 = vmatpush1.msra.mxu0 0.0
        %1376 = vmatprep.subr.mxu0 0.0
        %1377 = vmatpush1.msra.mxu0 0.0
        %1378 = vmatprep.subr.mxu0 0.0
        %1379 = vmatpush1.msra.mxu0 0.0
        %1380 = vmatprep.subr.mxu0 0.0
        %1381 = vmatpush1.msra.mxu0 0.0
        %1382 = vmatprep.subr.mxu0 0.0
        %1383 = vmatpush1.msra.mxu0 0.0
        %1384 = vmatprep.subr.mxu0 0.0
        %1385 = vmatpush1.msra.mxu0 0.0
        %1386 = vmatprep.subr.mxu0 0.0
        %1387 = vmatpush1.msra.mxu0 0.0
        %1388 = vmatprep.subr.mxu0 0.0
        %1389 = vmatpush1.msra.mxu0 0.0
        %1390 = vmatprep.subr.mxu0 0.0
        %1391 = vmatpush1.msra.mxu0 0.0
        %1392 = vmatprep.subr.mxu0 0.0
        %1393 = vmatpush1.msra.mxu0 0.0
        %1394 = vmatprep.subr.mxu0 0.0
        %1395 = vmatpush1.msra.mxu0 0.0
        %1396 = vmatprep.subr.mxu0 0.0
        %1397 = vmatpush1.msra.mxu0 0.0
        %1398 = vmatprep.subr.mxu0 0.0
        %1399 = vmatpush1.msra.mxu0 0.0
        %1400 = vmatprep.subr.mxu0 0.0
        %1401 = vmatpush1.msra.mxu0 0.0
        %1402 = vmatprep.subr.mxu0 0.0
        %1403 = vmatpush1.msra.mxu0 0.0
        %1404 = vmatprep.subr.mxu0 0.0
        %1405 = vmatpush1.msra.mxu0 0.0
        %1406 = vmatprep.subr.mxu0 0.0
        %1407 = vmatpush1.msra.mxu0 0.0
        %1408 = vmatprep.subr.mxu0 0.0
        %1409 = vmatpush1.msra.mxu0 0.0
        %1410 = vmatprep.subr.mxu0 0.0
        %1411 = vmatpush1.msra.mxu0 0.0
        %1412 = vmatprep.subr.mxu0 0.0
        %1413 = vmatpush1.msra.mxu0 0.0
        %1414 = vmatprep.subr.mxu0 0.0
        %1415 = vmatpush1.msra.mxu0 0.0
        %1416 = vmatprep.subr.mxu0 0.0
        %1417 = vmatpush1.msra.mxu0 0.0
        %1418 = vmatprep.subr.mxu0 0.0
        %1419 = vmatpush1.msra.mxu0 0.0
        %1420 = vmatprep.subr.mxu0 0.0
        %1421 = vmatpush1.msra.mxu0 0.0
        %1422 = vmatprep.subr.mxu0 0.0
        %1423 = vmatpush1.msra.mxu0 0.0
        %1424 = vmatprep.mubr.f32.mxu0 0.0
        %1425 = vmatmul.mubr.f32.gmra.mrb[0].mxu0 %v1358
        %v1426 = vpop.f32.mrb[0].mxu0
        %v1427 = vadd.f32 0.0, %v1426
        %v1428 = vpop.f32.mrb[0].mxu0
        %1429 = vdwg.mxu0
        %1431 = vrot.lane.b32.xlu0 %v1093, 32
        %v1432 = vpop.permute.xlu0 %1431
        %1435 = vrot.lane.b32.xlu0 %v1260, 64
        %v1436 = vpop.permute.xlu0 %1435
        %1439 = vrot.lane.b32.xlu0 %v1427, 96
        %v1440 = vpop.permute.xlu0 %1439
        %v1442 = vsel %vm764, %v925, %v1432
        %vm1443 = vcmask 523264
        %v1444 = vsel %vm1443, %v1442, %v1436
        %vm1445 = vcmask 785408
        %v1446 = vsel %vm1445, %v1444, %v1440
        %v1447 = vpack.c.bf16 %v1446, %v1446
        %v1448 = vld [vmem:[#allocation8] sm:$0xf]
        %v1449 = vld [vmem:[#allocation8 + $0x4] sm:$0xf]
        %v1450 = vld [vmem:[#allocation8 + $0x8] sm:$0xf]
        %v1451 = vld [vmem:[#allocation8 + $0xc] sm:$0xf]
        %v1452 = vld [vmem:[#allocation8 + $0x10] sm:$0xf]
        %v1453 = vld [vmem:[#allocation8 + $0x14] sm:$0xf]
        %v1454 = vld [vmem:[#allocation8 + $0x18] sm:$0xf]
        %v1455 = vld [vmem:[#allocation8 + $0x1c] sm:$0xf]
        %v1456 = vld [vmem:[#allocation8 + $0x20] sm:$0xf]
        %v1457 = vld [vmem:[#allocation8 + $0x24] sm:$0xf]
        %v1458 = vld [vmem:[#allocation8 + $0x28] sm:$0xf]
        %v1459 = vld [vmem:[#allocation8 + $0x2c] sm:$0xf]
        %v1460 = vld [vmem:[#allocation8 + $0x30] sm:$0xf]
        %v1461 = vld [vmem:[#allocation8 + $0x34] sm:$0xf]
        %v1462 = vld [vmem:[#allocation8 + $0x38] sm:$0xf]
        %v1463 = vld [vmem:[#allocation8 + $0x3c] sm:$0xf]
        %v1464 = vld [vmem:[%s4] sm:$0x1]
        %v1465 = vlaneseq
        %v1466 = vshrl.u32 %v1465, 7
        %v1467 = vsub.s32 0, %v1466
        %v1468 = vrot.slane %v1464, %v1467
        %v1485 = vunpack.c.l.b16 %v1448
        %v1486 = vunpack.c.l.b16 %v1449
        %v1487 = vunpack.c.l.b16 %v1450
        %v1488 = vunpack.c.l.b16 %v1451
        %v1489 = vunpack.c.l.b16 %v1452
        %v1490 = vunpack.c.l.b16 %v1453
        %v1491 = vunpack.c.l.b16 %v1454
        %v1492 = vunpack.c.l.b16 %v1455
        %v1493 = vunpack.c.l.b16 %v1456
        %v1494 = vunpack.c.l.b16 %v1457
        %v1495 = vunpack.c.l.b16 %v1458
        %v1496 = vunpack.c.l.b16 %v1459
        %v1497 = vunpack.c.l.b16 %v1460
        %v1498 = vunpack.c.l.b16 %v1461
        %v1499 = vunpack.c.l.b16 %v1462
        %v1500 = vunpack.c.l.b16 %v1463
        %v1501 = vpack.c.b16 %v1486, %v1485
        %v1502 = vpack.c.b16 %v1488, %v1487
        %v1503 = vpack.c.b16 %v1490, %v1489
        %v1504 = vpack.c.b16 %v1492, %v1491
        %v1505 = vpack.c.b16 %v1494, %v1493
        %v1506 = vpack.c.b16 %v1496, %v1495
        %v1507 = vpack.c.b16 %v1498, %v1497
        %v1508 = vpack.c.b16 %v1500, %v1499
        %1517 = vmatprep.subr.bf16.mxu0 0
        %1518 = vmatpush1.bf16.msra.mxu0 %v1501
        %1519 = vmatprep.subr.bf16.mxu0 0
        %1520 = vmatpush1.bf16.msra.mxu0 %v1502
        %1521 = vmatprep.subr.bf16.mxu0 0
        %1522 = vmatpush1.bf16.msra.mxu0 %v1503
        %1523 = vmatprep.subr.bf16.mxu0 0
        %1524 = vmatpush1.bf16.msra.mxu0 %v1504
        %1525 = vmatprep.subr.bf16.mxu0 0
        %1526 = vmatpush1.bf16.msra.mxu0 %v1505
        %1527 = vmatprep.subr.bf16.mxu0 0
        %1528 = vmatpush1.bf16.msra.mxu0 %v1506
        %1529 = vmatprep.subr.bf16.mxu0 0
        %1530 = vmatpush1.bf16.msra.mxu0 %v1507
        %1531 = vmatprep.subr.bf16.mxu0 0
        %1532 = vmatpush1.bf16.msra.mxu0 %v1508
        %1533 = vmatprep.subr.bf16.mxu0 0
        %1534 = vmatpush1.bf16.msra.mxu0 0
        %1535 = vmatprep.subr.bf16.mxu0 0
        %1536 = vmatpush1.bf16.msra.mxu0 0
        %1537 = vmatprep.subr.bf16.mxu0 0
        %1538 = vmatpush1.bf16.msra.mxu0 0
        %1539 = vmatprep.subr.bf16.mxu0 0
        %1540 = vmatpush1.bf16.msra.mxu0 0
        %1541 = vmatprep.subr.bf16.mxu0 0
        %1542 = vmatpush1.bf16.msra.mxu0 0
        %1543 = vmatprep.subr.bf16.mxu0 0
        %1544 = vmatpush1.bf16.msra.mxu0 0
        %1545 = vmatprep.subr.bf16.mxu0 0
        %1546 = vmatpush1.bf16.msra.mxu0 0
        %1547 = vmatprep.subr.bf16.mxu0 0
        %1548 = vmatpush1.bf16.msra.mxu0 0
        %1549 = vmatprep.mubr.bf16.mxu0 0
        %1550 = vmatmul.mubr.bf16.gmra.mrb[0].mxu0 %v1447
        %v1551 = vpop.f32.mrb[0].mxu0
        %v1552 = vadd.f32 %v1468, %v1551
        %v1553 = vpop.f32.mrb[0].mxu0
        %v1554 = vpop.f32.mrb[0].mxu0
        %v1555 = vpop.f32.mrb[0].mxu0
        %1556 = vdwg.mxu0
        %v1557 = vadd.f32 %v1552, %v474
        %v1558 = vld [vmem:[%s9 + $0x2] sm:$0x1]
        %v1559 = vld [vmem:[%s9 + $0x3] sm:$0x1]
        %1560 = vadd.xlane.f32.xlu0 %v1557
        %v1561 = vpop.xlane.xlu0 %1560
        %v1562 = vmul.f32 %v1561, %v485
        %v1563 = vsub.f32 %v1557, %v1562
        %v1564 = vmul.f32 %v1563, %v1563
        %1565 = vadd.xlane.f32.xlu0 %v1564
        %v1566 = vpop.xlane.xlu0 %1565
        %v1567 = vmul.f32 %v1566, %v485
        %v1568 = vadd.f32 %v1567, 1e-05
        %v1569 = vrsqrt.pop %v1568
        %v1570 = vmul.f32 %v1563, %v1569
        %v1571 = vlaneseq
        %v1572 = vshrl.u32 %v1571, 7
        %v1573 = vsub.s32 0, %v1572
        %v1574 = vrot.slane %v1558, %v1573
        %v1575 = vmul.f32 %v1570, %v1574
        %v1576 = vlaneseq
        %v1577 = vshrl.u32 %v1576, 7
        %v1578 = vsub.s32 0, %v1577
        %v1579 = vrot.slane %v1559, %v1578
        %v1580 = vadd.f32 %v1575, %v1579
        %v1581 = vpack.c.bf16 %v1580, %v1580
        %v1582 = vld [vmem:[#allocation10] sm:$0xff]
        %v1583 = vld [vmem:[#allocation10 + $0x8] sm:$0xff]
        %v1584 = vld [vmem:[#allocation10 + $0x10] sm:$0xff]
        %v1585 = vld [vmem:[#allocation10 + $0x18] sm:$0xff]
        %v1586 = vld [vmem:[#allocation10 + $0x20] sm:$0xff]
        %v1587 = vld [vmem:[#allocation10 + $0x28] sm:$0xff]
        %v1588 = vld [vmem:[#allocation10 + $0x30] sm:$0xff]
        %v1589 = vld [vmem:[#allocation10 + $0x38] sm:$0xff]
        %v1590 = vld [vmem:[#allocation10 + $0x40] sm:$0xff]
        %v1591 = vld [vmem:[#allocation10 + $0x48] sm:$0xff]
        %v1592 = vld [vmem:[#allocation10 + $0x50] sm:$0xff]
        %v1593 = vld [vmem:[#allocation10 + $0x58] sm:$0xff]
        %v1594 = vld [vmem:[#allocation10 + $0x60] sm:$0xff]
        %v1595 = vld [vmem:[#allocation10 + $0x68] sm:$0xff]
        %v1596 = vld [vmem:[#allocation10 + $0x70] sm:$0xff]
        %v1597 = vld [vmem:[#allocation10 + $0x78] sm:$0xff]
        %v1598 = vld [vmem:[#allocation10 + $0x80] sm:$0xff]
        %v1599 = vld [vmem:[#allocation10 + $0x88] sm:$0xff]
        %v1600 = vld [vmem:[#allocation10 + $0x90] sm:$0xff]
        %v1601 = vld [vmem:[#allocation10 + $0x98] sm:$0xff]
        %v1602 = vld [vmem:[#allocation10 + $0xa0] sm:$0xff]
        %v1603 = vld [vmem:[#allocation10 + $0xa8] sm:$0xff]
        %v1604 = vld [vmem:[#allocation10 + $0xb0] sm:$0xff]
        %v1605 = vld [vmem:[#allocation10 + $0xb8] sm:$0xff]
        %v1606 = vld [vmem:[#allocation10 + $0xc0] sm:$0xff]
        %v1607 = vld [vmem:[#allocation10 + $0xc8] sm:$0xff]
        %v1608 = vld [vmem:[#allocation10 + $0xd0] sm:$0xff]
        %v1609 = vld [vmem:[#allocation10 + $0xd8] sm:$0xff]
        %v1610 = vld [vmem:[#allocation10 + $0xe0] sm:$0xff]
        %v1611 = vld [vmem:[#allocation10 + $0xe8] sm:$0xff]
        %v1612 = vld [vmem:[#allocation10 + $0xf0] sm:$0xff]
        %v1613 = vld [vmem:[#allocation10 + $0xf8] sm:$0xff]
        %v1614 = vld [vmem:[%s6] ss:$2 sm:$0xf]
        %v1616 = vlaneseq
        %v1617 = vshrl.u32 %v1616, 7
        %v1618 = vsub.s32 0, %v1617
        %v1619 = vrot.slane %v1614, %v1618
        %v1620 = vlaneseq
        %v1621 = vshrl.u32 %v1620, 7
        %v1622 = vsub.s32 1, %v1621
        %v1623 = vrot.slane %v1614, %v1622
        %v1624 = vlaneseq
        %v1625 = vshrl.u32 %v1624, 7
        %v1626 = vsub.s32 2, %v1625
        %v1627 = vrot.slane %v1614, %v1626
        %v1628 = vlaneseq
        %v1629 = vshrl.u32 %v1628, 7
        %v1630 = vsub.s32 3, %v1629
        %v1631 = vrot.slane %v1614, %v1630
        %v1668 = vunpack.c.l.b16 %v1582
        %v1669 = vunpack.c.h.b16 %v1582
        %v1670 = vunpack.c.l.b16 %v1583
        %v1671 = vunpack.c.h.b16 %v1583
        %v1672 = vunpack.c.l.b16 %v1584
        %v1673 = vunpack.c.h.b16 %v1584
        %v1674 = vunpack.c.l.b16 %v1585
        %v1675 = vunpack.c.h.b16 %v1585
        %v1676 = vunpack.c.l.b16 %v1586
        %v1677 = vunpack.c.h.b16 %v1586
        %v1678 = vunpack.c.l.b16 %v1587
        %v1679 = vunpack.c.h.b16 %v1587
        %v1680 = vunpack.c.l.b16 %v1588
        %v1681 = vunpack.c.h.b16 %v1588
        %v1682 = vunpack.c.l.b16 %v1589
        %v1683 = vunpack.c.h.b16 %v1589
        %v1684 = vunpack.c.l.b16 %v1590
        %v1685 = vunpack.c.h.b16 %v1590
        %v1686 = vunpack.c.l.b16 %v1591
        %v1687 = vunpack.c.h.b16 %v1591
        %v1688 = vunpack.c.l.b16 %v1592
        %v1689 = vunpack.c.h.b16 %v1592
        %v1690 = vunpack.c.l.b16 %v1593
        %v1691 = vunpack.c.h.b16 %v1593
        %v1692 = vunpack.c.l.b16 %v1594
        %v1693 = vunpack.c.h.b16 %v1594
        %v1694 = vunpack.c.l.b16 %v1595
        %v1695 = vunpack.c.h.b16 %v1595
        %v1696 = vunpack.c.l.b16 %v1596
        %v1697 = vunpack.c.h.b16 %v1596
        %v1698 = vunpack.c.l.b16 %v1597
        %v1699 = vunpack.c.h.b16 %v1597
        %v1700 = vunpack.c.l.b16 %v1598
        %v1701 = vunpack.c.h.b16 %v1598
        %v1702 = vunpack.c.l.b16 %v1599
        %v1703 = vunpack.c.h.b16 %v1599
        %v1704 = vunpack.c.l.b16 %v1600
        %v1705 = vunpack.c.h.b16 %v1600
        %v1706 = vunpack.c.l.b16 %v1601
        %v1707 = vunpack.c.h.b16 %v1601
        %v1708 = vunpack.c.l.b16 %v1602
        %v1709 = vunpack.c.h.b16 %v1602
        %v1710 = vunpack.c.l.b16 %v1603
        %v1711 = vunpack.c.h.b16 %v1603
        %v1712 = vunpack.c.l.b16 %v1604
        %v1713 = vunpack.c.h.b16 %v1604
        %v1714 = vunpack.c.l.b16 %v1605
        %v1715 = vunpack.c.h.b16 %v1605
        %v1716 = vunpack.c.l.b16 %v1606
        %v1717 = vunpack.c.h.b16 %v1606
        %v1718 = vunpack.c.l.b16 %v1607
        %v1719 = vunpack.c.h.b16 %v1607
        %v1720 = vunpack.c.l.b16 %v1608
        %v1721 = vunpack.c.h.b16 %v1608
        %v1722 = vunpack.c.l.b16 %v1609
        %v1723 = vunpack.c.h.b16 %v1609
        %v1724 = vunpack.c.l.b16 %v1610
        %v1725 = vunpack.c.h.b16 %v1610
        %v1726 = vunpack.c.l.b16 %v1611
        %v1727 = vunpack.c.h.b16 %v1611
        %v1728 = vunpack.c.l.b16 %v1612
        %v1729 = vunpack.c.h.b16 %v1612
        %v1730 = vunpack.c.l.b16 %v1613
        %v1731 = vunpack.c.h.b16 %v1613
        %v1732 = vpack.c.b16 %v1672, %v1668
        %v1733 = vpack.c.b16 %v1673, %v1669
        %v1734 = vpack.c.b16 %v1674, %v1670
        %v1735 = vpack.c.b16 %v1675, %v1671
        %v1736 = vpack.c.b16 %v1680, %v1676
        %v1737 = vpack.c.b16 %v1681, %v1677
        %v1738 = vpack.c.b16 %v1682, %v1678
        %v1739 = vpack.c.b16 %v1683, %v1679
        %v1740 = vpack.c.b16 %v1688, %v1684
        %v1741 = vpack.c.b16 %v1689, %v1685
        %v1742 = vpack.c.b16 %v1690, %v1686
        %v1743 = vpack.c.b16 %v1691, %v1687
        %v1744 = vpack.c.b16 %v1696, %v1692
        %v1745 = vpack.c.b16 %v1697, %v1693
        %v1746 = vpack.c.b16 %v1698, %v1694
        %v1747 = vpack.c.b16 %v1699, %v1695
        %v1748 = vpack.c.b16 %v1704, %v1700
        %v1749 = vpack.c.b16 %v1705, %v1701
        %v1750 = vpack.c.b16 %v1706, %v1702
        %v1751 = vpack.c.b16 %v1707, %v1703
        %v1752 = vpack.c.b16 %v1712, %v1708
        %v1753 = vpack.c.b16 %v1713, %v1709
        %v1754 = vpack.c.b16 %v1714, %v1710
        %v1755 = vpack.c.b16 %v1715, %v1711
        %v1756 = vpack.c.b16 %v1720, %v1716
        %v1757 = vpack.c.b16 %v1721, %v1717
        %v1758 = vpack.c.b16 %v1722, %v1718
        %v1759 = vpack.c.b16 %v1723, %v1719
        %v1760 = vpack.c.b16 %v1728, %v1724
        %v1761 = vpack.c.b16 %v1729, %v1725
        %v1762 = vpack.c.b16 %v1730, %v1726
        %v1763 = vpack.c.b16 %v1731, %v1727
        %1796 = vmatprep.subr.bf16.mxu0 %v1733
        %1797 = vmatpush1.bf16.msra.mxu0 %v1732
        %1798 = vmatprep.subr.bf16.mxu0 %v1737
        %1799 = vmatpush1.bf16.msra.mxu0 %v1736
        %1800 = vmatprep.subr.bf16.mxu0 %v1741
        %1801 = vmatpush1.bf16.msra.mxu0 %v1740
        %1802 = vmatprep.subr.bf16.mxu0 %v1745
        %1803 = vmatpush1.bf16.msra.mxu0 %v1744
        %1804 = vmatprep.subr.bf16.mxu0 %v1749
        %1805 = vmatpush1.bf16.msra.mxu0 %v1748
        %1806 = vmatprep.subr.bf16.mxu0 %v1753
        %1807 = vmatpush1.bf16.msra.mxu0 %v1752
        %1808 = vmatprep.subr.bf16.mxu0 %v1757
        %1809 = vmatpush1.bf16.msra.mxu0 %v1756
        %1810 = vmatprep.subr.bf16.mxu0 %v1761
        %1811 = vmatpush1.bf16.msra.mxu0 %v1760
        %1812 = vmatprep.subr.bf16.mxu0 0
        %1813 = vmatpush1.bf16.msra.mxu0 0
        %1814 = vmatprep.subr.bf16.mxu0 0
        %1815 = vmatpush1.bf16.msra.mxu0 0
        %1816 = vmatprep.subr.bf16.mxu0 0
        %1817 = vmatpush1.bf16.msra.mxu0 0
        %1818 = vmatprep.subr.bf16.mxu0 0
        %1819 = vmatpush1.bf16.msra.mxu0 0
        %1820 = vmatprep.subr.bf16.mxu0 0
        %1821 = vmatpush1.bf16.msra.mxu0 0
        %1822 = vmatprep.subr.bf16.mxu0 0
        %1823 = vmatpush1.bf16.msra.mxu0 0
        %1824 = vmatprep.subr.bf16.mxu0 0
        %1825 = vmatpush1.bf16.msra.mxu0 0
        %1826 = vmatprep.subr.bf16.mxu0 0
        %1827 = vmatpush1.bf16.msra.mxu0 0
        %1828 = vmatprep.mubr.bf16.mxu0 0
        %1829 = vmatmul.mubr.bf16.gmra.mrb[0].mxu0 %v1581
        %v1830 = vpop.f32.mrb[0].mxu0
        %v1831 = vadd.f32 %v1619, %v1830
        %v1832 = vpop.f32.mrb[0].mxu0
        %v1833 = vadd.f32 %v1623, %v1832
        %v1834 = vpop.f32.mrb[0].mxu0
        %v1835 = vpop.f32.mrb[0].mxu0
        %1836 = vdwg.mxu0
        %1837 = vmatprep.subr.bf16.mxu0 %v1735
        %1838 = vmatpush1.bf16.msra.mxu0 %v1734
        %1839 = vmatprep.subr.bf16.mxu0 %v1739
        %1840 = vmatpush1.bf16.msra.mxu0 %v1738
        %1841 = vmatprep.subr.bf16.mxu0 %v1743
        %1842 = vmatpush1.bf16.msra.mxu0 %v1742
        %1843 = vmatprep.subr.bf16.mxu0 %v1747
        %1844 = vmatpush1.bf16.msra.mxu0 %v1746
        %1845 = vmatprep.subr.bf16.mxu0 %v1751
        %1846 = vmatpush1.bf16.msra.mxu0 %v1750
        %1847 = vmatprep.subr.bf16.mxu0 %v1755
        %1848 = vmatpush1.bf16.msra.mxu0 %v1754
        %1849 = vmatprep.subr.bf16.mxu0 %v1759
        %1850 = vmatpush1.bf16.msra.mxu0 %v1758
        %1851 = vmatprep.subr.bf16.mxu0 %v1763
        %1852 = vmatpush1.bf16.msra.mxu0 %v1762
        %1853 = vmatprep.subr.bf16.mxu0 0
        %1854 = vmatpush1.bf16.msra.mxu0 0
        %1855 = vmatprep.subr.bf16.mxu0 0
        %1856 = vmatpush1.bf16.msra.mxu0 0
        %1857 = vmatprep.subr.bf16.mxu0 0
        %1858 = vmatpush1.bf16.msra.mxu0 0
        %1859 = vmatprep.subr.bf16.mxu0 0
        %1860 = vmatpush1.bf16.msra.mxu0 0
        %1861 = vmatprep.subr.bf16.mxu0 0
        %1862 = vmatpush1.bf16.msra.mxu0 0
        %1863 = vmatprep.subr.bf16.mxu0 0
        %1864 = vmatpush1.bf16.msra.mxu0 0
        %1865 = vmatprep.subr.bf16.mxu0 0
        %1866 = vmatpush1.bf16.msra.mxu0 0
        %1867 = vmatprep.subr.bf16.mxu0 0
        %1868 = vmatpush1.bf16.msra.mxu0 0
        %1869 = vmatprep.mubr.bf16.mxu0 0
        %1870 = vmatmul.mubr.bf16.gmra.mrb[0].mxu0 %v1581
        %v1871 = vpop.f32.mrb[0].mxu0
        %v1872 = vadd.f32 %v1627, %v1871
        %v1873 = vpop.f32.mrb[0].mxu0
        %v1874 = vadd.f32 %v1631, %v1873
        %v1875 = vpop.f32.mrb[0].mxu0
        %v1876 = vpop.f32.mrb[0].mxu0
        %1877 = vdwg.mxu0
        %v1878 = vmul.f32 %v1831, 1.702
        %v1879 = vmul.f32 %v1833, 1.702
        %v1880 = vmul.f32 %v1872, 1.702
        %v1881 = vmul.f32 %v1874, 1.702
        %v1882 = vxor.u32 %v1878, 2147483648
        %v1883 = vxor.u32 %v1879, 2147483648
        %v1884 = vxor.u32 %v1880, 2147483648
        %v1885 = vxor.u32 %v1881, 2147483648
        %v1886 = vmul.f32 %v1882, 1.442695
        %v1887 = vpow.pop %v1886
        %v1888 = vmul.f32 %v1883, 1.442695
        %v1889 = vpow.pop %v1888
        %v1890 = vmul.f32 %v1884, 1.442695
        %v1891 = vpow.pop %v1890
        %v1892 = vmul.f32 %v1885, 1.442695
        %v1893 = vpow.pop %v1892
        %v1894 = vadd.f32 %v1887, 1.0
        %v1895 = vadd.f32 %v1889, 1.0
        %v1896 = vadd.f32 %v1891, 1.0
        %v1897 = vadd.f32 %v1893, 1.0
        %v1898 = vrcp.pop %v1894
        %v1899 = vmul.f32 1.0, %v1898
        %v1900 = vrcp.pop %v1895
        %v1901 = vmul.f32 1.0, %v1900
        %v1902 = vrcp.pop %v1896
        %v1903 = vmul.f32 1.0, %v1902
        %v1904 = vrcp.pop %v1897
        %v1905 = vmul.f32 1.0, %v1904
        %v1906 = vmul.f32 %v1831, %v1899
        %v1907 = vmul.f32 %v1833, %v1901
        %v1908 = vmul.f32 %v1872, %v1903
        %v1909 = vmul.f32 %v1874, %v1905
        %v1910 = vpack.c.bf16 %v1906, %v1906
        %v1911 = vpack.c.bf16 %v1907, %v1907
        %v1912 = vpack.c.bf16 %v1908, %v1908
        %v1913 = vpack.c.bf16 %v1909, %v1909
        %v1914 = vld [vmem:[#allocation11] sm:$0xf]
        %v1915 = vld [vmem:[#allocation11 + $0x4] sm:$0xf]
        %v1916 = vld [vmem:[#allocation11 + $0x8] sm:$0xf]
        %v1917 = vld [vmem:[#allocation11 + $0xc] sm:$0xf]
        %v1918 = vld [vmem:[#allocation11 + $0x10] sm:$0xf]
        %v1919 = vld [vmem:[#allocation11 + $0x14] sm:$0xf]
        %v1920 = vld [vmem:[#allocation11 + $0x18] sm:$0xf]
        %v1921 = vld [vmem:[#allocation11 + $0x1c] sm:$0xf]
        %v1922 = vld [vmem:[#allocation11 + $0x20] sm:$0xf]
        %v1923 = vld [vmem:[#allocation11 + $0x24] sm:$0xf]
        %v1924 = vld [vmem:[#allocation11 + $0x28] sm:$0xf]
        %v1925 = vld [vmem:[#allocation11 + $0x2c] sm:$0xf]
        %v1926 = vld [vmem:[#allocation11 + $0x30] sm:$0xf]
        %v1927 = vld [vmem:[#allocation11 + $0x34] sm:$0xf]
        %v1928 = vld [vmem:[#allocation11 + $0x38] sm:$0xf]
        %v1929 = vld [vmem:[#allocation11 + $0x3c] sm:$0xf]
        %v1930 = vld [vmem:[#allocation11 + $0x40] sm:$0xf]
        %v1931 = vld [vmem:[#allocation11 + $0x44] sm:$0xf]
        %v1932 = vld [vmem:[#allocation11 + $0x48] sm:$0xf]
        %v1933 = vld [vmem:[#allocation11 + $0x4c] sm:$0xf]
        %v1934 = vld [vmem:[#allocation11 + $0x50] sm:$0xf]
        %v1935 = vld [vmem:[#allocation11 + $0x54] sm:$0xf]
        %v1936 = vld [vmem:[#allocation11 + $0x58] sm:$0xf]
        %v1937 = vld [vmem:[#allocation11 + $0x5c] sm:$0xf]
        %v1938 = vld [vmem:[#allocation11 + $0x60] sm:$0xf]
        %v1939 = vld [vmem:[#allocation11 + $0x64] sm:$0xf]
        %v1940 = vld [vmem:[#allocation11 + $0x68] sm:$0xf]
        %v1941 = vld [vmem:[#allocation11 + $0x6c] sm:$0xf]
        %v1942 = vld [vmem:[#allocation11 + $0x70] sm:$0xf]
        %v1943 = vld [vmem:[#allocation11 + $0x74] sm:$0xf]
        %v1944 = vld [vmem:[#allocation11 + $0x78] sm:$0xf]
        %v1945 = vld [vmem:[#allocation11 + $0x7c] sm:$0xf]
        %v1946 = vld [vmem:[#allocation11 + $0x80] sm:$0xf]
        %v1947 = vld [vmem:[#allocation11 + $0x84] sm:$0xf]
        %v1948 = vld [vmem:[#allocation11 + $0x88] sm:$0xf]
        %v1949 = vld [vmem:[#allocation11 + $0x8c] sm:$0xf]
        %v1950 = vld [vmem:[#allocation11 + $0x90] sm:$0xf]
        %v1951 = vld [vmem:[#allocation11 + $0x94] sm:$0xf]
        %v1952 = vld [vmem:[#allocation11 + $0x98] sm:$0xf]
        %v1953 = vld [vmem:[#allocation11 + $0x9c] sm:$0xf]
        %v1954 = vld [vmem:[#allocation11 + $0xa0] sm:$0xf]
        %v1955 = vld [vmem:[#allocation11 + $0xa4] sm:$0xf]
        %v1956 = vld [vmem:[#allocation11 + $0xa8] sm:$0xf]
        %v1957 = vld [vmem:[#allocation11 + $0xac] sm:$0xf]
        %v1958 = vld [vmem:[#allocation11 + $0xb0] sm:$0xf]
        %v1959 = vld [vmem:[#allocation11 + $0xb4] sm:$0xf]
        %v1960 = vld [vmem:[#allocation11 + $0xb8] sm:$0xf]
        %v1961 = vld [vmem:[#allocation11 + $0xbc] sm:$0xf]
        %v1962 = vld [vmem:[#allocation11 + $0xc0] sm:$0xf]
        %v1963 = vld [vmem:[#allocation11 + $0xc4] sm:$0xf]
        %v1964 = vld [vmem:[#allocation11 + $0xc8] sm:$0xf]
        %v1965 = vld [vmem:[#allocation11 + $0xcc] sm:$0xf]
        %v1966 = vld [vmem:[#allocation11 + $0xd0] sm:$0xf]
        %v1967 = vld [vmem:[#allocation11 + $0xd4] sm:$0xf]
        %v1968 = vld [vmem:[#allocation11 + $0xd8] sm:$0xf]
        %v1969 = vld [vmem:[#allocation11 + $0xdc] sm:$0xf]
        %v1970 = vld [vmem:[#allocation11 + $0xe0] sm:$0xf]
        %v1971 = vld [vmem:[#allocation11 + $0xe4] sm:$0xf]
        %v1972 = vld [vmem:[#allocation11 + $0xe8] sm:$0xf]
        %v1973 = vld [vmem:[#allocation11 + $0xec] sm:$0xf]
        %v1974 = vld [vmem:[#allocation11 + $0xf0] sm:$0xf]
        %v1975 = vld [vmem:[#allocation11 + $0xf4] sm:$0xf]
        %v1976 = vld [vmem:[#allocation11 + $0xf8] sm:$0xf]
        %v1977 = vld [vmem:[#allocation11 + $0xfc] sm:$0xf]
        %v1978 = vld [vmem:[%s8] sm:$0x1]
        %v1979 = vlaneseq
        %v1980 = vshrl.u32 %v1979, 7
        %v1981 = vsub.s32 0, %v1980
        %v1982 = vrot.slane %v1978, %v1981
        %v2047 = vunpack.c.l.b16 %v1914
        %v2048 = vunpack.c.l.b16 %v1915
        %v2049 = vunpack.c.l.b16 %v1916
        %v2050 = vunpack.c.l.b16 %v1917
        %v2051 = vunpack.c.l.b16 %v1918
        %v2052 = vunpack.c.l.b16 %v1919
        %v2053 = vunpack.c.l.b16 %v1920
        %v2054 = vunpack.c.l.b16 %v1921
        %v2055 = vunpack.c.l.b16 %v1922
        %v2056 = vunpack.c.l.b16 %v1923
        %v2057 = vunpack.c.l.b16 %v1924
        %v2058 = vunpack.c.l.b16 %v1925
        %v2059 = vunpack.c.l.b16 %v1926
        %v2060 = vunpack.c.l.b16 %v1927
        %v2061 = vunpack.c.l.b16 %v1928
        %v2062 = vunpack.c.l.b16 %v1929
        %v2063 = vunpack.c.l.b16 %v1930
        %v2064 = vunpack.c.l.b16 %v1931
        %v2065 = vunpack.c.l.b16 %v1932
        %v2066 = vunpack.c.l.b16 %v1933
        %v2067 = vunpack.c.l.b16 %v1934
        %v2068 = vunpack.c.l.b16 %v1935
        %v2069 = vunpack.c.l.b16 %v1936
        %v2070 = vunpack.c.l.b16 %v1937
        %v2071 = vunpack.c.l.b16 %v1938
        %v2072 = vunpack.c.l.b16 %v1939
        %v2073 = vunpack.c.l.b16 %v1940
        %v2074 = vunpack.c.l.b16 %v1941
        %v2075 = vunpack.c.l.b16 %v1942
        %v2076 = vunpack.c.l.b16 %v1943
        %v2077 = vunpack.c.l.b16 %v1944
        %v2078 = vunpack.c.l.b16 %v1945
        %v2079 = vunpack.c.l.b16 %v1946
        %v2080 = vunpack.c.l.b16 %v1947
        %v2081 = vunpack.c.l.b16 %v1948
        %v2082 = vunpack.c.l.b16 %v1949
        %v2083 = vunpack.c.l.b16 %v1950
        %v2084 = vunpack.c.l.b16 %v1951
        %v2085 = vunpack.c.l.b16 %v1952
        %v2086 = vunpack.c.l.b16 %v1953
        %v2087 = vunpack.c.l.b16 %v1954
        %v2088 = vunpack.c.l.b16 %v1955
        %v2089 = vunpack.c.l.b16 %v1956
        %v2090 = vunpack.c.l.b16 %v1957
        %v2091 = vunpack.c.l.b16 %v1958
        %v2092 = vunpack.c.l.b16 %v1959
        %v2093 = vunpack.c.l.b16 %v1960
        %v2094 = vunpack.c.l.b16 %v1961
        %v2095 = vunpack.c.l.b16 %v1962
        %v2096 = vunpack.c.l.b16 %v1963
        %v2097 = vunpack.c.l.b16 %v1964
        %v2098 = vunpack.c.l.b16 %v1965
        %v2099 = vunpack.c.l.b16 %v1966
        %v2100 = vunpack.c.l.b16 %v1967
        %v2101 = vunpack.c.l.b16 %v1968
        %v2102 = vunpack.c.l.b16 %v1969
        %v2103 = vunpack.c.l.b16 %v1970
        %v2104 = vunpack.c.l.b16 %v1971
        %v2105 = vunpack.c.l.b16 %v1972
        %v2106 = vunpack.c.l.b16 %v1973
        %v2107 = vunpack.c.l.b16 %v1974
        %v2108 = vunpack.c.l.b16 %v1975
        %v2109 = vunpack.c.l.b16 %v1976
        %v2110 = vunpack.c.l.b16 %v1977
        %v2111 = vpack.c.b16 %v2048, %v2047
        %v2112 = vpack.c.b16 %v2050, %v2049
        %v2113 = vpack.c.b16 %v2052, %v2051
        %v2114 = vpack.c.b16 %v2054, %v2053
        %v2115 = vpack.c.b16 %v2056, %v2055
        %v2116 = vpack.c.b16 %v2058, %v2057
        %v2117 = vpack.c.b16 %v2060, %v2059
        %v2118 = vpack.c.b16 %v2062, %v2061
        %v2119 = vpack.c.b16 %v2064, %v2063
        %v2120 = vpack.c.b16 %v2066, %v2065
        %v2121 = vpack.c.b16 %v2068, %v2067
        %v2122 = vpack.c.b16 %v2070, %v2069
        %v2123 = vpack.c.b16 %v2072, %v2071
        %v2124 = vpack.c.b16 %v2074, %v2073
        %v2125 = vpack.c.b16 %v2076, %v2075
        %v2126 = vpack.c.b16 %v2078, %v2077
        %v2127 = vpack.c.b16 %v2080, %v2079
        %v2128 = vpack.c.b16 %v2082, %v2081
        %v2129 = vpack.c.b16 %v2084, %v2083
        %v2130 = vpack.c.b16 %v2086, %v2085
        %v2131 = vpack.c.b16 %v2088, %v2087
        %v2132 = vpack.c.b16 %v2090, %v2089
        %v2133 = vpack.c.b16 %v2092, %v2091
        %v2134 = vpack.c.b16 %v2094, %v2093
        %v2135 = vpack.c.b16 %v2096, %v2095
        %v2136 = vpack.c.b16 %v2098, %v2097
        %v2137 = vpack.c.b16 %v2100, %v2099
        %v2138 = vpack.c.b16 %v2102, %v2101
        %v2139 = vpack.c.b16 %v2104, %v2103
        %v2140 = vpack.c.b16 %v2106, %v2105
        %v2141 = vpack.c.b16 %v2108, %v2107
        %v2142 = vpack.c.b16 %v2110, %v2109
        %2175 = vmatprep.subr.bf16.mxu0 0
        %2176 = vmatpush1.bf16.msra.mxu0 %v2111
        %2177 = vmatprep.subr.bf16.mxu0 0
        %2178 = vmatpush1.bf16.msra.mxu0 %v2112
        %2179 = vmatprep.subr.bf16.mxu0 0
        %2180 = vmatpush1.bf16.msra.mxu0 %v2113
        %2181 = vmatprep.subr.bf16.mxu0 0
        %2182 = vmatpush1.bf16.msra.mxu0 %v2114
        %2183 = vmatprep.subr.bf16.mxu0 0
        %2184 = vmatpush1.bf16.msra.mxu0 %v2115
        %2185 = vmatprep.subr.bf16.mxu0 0
        %2186 = vmatpush1.bf16.msra.mxu0 %v2116
        %2187 = vmatprep.subr.bf16.mxu0 0
        %2188 = vmatpush1.bf16.msra.mxu0 %v2117
        %2189 = vmatprep.subr.bf16.mxu0 0
        %2190 = vmatpush1.bf16.msra.mxu0 %v2118
        %2191 = vmatprep.subr.bf16.mxu0 0
        %2192 = vmatpush1.bf16.msra.mxu0 %v2119
        %2193 = vmatprep.subr.bf16.mxu0 0
        %2194 = vmatpush1.bf16.msra.mxu0 %v2120
        %2195 = vmatprep.subr.bf16.mxu0 0
        %2196 = vmatpush1.bf16.msra.mxu0 %v2121
        %2197 = vmatprep.subr.bf16.mxu0 0
        %2198 = vmatpush1.bf16.msra.mxu0 %v2122
        %2199 = vmatprep.subr.bf16.mxu0 0
        %2200 = vmatpush1.bf16.msra.mxu0 %v2123
        %2201 = vmatprep.subr.bf16.mxu0 0
        %2202 = vmatpush1.bf16.msra.mxu0 %v2124
        %2203 = vmatprep.subr.bf16.mxu0 0
        %2204 = vmatpush1.bf16.msra.mxu0 %v2125
        %2205 = vmatprep.subr.bf16.mxu0 0
        %2206 = vmatpush1.bf16.msra.mxu0 %v2126
        %2207 = vmatprep.mubr.bf16.mxu0 %v1911
        %2208 = vmatmul.mubr.bf16.gmra.mrb[0].mxu0 %v1910
        %v2209 = vpop.f32.mrb[0].mxu0
        %v2210 = vadd.f32 %v1982, %v2209
        %v2211 = vpop.f32.mrb[0].mxu0
        %v2212 = vpop.f32.mrb[0].mxu0
        %v2213 = vpop.f32.mrb[0].mxu0
        %2214 = vdwg.mxu0
        %2215 = vmatprep.subr.bf16.mxu0 0
        %2216 = vmatpush1.bf16.msra.mxu0 %v2127
        %2217 = vmatprep.subr.bf16.mxu0 0
        %2218 = vmatpush1.bf16.msra.mxu0 %v2128
        %2219 = vmatprep.subr.bf16.mxu0 0
        %2220 = vmatpush1.bf16.msra.mxu0 %v2129
        %2221 = vmatprep.subr.bf16.mxu0 0
        %2222 = vmatpush1.bf16.msra.mxu0 %v2130
        %2223 = vmatprep.subr.bf16.mxu0 0
        %2224 = vmatpush1.bf16.msra.mxu0 %v2131
        %2225 = vmatprep.subr.bf16.mxu0 0
        %2226 = vmatpush1.bf16.msra.mxu0 %v2132
        %2227 = vmatprep.subr.bf16.mxu0 0
        %2228 = vmatpush1.bf16.msra.mxu0 %v2133
        %2229 = vmatprep.subr.bf16.mxu0 0
        %2230 = vmatpush1.bf16.msra.mxu0 %v2134
        %2231 = vmatprep.subr.bf16.mxu0 0
        %2232 = vmatpush1.bf16.msra.mxu0 %v2135
        %2233 = vmatprep.subr.bf16.mxu0 0
        %2234 = vmatpush1.bf16.msra.mxu0 %v2136
        %2235 = vmatprep.subr.bf16.mxu0 0
        %2236 = vmatpush1.bf16.msra.mxu0 %v2137
        %2237 = vmatprep.subr.bf16.mxu0 0
        %2238 = vmatpush1.bf16.msra.mxu0 %v2138
        %2239 = vmatprep.subr.bf16.mxu0 0
        %2240 = vmatpush1.bf16.msra.mxu0 %v2139
        %2241 = vmatprep.subr.bf16.mxu0 0
        %2242 = vmatpush1.bf16.msra.mxu0 %v2140
        %2243 = vmatprep.subr.bf16.mxu0 0
        %2244 = vmatpush1.bf16.msra.mxu0 %v2141
        %2245 = vmatprep.subr.bf16.mxu0 0
        %2246 = vmatpush1.bf16.msra.mxu0 %v2142
        %2247 = vmatprep.mubr.bf16.mxu0 %v1913
        %2248 = vmatmul.mubr.bf16.gmra.mrb[0].mxu0 %v1912
        %v2249 = vpop.f32.mrb[0].mxu0
        %v2250 = vadd.f32 %v2210, %v2249
        %v2251 = vpop.f32.mrb[0].mxu0
        %v2252 = vpop.f32.mrb[0].mxu0
        %v2253 = vpop.f32.mrb[0].mxu0
        %2254 = vdwg.mxu0
        %v2255 = vadd.f32 %v2250, %v1557
        %v2256 = vld [vmem:[%s9 + $0x4] sm:$0x1]
        %v2257 = vld [vmem:[%s9 + $0x5] sm:$0x1]
        %2258 = vadd.xlane.f32.xlu0 %v2255
        %v2259 = vpop.xlane.xlu0 %2258
        %v2260 = vmul.f32 %v2259, %v485
        %v2261 = vsub.f32 %v2255, %v2260
        %v2262 = vmul.f32 %v2261, %v2261
        %2263 = vadd.xlane.f32.xlu0 %v2262
        %v2264 = vpop.xlane.xlu0 %2263
        %v2265 = vmul.f32 %v2264, %v485
        %v2266 = vadd.f32 %v2265, 1e-05
        %v2267 = vrsqrt.pop %v2266
        %v2268 = vmul.f32 %v2261, %v2267
        %v2269 = vlaneseq
        %v2270 = vshrl.u32 %v2269, 7
        %v2271 = vsub.s32 0, %v2270
        %v2272 = vrot.slane %v2256, %v2271
        %v2273 = vmul.f32 %v2268, %v2272
        %v2274 = vlaneseq
        %v2275 = vshrl.u32 %v2274, 7
        %v2276 = vsub.s32 0, %v2275
        %v2277 = vrot.slane %v2257, %v2276
        %v2278 = vadd.f32 %v2273, %v2277
        %v2279 = vpack.c.bf16 %v2278, %v2278
        %s2280 = scalar_lea.vmem [#allocation5], 192
        %v2281 = vld [vmem:[%s2280] sm:$0xff]
        %v2282 = vld [vmem:[%s2280 + $0x8] sm:$0xf]
        %v2283 = vld [vmem:[%s2280 + $0xc] sm:$0xff]
        %v2284 = vld [vmem:[%s2280 + $0x14] sm:$0xf]
        %v2285 = vld [vmem:[%s2280 + $0x18] sm:$0xff]
        %v2286 = vld [vmem:[%s2280 + $0x20] sm:$0xf]
        %v2287 = vld [vmem:[%s2280 + $0x24] sm:$0xff]
        %v2288 = vld [vmem:[%s2280 + $0x2c] sm:$0xf]
        %v2289 = vld [vmem:[%s2280 + $0x30] sm:$0xff]
        %v2290 = vld [vmem:[%s2280 + $0x38] sm:$0xf]
        %v2291 = vld [vmem:[%s2280 + $0x3c] sm:$0xff]
        %v2292 = vld [vmem:[%s2280 + $0x44] sm:$0xf]
        %v2293 = vld [vmem:[%s2280 + $0x48] sm:$0xff]
        %v2294 = vld [vmem:[%s2280 + $0x50] sm:$0xf]
        %v2295 = vld [vmem:[%s2280 + $0x54] sm:$0xff]
        %v2296 = vld [vmem:[%s2280 + $0x5c] sm:$0xf]
        %v2297 = vld [vmem:[%s2280 + $0x60] sm:$0xff]
        %v2298 = vld [vmem:[%s2280 + $0x68] sm:$0xf]
        %v2299 = vld [vmem:[%s2280 + $0x6c] sm:$0xff]
        %v2300 = vld [vmem:[%s2280 + $0x74] sm:$0xf]
        %v2301 = vld [vmem:[%s2280 + $0x78] sm:$0xff]
        %v2302 = vld [vmem:[%s2280 + $0x80] sm:$0xf]
        %v2303 = vld [vmem:[%s2280 + $0x84] sm:$0xff]
        %v2304 = vld [vmem:[%s2280 + $0x8c] sm:$0xf]
        %v2305 = vld [vmem:[%s2280 + $0x90] sm:$0xff]
        %v2306 = vld [vmem:[%s2280 + $0x98] sm:$0xf]
        %v2307 = vld [vmem:[%s2280 + $0x9c] sm:$0xff]
        %v2308 = vld [vmem:[%s2280 + $0xa4] sm:$0xf]
        %v2309 = vld [vmem:[%s2280 + $0xa8] sm:$0xff]
        %v2310 = vld [vmem:[%s2280 + $0xb0] sm:$0xf]
        %v2311 = vld [vmem:[%s2280 + $0xb4] sm:$0xff]
        %v2312 = vld [vmem:[%s2280 + $0xbc] sm:$0xf]
        %s2313 = scalar_lea.vmem [#allocation7], 1
        %v2314 = vld [vmem:[%s2313] ss:$2 sm:$0x7]
        %v2316 = vlaneseq
        %v2317 = vshrl.u32 %v2316, 7
        %v2318 = vsub.s32 0, %v2317
        %v2319 = vrot.slane %v2314, %v2318
        %v2320 = vlaneseq
        %v2321 = vshrl.u32 %v2320, 7
        %v2322 = vsub.s32 1, %v2321
        %v2323 = vrot.slane %v2314, %v2322
        %v2324 = vlaneseq
        %v2325 = vshrl.u32 %v2324, 7
        %v2326 = vsub.s32 2, %v2325
        %v2327 = vrot.slane %v2314, %v2326
        %v2363 = vunpack.c.l.b16 %v2281
        %v2364 = vunpack.c.h.b16 %v2281
        %v2365 = vunpack.c.l.b16 %v2282
        %v2366 = vunpack.c.l.b16 %v2283
        %v2367 = vunpack.c.h.b16 %v2283
        %v2368 = vunpack.c.l.b16 %v2284
        %v2369 = vunpack.c.l.b16 %v2285
        %v2370 = vunpack.c.h.b16 %v2285
        %v2371 = vunpack.c.l.b16 %v2286
        %v2372 = vunpack.c.l.b16 %v2287
        %v2373 = vunpack.c.h.b16 %v2287
        %v2374 = vunpack.c.l.b16 %v2288
        %v2375 = vunpack.c.l.b16 %v2289
        %v2376 = vunpack.c.h.b16 %v2289
        %v2377 = vunpack.c.l.b16 %v2290
        %v2378 = vunpack.c.l.b16 %v2291
        %v2379 = vunpack.c.h.b16 %v2291
        %v2380 = vunpack.c.l.b16 %v2292
        %v2381 = vunpack.c.l.b16 %v2293
        %v2382 = vunpack.c.h.b16 %v2293
        %v2383 = vunpack.c.l.b16 %v2294
        %v2384 = vunpack.c.l.b16 %v2295
        %v2385 = vunpack.c.h.b16 %v2295
        %v2386 = vunpack.c.l.b16 %v2296
        %v2387 = vunpack.c.l.b16 %v2297
        %v2388 = vunpack.c.h.b16 %v2297
        %v2389 = vunpack.c.l.b16 %v2298
        %v2390 = vunpack.c.l.b16 %v2299
        %v2391 = vunpack.c.h.b16 %v2299
        %v2392 = vunpack.c.l.b16 %v2300
        %v2393 = vunpack.c.l.b16 %v2301
        %v2394 = vunpack.c.h.b16 %v2301
        %v2395 = vunpack.c.l.b16 %v2302
        %v2396 = vunpack.c.l.b16 %v2303
        %v2397 = vunpack.c.h.b16 %v2303
        %v2398 = vunpack.c.l.b16 %v2304
        %v2399 = vunpack.c.l.b16 %v2305
        %v2400 = vunpack.c.h.b16 %v2305
        %v2401 = vunpack.c.l.b16 %v2306
        %v2402 = vunpack.c.l.b16 %v2307
        %v2403 = vunpack.c.h.b16 %v2307
        %v2404 = vunpack.c.l.b16 %v2308
        %v2405 = vunpack.c.l.b16 %v2309
        %v2406 = vunpack.c.h.b16 %v2309
        %v2407 = vunpack.c.l.b16 %v2310
        %v2408 = vunpack.c.l.b16 %v2311
        %v2409 = vunpack.c.h.b16 %v2311
        %v2410 = vunpack.c.l.b16 %v2312
        %v2411 = vpack.c.b16 %v2366, %v2363
        %v2412 = vpack.c.b16 %v2367, %v2364
        %v2413 = vpack.c.b16 %v2368, %v2365
        %v2414 = vpack.c.b16 %v2372, %v2369
        %v2415 = vpack.c.b16 %v2373, %v2370
        %v2416 = vpack.c.b16 %v2374, %v2371
        %v2417 = vpack.c.b16 %v2378, %v2375
        %v2418 = vpack.c.b16 %v2379, %v2376
        %v2419 = vpack.c.b16 %v2380, %v2377
        %v2420 = vpack.c.b16 %v2384, %v2381
        %v2421 = vpack.c.b16 %v2385, %v2382
        %v2422 = vpack.c.b16 %v2386, %v2383
        %v2423 = vpack.c.b16 %v2390, %v2387
        %v2424 = vpack.c.b16 %v2391, %v2388
        %v2425 = vpack.c.b16 %v2392, %v2389
        %v2426 = vpack.c.b16 %v2396, %v2393
        %v2427 = vpack.c.b16 %v2397, %v2394
        %v2428 = vpack.c.b16 %v2398, %v2395
        %v2429 = vpack.c.b16 %v2402, %v2399
        %v2430 = vpack.c.b16 %v2403, %v2400
        %v2431 = vpack.c.b16 %v2404, %v2401
        %v2432 = vpack.c.b16 %v2408, %v2405
        %v2433 = vpack.c.b16 %v2409, %v2406
        %v2434 = vpack.c.b16 %v2410, %v2407
        %2459 = vmatprep.subr.bf16.mxu0 %v2412
        %2460 = vmatpush1.bf16.msra.mxu0 %v2411
        %2461 = vmatprep.subr.bf16.mxu0 %v2415
        %2462 = vmatpush1.bf16.msra.mxu0 %v2414
        %2463 = vmatprep.subr.bf16.mxu0 %v2418
        %2464 = vmatpush1.bf16.msra.mxu0 %v2417
        %2465 = vmatprep.subr.bf16.mxu0 %v2421
        %2466 = vmatpush1.bf16.msra.mxu0 %v2420
        %2467 = vmatprep.subr.bf16.mxu0 %v2424
        %2468 = vmatpush1.bf16.msra.mxu0 %v2423
        %2469 = vmatprep.subr.bf16.mxu0 %v2427
        %2470 = vmatpush1.bf16.msra.mxu0 %v2426
        %2471 = vmatprep.subr.bf16.mxu0 %v2430
        %2472 = vmatpush1.bf16.msra.mxu0 %v2429
        %2473 = vmatprep.subr.bf16.mxu0 %v2433
        %2474 = vmatpush1.bf16.msra.mxu0 %v2432
        %2475 = vmatprep.subr.bf16.mxu0 0
        %2476 = vmatpush1.bf16.msra.mxu0 0
        %2477 = vmatprep.subr.bf16.mxu0 0
        %2478 = vmatpush1.bf16.msra.mxu0 0
        %2479 = vmatprep.subr.bf16.mxu0 0
        %2480 = vmatpush1.bf16.msra.mxu0 0
        %2481 = vmatprep.subr.bf16.mxu0 0
        %2482 = vmatpush1.bf16.msra.mxu0 0
        %2483 = vmatprep.subr.bf16.mxu0 0
        %2484 = vmatpush1.bf16.msra.mxu0 0
        %2485 = vmatprep.subr.bf16.mxu0 0
        %2486 = vmatpush1.bf16.msra.mxu0 0
        %2487 = vmatprep.subr.bf16.mxu0 0
        %2488 = vmatpush1.bf16.msra.mxu0 0
        %2489 = vmatprep.subr.bf16.mxu0 0
        %2490 = vmatpush1.bf16.msra.mxu0 0
        %2491 = vmatprep.mubr.bf16.mxu0 0
        %2492 = vmatmul.mubr.bf16.gmra.mrb[0].mxu0 %v2279
        %v2493 = vpop.f32.mrb[0].mxu0
        %v2494 = vadd.f32 %v2319, %v2493
        %v2495 = vpop.f32.mrb[0].mxu0
        %v2496 = vadd.f32 %v2323, %v2495
        %v2497 = vpop.f32.mrb[0].mxu0
        %v2498 = vpop.f32.mrb[0].mxu0
        %2499 = vdwg.mxu0
        %2500 = vmatprep.subr.bf16.mxu0 0
        %2501 = vmatpush1.bf16.msra.mxu0 %v2413
        %2502 = vmatprep.subr.bf16.mxu0 0
        %2503 = vmatpush1.bf16.msra.mxu0 %v2416
        %2504 = vmatprep.subr.bf16.mxu0 0
        %2505 = vmatpush1.bf16.msra.mxu0 %v2419
        %2506 = vmatprep.subr.bf16.mxu0 0
        %2507 = vmatpush1.bf16.msra.mxu0 %v2422
        %2508 = vmatprep.subr.bf16.mxu0 0
        %2509 = vmatpush1.bf16.msra.mxu0 %v2425
        %2510 = vmatprep.subr.bf16.mxu0 0
        %2511 = vmatpush1.bf16.msra.mxu0 %v2428
        %2512 = vmatprep.subr.bf16.mxu0 0
        %2513 = vmatpush1.bf16.msra.mxu0 %v2431
        %2514 = vmatprep.subr.bf16.mxu0 0
        %2515 = vmatpush1.bf16.msra.mxu0 %v2434
        %2516 = vmatprep.subr.bf16.mxu0 0
        %2517 = vmatpush1.bf16.msra.mxu0 0
        %2518 = vmatprep.subr.bf16.mxu0 0
        %2519 = vmatpush1.bf16.msra.mxu0 0
        %2520 = vmatprep.subr.bf16.mxu0 0
        %2521 = vmatpush1.bf16.msra.mxu0 0
        %2522 = vmatprep.subr.bf16.mxu0 0
        %2523 = vmatpush1.bf16.msra.mxu0 0
        %2524 = vmatprep.subr.bf16.mxu0 0
        %2525 = vmatpush1.bf16.msra.mxu0 0
        %2526 = vmatprep.subr.bf16.mxu0 0
        %2527 = vmatpush1.bf16.msra.mxu0 0
        %2528 = vmatprep.subr.bf16.mxu0 0
        %2529 = vmatpush1.bf16.msra.mxu0 0
        %2530 = vmatprep.subr.bf16.mxu0 0
        %2531 = vmatpush1.bf16.msra.mxu0 0
        %2532 = vmatprep.mubr.bf16.mxu0 0
        %2533 = vmatmul.mubr.bf16.gmra.mrb[0].mxu0 %v2279
        %v2534 = vpop.f32.mrb[0].mxu0
        %v2535 = vadd.f32 %v2327, %v2534
        %v2536 = vpop.f32.mrb[0].mxu0
        %v2537 = vpop.f32.mrb[0].mxu0
        %v2538 = vpop.f32.mrb[0].mxu0
        %2539 = vdwg.mxu0
        %v2541 = vsel %vm764, %v2494, 0
        %v2544 = vsel %vm764, %v2496, 0
        %2546 = vmatprep.subr.mxu0 0.0
        %2547 = vmatpush1.xpose.msra.mxu0 %v2544
        %2548 = vmatprep.subr.mxu0 0.0
        %2549 = vmatpush1.xpose.msra.mxu0 0.0
        %2550 = vmatprep.subr.mxu0 0.0
        %2551 = vmatpush1.xpose.msra.mxu0 0.0
        %2552 = vmatprep.subr.mxu0 0.0
        %2553 = vmatpush1.xpose.msra.mxu0 0.0
        %2554 = vmatprep.subr.mxu0 0.0
        %2555 = vmatpush1.xpose.msra.mxu0 0.0
        %2556 = vmatprep.subr.mxu0 0.0
        %2557 = vmatpush1.xpose.msra.mxu0 0.0
        %2558 = vmatprep.subr.mxu0 0.0
        %2559 = vmatpush1.xpose.msra.mxu0 0.0
        %2560 = vmatprep.subr.mxu0 0.0
        %2561 = vmatpush1.xpose.msra.mxu0 0.0
        %2562 = vmatprep.subr.mxu0 0.0
        %2563 = vmatpush1.xpose.msra.mxu0 0.0
        %2564 = vmatprep.subr.mxu0 0.0
        %2565 = vmatpush1.xpose.msra.mxu0 0.0
        %2566 = vmatprep.subr.mxu0 0.0
        %2567 = vmatpush1.xpose.msra.mxu0 0.0
        %2568 = vmatprep.subr.mxu0 0.0
        %2569 = vmatpush1.xpose.msra.mxu0 0.0
        %2570 = vmatprep.subr.mxu0 0.0
        %2571 = vmatpush1.xpose.msra.mxu0 0.0
        %2572 = vmatprep.subr.mxu0 0.0
        %2573 = vmatpush1.xpose.msra.mxu0 0.0
        %2574 = vmatprep.subr.mxu0 0.0
        %2575 = vmatpush1.xpose.msra.mxu0 0.0
        %2576 = vmatprep.subr.mxu0 0.0
        %2577 = vmatpush1.xpose.msra.mxu0 0.0
        %2578 = vmatprep.subr.mxu0 0.0
        %2579 = vmatpush1.xpose.msra.mxu0 0.0
        %2580 = vmatprep.subr.mxu0 0.0
        %2581 = vmatpush1.xpose.msra.mxu0 0.0
        %2582 = vmatprep.subr.mxu0 0.0
        %2583 = vmatpush1.xpose.msra.mxu0 0.0
        %2584 = vmatprep.subr.mxu0 0.0
        %2585 = vmatpush1.xpose.msra.mxu0 0.0
        %2586 = vmatprep.subr.mxu0 0.0
        %2587 = vmatpush1.xpose.msra.mxu0 0.0
        %2588 = vmatprep.subr.mxu0 0.0
        %2589 = vmatpush1.xpose.msra.mxu0 0.0
        %2590 = vmatprep.subr.mxu0 0.0
        %2591 = vmatpush1.xpose.msra.mxu0 0.0
        %2592 = vmatprep.subr.mxu0 0.0
        %2593 = vmatpush1.xpose.msra.mxu0 0.0
        %2594 = vmatprep.subr.mxu0 0.0
        %2595 = vmatpush1.xpose.msra.mxu0 0.0
        %2596 = vmatprep.subr.mxu0 0.0
        %2597 = vmatpush1.xpose.msra.mxu0 0.0
        %2598 = vmatprep.subr.mxu0 0.0
        %2599 = vmatpush1.xpose.msra.mxu0 0.0
        %2600 = vmatprep.subr.mxu0 0.0
        %2601 = vmatpush1.xpose.msra.mxu0 0.0
        %2602 = vmatprep.subr.mxu0 0.0
        %2603 = vmatpush1.xpose.msra.mxu0 0.0
        %2604 = vmatprep.subr.mxu0 0.0
        %2605 = vmatpush1.xpose.msra.mxu0 0.0
        %2606 = vmatprep.subr.mxu0 0.0
        %2607 = vmatpush1.xpose.msra.mxu0 0.0
        %2608 = vmatprep.subr.mxu0 0.0
        %2609 = vmatpush1.xpose.msra.mxu0 0.0
        %2610 = vmatprep.mubr.f32.mxu0 0.0
        %2611 = vmatmul.mubr.f32.gmra.mrb[0].mxu0 %v2541
        %v2612 = vpop.f32.mrb[0].mxu0
        %v2613 = vadd.f32 0.0, %v2612
        %v2614 = vpop.f32.mrb[0].mxu0
        %2615 = vdwg.mxu0
        %v2616 = vmul.f32 %v2613, 0.17677669
        %v2617 = vadd.f32 %v2616, %v480
        %v2618 = vsel %vm843, %v2617, -inf
        %2619 = vmax.xlane.f32.xlu0 %v2618
        %v2620 = vpop.xlane.xlu0 %2619
        %v2621 = vsub.f32 %v2617, %v2620
        %v2622 = vmul.f32 %v2621, 1.442695
        %v2623 = vpow.pop %v2622
        %v2624 = vsel %vm843, %v2623, 0.0
        %2625 = vadd.xlane.f32.xlu0 %v2624
        %v2626 = vpop.xlane.xlu0 %2625
        %v2627 = vrcp.pop %v2626
        %v2628 = vmul.f32 %v2623, %v2627
        %v2630 = vsel %vm843, %v2628, 0
        %2632 = vmatprep.subr.mxu0 0.0
        %2633 = vmatpush1.msra.mxu0 %v2535
        %2634 = vmatprep.subr.mxu0 0.0
        %2635 = vmatpush1.msra.mxu0 0.0
        %2636 = vmatprep.subr.mxu0 0.0
        %2637 = vmatpush1.msra.mxu0 0.0
        %2638 = vmatprep.subr.mxu0 0.0
        %2639 = vmatpush1.msra.mxu0 0.0
        %2640 = vmatprep.subr.mxu0 0.0
        %2641 = vmatpush1.msra.mxu0 0.0
        %2642 = vmatprep.subr.mxu0 0.0
        %2643 = vmatpush1.msra.mxu0 0.0
        %2644 = vmatprep.subr.mxu0 0.0
        %2645 = vmatpush1.msra.mxu0 0.0
        %2646 = vmatprep.subr.mxu0 0.0
        %2647 = vmatpush1.msra.mxu0 0.0
        %2648 = vmatprep.subr.mxu0 0.0
        %2649 = vmatpush1.msra.mxu0 0.0
        %2650 = vmatprep.subr.mxu0 0.0
        %2651 = vmatpush1.msra.mxu0 0.0
        %2652 = vmatprep.subr.mxu0 0.0
        %2653 = vmatpush1.msra.mxu0 0.0
        %2654 = vmatprep.subr.mxu0 0.0
        %2655 = vmatpush1.msra.mxu0 0.0
        %2656 = vmatprep.subr.mxu0 0.0
        %2657 = vmatpush1.msra.mxu0 0.0
        %2658 = vmatprep.subr.mxu0 0.0
        %2659 = vmatpush1.msra.mxu0 0.0
        %2660 = vmatprep.subr.mxu0 0.0
        %2661 = vmatpush1.msra.mxu0 0.0
        %2662 = vmatprep.subr.mxu0 0.0
        %2663 = vmatpush1.msra.mxu0 0.0
        %2664 = vmatprep.subr.mxu0 0.0
        %2665 = vmatpush1.msra.mxu0 0.0
        %2666 = vmatprep.subr.mxu0 0.0
        %2667 = vmatpush1.msra.mxu0 0.0
        %2668 = vmatprep.subr.mxu0 0.0
        %2669 = vmatpush1.msra.mxu0 0.0
        %2670 = vmatprep.subr.mxu0 0.0
        %2671 = vmatpush1.msra.mxu0 0.0
        %2672 = vmatprep.subr.mxu0 0.0
        %2673 = vmatpush1.msra.mxu0 0.0
        %2674 = vmatprep.subr.mxu0 0.0
        %2675 = vmatpush1.msra.mxu0 0.0
        %2676 = vmatprep.subr.mxu0 0.0
        %2677 = vmatpush1.msra.mxu0 0.0
        %2678 = vmatprep.subr.mxu0 0.0
        %2679 = vmatpush1.msra.mxu0 0.0
        %2680 = vmatprep.subr.mxu0 0.0
        %2681 = vmatpush1.msra.mxu0 0.0
        %2682 = vmatprep.subr.mxu0 0.0
        %2683 = vmatpush1.msra.mxu0 0.0
        %2684 = vmatprep.subr.mxu0 0.0
        %2685 = vmatpush1.msra.mxu0 0.0
        %2686 = vmatprep.subr.mxu0 0.0
        %2687 = vmatpush1.msra.mxu0 0.0
        %2688 = vmatprep.subr.mxu0 0.0
        %2689 = vmatpush1.msra.mxu0 0.0
        %2690 = vmatprep.subr.mxu0 0.0
        %2691 = vmatpush1.msra.mxu0 0.0
        %2692 = vmatprep.subr.mxu0 0.0
        %2693 = vmatpush1.msra.mxu0 0.0
        %2694 = vmatprep.subr.mxu0 0.0
        %2695 = vmatpush1.msra.mxu0 0.0
        %2696 = vmatprep.mubr.f32.mxu0 0.0
        %2697 = vmatmul.mubr.f32.gmra.mrb[0].mxu0 %v2630
        %v2698 = vpop.f32.mrb[0].mxu0
        %v2699 = vadd.f32 0.0, %v2698
        %v2700 = vpop.f32.mrb[0].mxu0
        %2701 = vdwg.mxu0
        %2702 = vrot.lane.b32.xlu0 %v2494, 96
        %v2703 = vpop.permute.xlu0 %2702
        %2704 = vrot.lane.b32.xlu0 %v2496, 96
        %v2705 = vpop.permute.xlu0 %2704
        %v2706 = vsel %vm764, %v2703, 0
        %v2708 = vsel %vm764, %v2705, 0
        %2710 = vmatprep.subr.mxu0 0.0
        %2711 = vmatpush1.xpose.msra.mxu0 %v2708
        %2712 = vmatprep.subr.mxu0 0.0
        %2713 = vmatpush1.xpose.msra.mxu0 0.0
        %2714 = vmatprep.subr.mxu0 0.0
        %2715 = vmatpush1.xpose.msra.mxu0 0.0
        %2716 = vmatprep.subr.mxu0 0.0
        %2717 = vmatpush1.xpose.msra.mxu0 0.0
        %2718 = vmatprep.subr.mxu0 0.0
        %2719 = vmatpush1.xpose.msra.mxu0 0.0
        %2720 = vmatprep.subr.mxu0 0.0
        %2721 = vmatpush1.xpose.msra.mxu0 0.0
        %2722 = vmatprep.subr.mxu0 0.0
        %2723 = vmatpush1.xpose.msra.mxu0 0.0
        %2724 = vmatprep.subr.mxu0 0.0
        %2725 = vmatpush1.xpose.msra.mxu0 0.0
        %2726 = vmatprep.subr.mxu0 0.0
        %2727 = vmatpush1.xpose.msra.mxu0 0.0
        %2728 = vmatprep.subr.mxu0 0.0
        %2729 = vmatpush1.xpose.msra.mxu0 0.0
        %2730 = vmatprep.subr.mxu0 0.0
        %2731 = vmatpush1.xpose.msra.mxu0 0.0
        %2732 = vmatprep.subr.mxu0 0.0
        %2733 = vmatpush1.xpose.msra.mxu0 0.0
        %2734 = vmatprep.subr.mxu0 0.0
        %2735 = vmatpush1.xpose.msra.mxu0 0.0
        %2736 = vmatprep.subr.mxu0 0.0
        %2737 = vmatpush1.xpose.msra.mxu0 0.0
        %2738 = vmatprep.subr.mxu0 0.0
        %2739 = vmatpush1.xpose.msra.mxu0 0.0
        %2740 = vmatprep.subr.mxu0 0.0
        %2741 = vmatpush1.xpose.msra.mxu0 0.0
        %2742 = vmatprep.subr.mxu0 0.0
        %2743 = vmatpush1.xpose.msra.mxu0 0.0
        %2744 = vmatprep.subr.mxu0 0.0
        %2745 = vmatpush1.xpose.msra.mxu0 0.0
        %2746 = vmatprep.subr.mxu0 0.0
        %2747 = vmatpush1.xpose.msra.mxu0 0.0
        %2748 = vmatprep.subr.mxu0 0.0
        %2749 = vmatpush1.xpose.msra.mxu0 0.0
        %2750 = vmatprep.subr.mxu0 0.0
        %2751 = vmatpush1.xpose.msra.mxu0 0.0
        %2752 = vmatprep.subr.mxu0 0.0
        %2753 = vmatpush1.xpose.msra.mxu0 0.0
        %2754 = vmatprep.subr.mxu0 0.0
        %2755 = vmatpush1.xpose.msra.mxu0 0.0
        %2756 = vmatprep.subr.mxu0 0.0
        %2757 = vmatpush1.xpose.msra.mxu0 0.0
        %2758 = vmatprep.subr.mxu0 0.0
        %2759 = vmatpush1.xpose.msra.mxu0 0.0
        %2760 = vmatprep.subr.mxu0 0.0
        %2761 = vmatpush1.xpose.msra.mxu0 0.0
        %2762 = vmatprep.subr.mxu0 0.0
        %2763 = vmatpush1.xpose.msra.mxu0 0.0
        %2764 = vmatprep.subr.mxu0 0.0
        %2765 = vmatpush1.xpose.msra.mxu0 0.0
        %2766 = vmatprep.subr.mxu0 0.0
        %2767 = vmatpush1.xpose.msra.mxu0 0.0
        %2768 = vmatprep.subr.mxu0 0.0
        %2769 = vmatpush1.xpose.msra.mxu0 0.0
        %2770 = vmatprep.subr.mxu0 0.0
        %2771 = vmatpush1.xpose.msra.mxu0 0.0
        %2772 = vmatprep.subr.mxu0 0.0
        %2773 = vmatpush1.xpose.msra.mxu0 0.0
        %2774 = vmatprep.mubr.f32.mxu0 0.0
        %2775 = vmatmul.mubr.f32.gmra.mrb[0].mxu0 %v2706
        %v2776 = vpop.f32.mrb[0].mxu0
        %v2777 = vadd.f32 0.0, %v2776
        %v2778 = vpop.f32.mrb[0].mxu0
        %2779 = vdwg.mxu0
        %v2780 = vmul.f32 %v2777, 0.17677669
        %v2781 = vadd.f32 %v2780, %v480
        %v2782 = vsel %vm843, %v2781, -inf
        %2783 = vmax.xlane.f32.xlu0 %v2782
        %v2784 = vpop.xlane.xlu0 %2783
        %v2785 = vsub.f32 %v2781, %v2784
        %v2786 = vmul.f32 %v2785, 1.442695
        %v2787 = vpow.pop %v2786
        %v2788 = vsel %vm843, %v2787, 0.0
        %2789 = vadd.xlane.f32.xlu0 %v2788
        %v2790 = vpop.xlane.xlu0 %2789
        %v2791 = vrcp.pop %v2790
        %v2792 = vmul.f32 %v2787, %v2791
        %2794 = vrot.lane.b32.xlu0 %v2535, 96
        %v2795 = vpop.permute.xlu0 %2794
        %v2798 = vsel %vm843, %v2792, 0
        %2800 = vmatprep.subr.mxu0 0.0
        %2801 = vmatpush1.msra.mxu0 %v2795
        %2802 = vmatprep.subr.mxu0 0.0
        %2803 = vmatpush1.msra.mxu0 0.0
        %2804 = vmatprep.subr.mxu0 0.0
        %2805 = vmatpush1.msra.mxu0 0.0
        %2806 = vmatprep.subr.mxu0 0.0
        %2807 = vmatpush1.msra.mxu0 0.0
        %2808 = vmatprep.subr.mxu0 0.0
        %2809 = vmatpush1.msra.mxu0 0.0
        %2810 = vmatprep.subr.mxu0 0.0
        %2811 = vmatpush1.msra.mxu0 0.0
        %2812 = vmatprep.subr.mxu0 0.0
        %2813 = vmatpush1.msra.mxu0 0.0
        %2814 = vmatprep.subr.mxu0 0.0
        %2815 = vmatpush1.msra.mxu0 0.0
        %2816 = vmatprep.subr.mxu0 0.0
        %2817 = vmatpush1.msra.mxu0 0.0
        %2818 = vmatprep.subr.mxu0 0.0
        %2819 = vmatpush1.msra.mxu0 0.0
        %2820 = vmatprep.subr.mxu0 0.0
        %2821 = vmatpush1.msra.mxu0 0.0
        %2822 = vmatprep.subr.mxu0 0.0
        %2823 = vmatpush1.msra.mxu0 0.0
        %2824 = vmatprep.subr.mxu0 0.0
        %2825 = vmatpush1.msra.mxu0 0.0
        %2826 = vmatprep.subr.mxu0 0.0
        %2827 = vmatpush1.msra.mxu0 0.0
        %2828 = vmatprep.subr.mxu0 0.0
        %2829 = vmatpush1.msra.mxu0 0.0
        %2830 = vmatprep.subr.mxu0 0.0
        %2831 = vmatpush1.msra.mxu0 0.0
        %2832 = vmatprep.subr.mxu0 0.0
        %2833 = vmatpush1.msra.mxu0 0.0
        %2834 = vmatprep.subr.mxu0 0.0
        %2835 = vmatpush1.msra.mxu0 0.0
        %2836 = vmatprep.subr.mxu0 0.0
        %2837 = vmatpush1.msra.mxu0 0.0
        %2838 = vmatprep.subr.mxu0 0.0
        %2839 = vmatpush1.msra.mxu0 0.0
        %2840 = vmatprep.subr.mxu0 0.0
        %2841 = vmatpush1.msra.mxu0 0.0
        %2842 = vmatprep.subr.mxu0 0.0
        %2843 = vmatpush1.msra.mxu0 0.0
        %2844 = vmatprep.subr.mxu0 0.0
        %2845 = vmatpush1.msra.mxu0 0.0
        %2846 = vmatprep.subr.mxu0 0.0
        %2847 = vmatpush1.msra.mxu0 0.0
        %2848 = vmatprep.subr.mxu0 0.0
        %2849 = vmatpush1.msra.mxu0 0.0
        %2850 = vmatprep.subr.mxu0 0.0
        %2851 = vmatpush1.msra.mxu0 0.0
        %2852 = vmatprep.subr.mxu0 0.0
        %2853 = vmatpush1.msra.mxu0 0.0
        %2854 = vmatprep.subr.mxu0 0.0
        %2855 = vmatpush1.msra.mxu0 0.0
        %2856 = vmatprep.subr.mxu0 0.0
        %2857 = vmatpush1.msra.mxu0 0.0
        %2858 = vmatprep.subr.mxu0 0.0
        %2859 = vmatpush1.msra.mxu0 0.0
        %2860 = vmatprep.subr.mxu0 0.0
        %2861 = vmatpush1.msra.mxu0 0.0
        %2862 = vmatprep.subr.mxu0 0.0
        %2863 = vmatpush1.msra.mxu0 0.0
        %2864 = vmatprep.mubr.f32.mxu0 0.0
        %2865 = vmatmul.mubr.f32.gmra.mrb[0].mxu0 %v2798
        %v2866 = vpop.f32.mrb[0].mxu0
        %v2867 = vadd.f32 0.0, %v2866
        %v2868 = vpop.f32.mrb[0].mxu0
        %2869 = vdwg.mxu0
        %2870 = vrot.lane.b32.xlu0 %v2494, 64
        %v2871 = vpop.permute.xlu0 %2870
        %2872 = vrot.lane.b32.xlu0 %v2496, 64
        %v2873 = vpop.permute.xlu0 %2872
        %v2874 = vsel %vm764, %v2871, 0
        %v2876 = vsel %vm764, %v2873, 0
        %2878 = vmatprep.subr.mxu0 0.0
        %2879 = vmatpush1.xpose.msra.mxu0 %v2876
        %2880 = vmatprep.subr.mxu0 0.0
        %2881 = vmatpush1.xpose.msra.mxu0 0.0
        %2882 = vmatprep.subr.mxu0 0.0
        %2883 = vmatpush1.xpose.msra.mxu0 0.0
        %2884 = vmatprep.subr.mxu0 0.0
        %2885 = vmatpush1.xpose.msra.mxu0 0.0
        %2886 = vmatprep.subr.mxu0 0.0
        %2887 = vmatpush1.xpose.msra.mxu0 0.0
        %2888 = vmatprep.subr.mxu0 0.0
        %2889 = vmatpush1.xpose.msra.mxu0 0.0
        %2890 = vmatprep.subr.mxu0 0.0
        %2891 = vmatpush1.xpose.msra.mxu0 0.0
        %2892 = vmatprep.subr.mxu0 0.0
        %2893 = vmatpush1.xpose.msra.mxu0 0.0
        %2894 = vmatprep.subr.mxu0 0.0
        %2895 = vmatpush1.xpose.msra.mxu0 0.0
        %2896 = vmatprep.subr.mxu0 0.0
        %2897 = vmatpush1.xpose.msra.mxu0 0.0
        %2898 = vmatprep.subr.mxu0 0.0
        %2899 = vmatpush1.xpose.msra.mxu0 0.0
        %2900 = vmatprep.subr.mxu0 0.0
        %2901 = vmatpush1.xpose.msra.mxu0 0.0
        %2902 = vmatprep.subr.mxu0 0.0
        %2903 = vmatpush1.xpose.msra.mxu0 0.0
        %2904 = vmatprep.subr.mxu0 0.0
        %2905 = vmatpush1.xpose.msra.mxu0 0.0
        %2906 = vmatprep.subr.mxu0 0.0
        %2907 = vmatpush1.xpose.msra.mxu0 0.0
        %2908 = vmatprep.subr.mxu0 0.0
        %2909 = vmatpush1.xpose.msra.mxu0 0.0
        %2910 = vmatprep.subr.mxu0 0.0
        %2911 = vmatpush1.xpose.msra.mxu0 0.0
        %2912 = vmatprep.subr.mxu0 0.0
        %2913 = vmatpush1.xpose.msra.mxu0 0.0
        %2914 = vmatprep.subr.mxu0 0.0
        %2915 = vmatpush1.xpose.msra.mxu0 0.0
        %2916 = vmatprep.subr.mxu0 0.0
        %2917 = vmatpush1.xpose.msra.mxu0 0.0
        %2918 = vmatprep.subr.mxu0 0.0
        %2919 = vmatpush1.xpose.msra.mxu0 0.0
        %2920 = vmatprep.subr.mxu0 0.0
        %2921 = vmatpush1.xpose.msra.mxu0 0.0
        %2922 = vmatprep.subr.mxu0 0.0
        %2923 = vmatpush1.xpose.msra.mxu0 0.0
        %2924 = vmatprep.subr.mxu0 0.0
        %2925 = vmatpush1.xpose.msra.mxu0 0.0
        %2926 = vmatprep.subr.mxu0 0.0
        %2927 = vmatpush1.xpose.msra.mxu0 0.0
        %2928 = vmatprep.subr.mxu0 0.0
        %2929 = vmatpush1.xpose.msra.mxu0 0.0
        %2930 = vmatprep.subr.mxu0 0.0
        %2931 = vmatpush1.xpose.msra.mxu0 0.0
        %2932 = vmatprep.subr.mxu0 0.0
        %2933 = vmatpush1.xpose.msra.mxu0 0.0
        %2934 = vmatprep.subr.mxu0 0.0
        %2935 = vmatpush1.xpose.msra.mxu0 0.0
        %2936 = vmatprep.subr.mxu0 0.0
        %2937 = vmatpush1.xpose.msra.mxu0 0.0
        %2938 = vmatprep.subr.mxu0 0.0
        %2939 = vmatpush1.xpose.msra.mxu0 0.0
        %2940 = vmatprep.subr.mxu0 0.0
        %2941 = vmatpush1.xpose.msra.mxu0 0.0
        %2942 = vmatprep.mubr.f32.mxu0 0.0
        %2943 = vmatmul.mubr.f32.gmra.mrb[0].mxu0 %v2874
        %v2944 = vpop.f32.mrb[0].mxu0
        %v2945 = vadd.f32 0.0, %v2944
        %v2946 = vpop.f32.mrb[0].mxu0
        %2947 = vdwg.mxu0
        %v2948 = vmul.f32 %v2945, 0.17677669
        %v2949 = vadd.f32 %v2948, %v480
        %v2950 = vsel %vm843, %v2949, -inf
        %2951 = vmax.xlane.f32.xlu0 %v2950
        %v2952 = vpop.xlane.xlu0 %2951
        %v2953 = vsub.f32 %v2949, %v2952
        %v2954 = vmul.f32 %v2953, 1.442695
        %v2955 = vpow.pop %v2954
        %v2956 = vsel %vm843, %v2955, 0.0
        %2957 = vadd.xlane.f32.xlu0 %v2956
        %v2958 = vpop.xlane.xlu0 %2957
        %v2959 = vrcp.pop %v2958
        %v2960 = vmul.f32 %v2955, %v2959
        %2961 = vrot.lane.b32.xlu0 %v2535, 64
        %v2962 = vpop.permute.xlu0 %2961
        %v2965 = vsel %vm843, %v2960, 0
        %2967 = vmatprep.subr.mxu0 0.0
        %2968 = vmatpush1.msra.mxu0 %v2962
        %2969 = vmatprep.subr.mxu0 0.0
        %2970 = vmatpush1.msra.mxu0 0.0
        %2971 = vmatprep.subr.mxu0 0.0
        %2972 = vmatpush1.msra.mxu0 0.0
        %2973 = vmatprep.subr.mxu0 0.0
        %2974 = vmatpush1.msra.mxu0 0.0
        %2975 = vmatprep.subr.mxu0 0.0
        %2976 = vmatpush1.msra.mxu0 0.0
        %2977 = vmatprep.subr.mxu0 0.0
        %2978 = vmatpush1.msra.mxu0 0.0
        %2979 = vmatprep.subr.mxu0 0.0
        %2980 = vmatpush1.msra.mxu0 0.0
        %2981 = vmatprep.subr.mxu0 0.0
        %2982 = vmatpush1.msra.mxu0 0.0
        %2983 = vmatprep.subr.mxu0 0.0
        %2984 = vmatpush1.msra.mxu0 0.0
        %2985 = vmatprep.subr.mxu0 0.0
        %2986 = vmatpush1.msra.mxu0 0.0
        %2987 = vmatprep.subr.mxu0 0.0
        %2988 = vmatpush1.msra.mxu0 0.0
        %2989 = vmatprep.subr.mxu0 0.0
        %2990 = vmatpush1.msra.mxu0 0.0
        %2991 = vmatprep.subr.mxu0 0.0
        %2992 = vmatpush1.msra.mxu0 0.0
        %2993 = vmatprep.subr.mxu0 0.0
        %2994 = vmatpush1.msra.mxu0 0.0
        %2995 = vmatprep.subr.mxu0 0.0
        %2996 = vmatpush1.msra.mxu0 0.0
        %2997 = vmatprep.subr.mxu0 0.0
        %2998 = vmatpush1.msra.mxu0 0.0
        %2999 = vmatprep.subr.mxu0 0.0
        %3000 = vmatpush1.msra.mxu0 0.0
        %3001 = vmatprep.subr.mxu0 0.0
        %3002 = vmatpush1.msra.mxu0 0.0
        %3003 = vmatprep.subr.mxu0 0.0
        %3004 = vmatpush1.msra.mxu0 0.0
        %3005 = vmatprep.subr.mxu0 0.0
        %3006 = vmatpush1.msra.mxu0 0.0
        %3007 = vmatprep.subr.mxu0 0.0
        %3008 = vmatpush1.msra.mxu0 0.0
        %3009 = vmatprep.subr.mxu0 0.0
        %3010 = vmatpush1.msra.mxu0 0.0
        %3011 = vmatprep.subr.mxu0 0.0
        %3012 = vmatpush1.msra.mxu0 0.0
        %3013 = vmatprep.subr.mxu0 0.0
        %3014 = vmatpush1.msra.mxu0 0.0
        %3015 = vmatprep.subr.mxu0 0.0
        %3016 = vmatpush1.msra.mxu0 0.0
        %3017 = vmatprep.subr.mxu0 0.0
        %3018 = vmatpush1.msra.mxu0 0.0
        %3019 = vmatprep.subr.mxu0 0.0
        %3020 = vmatpush1.msra.mxu0 0.0
        %3021 = vmatprep.subr.mxu0 0.0
        %3022 = vmatpush1.msra.mxu0 0.0
        %3023 = vmatprep.subr.mxu0 0.0
        %3024 = vmatpush1.msra.mxu0 0.0
        %3025 = vmatprep.subr.mxu0 0.0
        %3026 = vmatpush1.msra.mxu0 0.0
        %3027 = vmatprep.subr.mxu0 0.0
        %3028 = vmatpush1.msra.mxu0 0.0
        %3029 = vmatprep.subr.mxu0 0.0
        %3030 = vmatpush1.msra.mxu0 0.0
        %3031 = vmatprep.mubr.f32.mxu0 0.0
        %3032 = vmatmul.mubr.f32.gmra.mrb[0].mxu0 %v2965
        %v3033 = vpop.f32.mrb[0].mxu0
        %v3034 = vadd.f32 0.0, %v3033
        %v3035 = vpop.f32.mrb[0].mxu0
        %3036 = vdwg.mxu0
        %3037 = vrot.lane.b32.xlu0 %v2494, 32
        %v3038 = vpop.permute.xlu0 %3037
        %3039 = vrot.lane.b32.xlu0 %v2496, 32
        %v3040 = vpop.permute.xlu0 %3039
        %v3041 = vsel %vm764, %v3038, 0
        %v3043 = vsel %vm764, %v3040, 0
        %3045 = vmatprep.subr.mxu0 0.0
        %3046 = vmatpush1.xpose.msra.mxu0 %v3043
        %3047 = vmatprep.subr.mxu0 0.0
        %3048 = vmatpush1.xpose.msra.mxu0 0.0
        %3049 = vmatprep.subr.mxu0 0.0
        %3050 = vmatpush1.xpose.msra.mxu0 0.0
        %3051 = vmatprep.subr.mxu0 0.0
        %3052 = vmatpush1.xpose.msra.mxu0 0.0
        %3053 = vmatprep.subr.mxu0 0.0
        %3054 = vmatpush1.xpose.msra.mxu0 0.0
        %3055 = vmatprep.subr.mxu0 0.0
        %3056 = vmatpush1.xpose.msra.mxu0 0.0
        %3057 = vmatprep.subr.mxu0 0.0
        %3058 = vmatpush1.xpose.msra.mxu0 0.0
        %3059 = vmatprep.subr.mxu0 0.0
        %3060 = vmatpush1.xpose.msra.mxu0 0.0
        %3061 = vmatprep.subr.mxu0 0.0
        %3062 = vmatpush1.xpose.msra.mxu0 0.0
        %3063 = vmatprep.subr.mxu0 0.0
        %3064 = vmatpush1.xpose.msra.mxu0 0.0
        %3065 = vmatprep.subr.mxu0 0.0
        %3066 = vmatpush1.xpose.msra.mxu0 0.0
        %3067 = vmatprep.subr.mxu0 0.0
        %3068 = vmatpush1.xpose.msra.mxu0 0.0
        %3069 = vmatprep.subr.mxu0 0.0
        %3070 = vmatpush1.xpose.msra.mxu0 0.0
        %3071 = vmatprep.subr.mxu0 0.0
        %3072 = vmatpush1.xpose.msra.mxu0 0.0
        %3073 = vmatprep.subr.mxu0 0.0
        %3074 = vmatpush1.xpose.msra.mxu0 0.0
        %3075 = vmatprep.subr.mxu0 0.0
        %3076 = vmatpush1.xpose.msra.mxu0 0.0
        %3077 = vmatprep.subr.mxu0 0.0
        %3078 = vmatpush1.xpose.msra.mxu0 0.0
        %3079 = vmatprep.subr.mxu0 0.0
        %3080 = vmatpush1.xpose.msra.mxu0 0.0
        %3081 = vmatprep.subr.mxu0 0.0
        %3082 = vmatpush1.xpose.msra.mxu0 0.0
        %3083 = vmatprep.subr.mxu0 0.0
        %3084 = vmatpush1.xpose.msra.mxu0 0.0
        %3085 = vmatprep.subr.mxu0 0.0
        %3086 = vmatpush1.xpose.msra.mxu0 0.0
        %3087 = vmatprep.subr.mxu0 0.0
        %3088 = vmatpush1.xpose.msra.mxu0 0.0
        %3089 = vmatprep.subr.mxu0 0.0
        %3090 = vmatpush1.xpose.msra.mxu0 0.0
        %3091 = vmatprep.subr.mxu0 0.0
        %3092 = vmatpush1.xpose.msra.mxu0 0.0
        %3093 = vmatprep.subr.mxu0 0.0
        %3094 = vmatpush1.xpose.msra.mxu0 0.0
        %3095 = vmatprep.subr.mxu0 0.0
        %3096 = vmatpush1.xpose.msra.mxu0 0.0
        %3097 = vmatprep.subr.mxu0 0.0
        %3098 = vmatpush1.xpose.msra.mxu0 0.0
        %3099 = vmatprep.subr.mxu0 0.0
        %3100 = vmatpush1.xpose.msra.mxu0 0.0
        %3101 = vmatprep.subr.mxu0 0.0
        %3102 = vmatpush1.xpose.msra.mxu0 0.0
        %3103 = vmatprep.subr.mxu0 0.0
        %3104 = vmatpush1.xpose.msra.mxu0 0.0
        %3105 = vmatprep.subr.mxu0 0.0
        %3106 = vmatpush1.xpose.msra.mxu0 0.0
        %3107 = vmatprep.subr.mxu0 0.0
        %3108 = vmatpush1.xpose.msra.mxu0 0.0
        %3109 = vmatprep.mubr.f32.mxu0 0.0
        %3110 = vmatmul.mubr.f32.gmra.mrb[0].mxu0 %v3041
        %v3111 = vpop.f32.mrb[0].mxu0
        %v3112 = vadd.f32 0.0, %v3111
        %v3113 = vpop.f32.mrb[0].mxu0
        %3114 = vdwg.mxu0
        %v3115 = vmul.f32 %v3112, 0.17677669
        %v3116 = vadd.f32 %v3115, %v480
        %v3117 = vsel %vm843, %v3116, -inf
        %3118 = vmax.xlane.f32.xlu0 %v3117
        %v3119 = vpop.xlane.xlu0 %3118
        %v3120 = vsub.f32 %v3116, %v3119
        %v3121 = vmul.f32 %v3120, 1.442695
        %v3122 = vpow.pop %v3121
        %v3123 = vsel %vm843, %v3122, 0.0
        %3124 = vadd.xlane.f32.xlu0 %v3123
        %v3125 = vpop.xlane.xlu0 %3124
        %v3126 = vrcp.pop %v3125
        %v3127 = vmul.f32 %v3122, %v3126
        %3128 = vrot.lane.b32.xlu0 %v2535, 32
        %v3129 = vpop.permute.xlu0 %3128
        %v3132 = vsel %vm843, %v3127, 0
        %3134 = vmatprep.subr.mxu0 0.0
        %3135 = vmatpush1.msra.mxu0 %v3129
        %3136 = vmatprep.subr.mxu0 0.0
        %3137 = vmatpush1.msra.mxu0 0.0
        %3138 = vmatprep.subr.mxu0 0.0
        %3139 = vmatpush1.msra.mxu0 0.0
        %3140 = vmatprep.subr.mxu0 0.0
        %3141 = vmatpush1.msra.mxu0 0.0
        %3142 = vmatprep.subr.mxu0 0.0
        %3143 = vmatpush1.msra.mxu0 0.0
        %3144 = vmatprep.subr.mxu0 0.0
        %3145 = vmatpush1.msra.mxu0 0.0
        %3146 = vmatprep.subr.mxu0 0.0
        %3147 = vmatpush1.msra.mxu0 0.0
        %3148 = vmatprep.subr.mxu0 0.0
        %3149 = vmatpush1.msra.mxu0 0.0
        %3150 = vmatprep.subr.mxu0 0.0
        %3151 = vmatpush1.msra.mxu0 0.0
        %3152 = vmatprep.subr.mxu0 0.0
        %3153 = vmatpush1.msra.mxu0 0.0
        %3154 = vmatprep.subr.mxu0 0.0
        %3155 = vmatpush1.msra.mxu0 0.0
        %3156 = vmatprep.subr.mxu0 0.0
        %3157 = vmatpush1.msra.mxu0 0.0
        %3158 = vmatprep.subr.mxu0 0.0
        %3159 = vmatpush1.msra.mxu0 0.0
        %3160 = vmatprep.subr.mxu0 0.0
        %3161 = vmatpush1.msra.mxu0 0.0
        %3162 = vmatprep.subr.mxu0 0.0
        %3163 = vmatpush1.msra.mxu0 0.0
        %3164 = vmatprep.subr.mxu0 0.0
        %3165 = vmatpush1.msra.mxu0 0.0
        %3166 = vmatprep.subr.mxu0 0.0
        %3167 = vmatpush1.msra.mxu0 0.0
        %3168 = vmatprep.subr.mxu0 0.0
        %3169 = vmatpush1.msra.mxu0 0.0
        %3170 = vmatprep.subr.mxu0 0.0
        %3171 = vmatpush1.msra.mxu0 0.0
        %3172 = vmatprep.subr.mxu0 0.0
        %3173 = vmatpush1.msra.mxu0 0.0
        %3174 = vmatprep.subr.mxu0 0.0
        %3175 = vmatpush1.msra.mxu0 0.0
        %3176 = vmatprep.subr.mxu0 0.0
        %3177 = vmatpush1.msra.mxu0 0.0
        %3178 = vmatprep.subr.mxu0 0.0
        %3179 = vmatpush1.msra.mxu0 0.0
        %3180 = vmatprep.subr.mxu0 0.0
        %3181 = vmatpush1.msra.mxu0 0.0
        %3182 = vmatprep.subr.mxu0 0.0
        %3183 = vmatpush1.msra.mxu0 0.0
        %3184 = vmatprep.subr.mxu0 0.0
        %3185 = vmatpush1.msra.mxu0 0.0
        %3186 = vmatprep.subr.mxu0 0.0
        %3187 = vmatpush1.msra.mxu0 0.0
        %3188 = vmatprep.subr.mxu0 0.0
        %3189 = vmatpush1.msra.mxu0 0.0
        %3190 = vmatprep.subr.mxu0 0.0
        %3191 = vmatpush1.msra.mxu0 0.0
        %3192 = vmatprep.subr.mxu0 0.0
        %3193 = vmatpush1.msra.mxu0 0.0
        %3194 = vmatprep.subr.mxu0 0.0
        %3195 = vmatpush1.msra.mxu0 0.0
        %3196 = vmatprep.subr.mxu0 0.0
        %3197 = vmatpush1.msra.mxu0 0.0
        %3198 = vmatprep.mubr.f32.mxu0 0.0
        %3199 = vmatmul.mubr.f32.gmra.mrb[0].mxu0 %v3132
        %v3200 = vpop.f32.mrb[0].mxu0
        %v3201 = vadd.f32 0.0, %v3200
        %v3202 = vpop.f32.mrb[0].mxu0
        %3203 = vdwg.mxu0
        %3205 = vrot.lane.b32.xlu0 %v2867, 32
        %v3206 = vpop.permute.xlu0 %3205
        %3209 = vrot.lane.b32.xlu0 %v3034, 64
        %v3210 = vpop.permute.xlu0 %3209
        %3213 = vrot.lane.b32.xlu0 %v3201, 96
        %v3214 = vpop.permute.xlu0 %3213
        %v3216 = vsel %vm764, %v2699, %v3206
        %v3217 = vsel %vm1443, %v3216, %v3210
        %v3218 = vsel %vm1445, %v3217, %v3214
        %v3219 = vpack.c.bf16 %v3218, %v3218
        %s3220 = scalar_lea.vmem [#allocation8], 64
        %v3221 = vld [vmem:[%s3220] sm:$0xf]
        %v3222 = vld [vmem:[%s3220 + $0x4] sm:$0xf]
        %v3223 = vld [vmem:[%s3220 + $0x8] sm:$0xf]
        %v3224 = vld [vmem:[%s3220 + $0xc] sm:$0xf]
        %v3225 = vld [vmem:[%s3220 + $0x10] sm:$0xf]
        %v3226 = vld [vmem:[%s3220 + $0x14] sm:$0xf]
        %v3227 = vld [vmem:[%s3220 + $0x18] sm:$0xf]
        %v3228 = vld [vmem:[%s3220 + $0x1c] sm:$0xf]
        %v3229 = vld [vmem:[%s3220 + $0x20] sm:$0xf]
        %v3230 = vld [vmem:[%s3220 + $0x24] sm:$0xf]
        %v3231 = vld [vmem:[%s3220 + $0x28] sm:$0xf]
        %v3232 = vld [vmem:[%s3220 + $0x2c] sm:$0xf]
        %v3233 = vld [vmem:[%s3220 + $0x30] sm:$0xf]
        %v3234 = vld [vmem:[%s3220 + $0x34] sm:$0xf]
        %v3235 = vld [vmem:[%s3220 + $0x38] sm:$0xf]
        %v3236 = vld [vmem:[%s3220 + $0x3c] sm:$0xf]
        %v3237 = vld [vmem:[%s4 + $0x1] sm:$0x1]
        %v3238 = vlaneseq
        %v3239 = vshrl.u32 %v3238, 7
        %v3240 = vsub.s32 0, %v3239
        %v3241 = vrot.slane %v3237, %v3240
        %v3258 = vunpack.c.l.b16 %v3221
        %v3259 = vunpack.c.l.b16 %v3222
        %v3260 = vunpack.c.l.b16 %v3223
        %v3261 = vunpack.c.l.b16 %v3224
        %v3262 = vunpack.c.l.b16 %v3225
        %v3263 = vunpack.c.l.b16 %v3226
        %v3264 = vunpack.c.l.b16 %v3227
        %v3265 = vunpack.c.l.b16 %v3228
        %v3266 = vunpack.c.l.b16 %v3229
        %v3267 = vunpack.c.l.b16 %v3230
        %v3268 = vunpack.c.l.b16 %v3231
        %v3269 = vunpack.c.l.b16 %v3232
        %v3270 = vunpack.c.l.b16 %v3233
        %v3271 = vunpack.c.l.b16 %v3234
        %v3272 = vunpack.c.l.b16 %v3235
        %v3273 = vunpack.c.l.b16 %v3236
        %v3274 = vpack.c.b16 %v3259, %v3258
        %v3275 = vpack.c.b16 %v3261, %v3260
        %v3276 = vpack.c.b16 %v3263, %v3262
        %v3277 = vpack.c.b16 %v3265, %v3264
        %v3278 = vpack.c.b16 %v3267, %v3266
        %v3279 = vpack.c.b16 %v3269, %v3268
        %v3280 = vpack.c.b16 %v3271, %v3270
        %v3281 = vpack.c.b16 %v3273, %v3272
        %3290 = vmatprep.subr.bf16.mxu0 0
        %3291 = vmatpush1.bf16.msra.mxu0 %v3274
        %3292 = vmatprep.subr.bf16.mxu0 0
        %3293 = vmatpush1.bf16.msra.mxu0 %v3275
        %3294 = vmatprep.subr.bf16.mxu0 0
        %3295 = vmatpush1.bf16.msra.mxu0 %v3276
        %3296 = vmatprep.subr.bf16.mxu0 0
        %3297 = vmatpush1.bf16.msra.mxu0 %v3277
        %3298 = vmatprep.subr.bf16.mxu0 0
        %3299 = vmatpush1.bf16.msra.mxu0 %v3278
        %3300 = vmatprep.subr.bf16.mxu0 0
        %3301 = vmatpush1.bf16.msra.mxu0 %v3279
        %3302 = vmatprep.subr.bf16.mxu0 0
        %3303 = vmatpush1.bf16.msra.mxu0 %v3280
        %3304 = vmatprep.subr.bf16.mxu0 0
        %3305 = vmatpush1.bf16.msra.mxu0 %v3281
        %3306 = vmatprep.subr.bf16.mxu0 0
        %3307 = vmatpush1.bf16.msra.mxu0 0
        %3308 = vmatprep.subr.bf16.mxu0 0
        %3309 = vmatpush1.bf16.msra.mxu0 0
        %3310 = vmatprep.subr.bf16.mxu0 0
        %3311 = vmatpush1.bf16.msra.mxu0 0
        %3312 = vmatprep.subr.bf16.mxu0 0
        %3313 = vmatpush1.bf16.msra.mxu0 0
        %3314 = vmatprep.subr.bf16.mxu0 0
        %3315 = vmatpush1.bf16.msra.mxu0 0
        %3316 = vmatprep.subr.bf16.mxu0 0
        %3317 = vmatpush1.bf16.msra.mxu0 0
        %3318 = vmatprep.subr.bf16.mxu0 0
        %3319 = vmatpush1.bf16.msra.mxu0 0
        %3320 = vmatprep.subr.bf16.mxu0 0
        %3321 = vmatpush1.bf16.msra.mxu0 0
        %3322 = vmatprep.mubr.bf16.mxu0 0
        %3323 = vmatmul.mubr.bf16.gmra.mrb[0].mxu0 %v3219
        %v3324 = vpop.f32.mrb[0].mxu0
        %v3325 = vadd.f32 %v3241, %v3324
        %v3326 = vpop.f32.mrb[0].mxu0
        %v3327 = vpop.f32.mrb[0].mxu0
        %v3328 = vpop.f32.mrb[0].mxu0
        %3329 = vdwg.mxu0
        %v3330 = vadd.f32 %v3325, %v2255
        %v3331 = vld [vmem:[%s9 + $0x6] sm:$0x1]
        %v3332 = vld [vmem:[%s9 + $0x7] sm:$0x1]
        %3333 = vadd.xlane.f32.xlu0 %v3330
        %v3334 = vpop.xlane.xlu0 %3333
        %v3335 = vmul.f32 %v3334, %v485
        %v3336 = vsub.f32 %v3330, %v3335
        %v3337 = vmul.f32 %v3336, %v3336
        %3338 = vadd.xlane.f32.xlu0 %v3337
        %v3339 = vpop.xlane.xlu0 %3338
        %v3340 = vmul.f32 %v3339, %v485
        %v3341 = vadd.f32 %v3340, 1e-05
        %v3342 = vrsqrt.pop %v3341
        %v3343 = vmul.f32 %v3336, %v3342
        %v3344 = vlaneseq
        %v3345 = vshrl.u32 %v3344, 7
        %v3346 = vsub.s32 0, %v3345
        %v3347 = vrot.slane %v3331, %v3346
        %v3348 = vmul.f32 %v3343, %v3347
        %v3349 = vlaneseq
        %v3350 = vshrl.u32 %v3349, 7
        %v3351 = vsub.s32 0, %v3350
        %v3352 = vrot.slane %v3332, %v3351
        %v3353 = vadd.f32 %v3348, %v3352
        %v3354 = vpack.c.bf16 %v3353, %v3353
        %s3355 = scalar_lea.vmem [#allocation10], 256
        %v3356 = vld [vmem:[%s3355] sm:$0xff]
        %v3357 = vld [vmem:[%s3355 + $0x8] sm:$0xff]
        %v3358 = vld [vmem:[%s3355 + $0x10] sm:$0xff]
        %v3359 = vld [vmem:[%s3355 + $0x18] sm:$0xff]
        %v3360 = vld [vmem:[%s3355 + $0x20] sm:$0xff]
        %v3361 = vld [vmem:[%s3355 + $0x28] sm:$0xff]
        %v3362 = vld [vmem:[%s3355 + $0x30] sm:$0xff]
        %v3363 = vld [vmem:[%s3355 + $0x38] sm:$0xff]
        %v3364 = vld [vmem:[%s3355 + $0x40] sm:$0xff]
        %v3365 = vld [vmem:[%s3355 + $0x48] sm:$0xff]
        %v3366 = vld [vmem:[%s3355 + $0x50] sm:$0xff]
        %v3367 = vld [vmem:[%s3355 + $0x58] sm:$0xff]
        %v3368 = vld [vmem:[%s3355 + $0x60] sm:$0xff]
        %v3369 = vld [vmem:[%s3355 + $0x68] sm:$0xff]
        %v3370 = vld [vmem:[%s3355 + $0x70] sm:$0xff]
        %v3371 = vld [vmem:[%s3355 + $0x78] sm:$0xff]
        %v3372 = vld [vmem:[%s3355 + $0x80] sm:$0xff]
        %v3373 = vld [vmem:[%s3355 + $0x88] sm:$0xff]
        %v3374 = vld [vmem:[%s3355 + $0x90] sm:$0xff]
        %v3375 = vld [vmem:[%s3355 + $0x98] sm:$0xff]
        %v3376 = vld [vmem:[%s3355 + $0xa0] sm:$0xff]
        %v3377 = vld [vmem:[%s3355 + $0xa8] sm:$0xff]
        %v3378 = vld [vmem:[%s3355 + $0xb0] sm:$0xff]
        %v3379 = vld [vmem:[%s3355 + $0xb8] sm:$0xff]
        %v3380 = vld [vmem:[%s3355 + $0xc0] sm:$0xff]
        %v3381 = vld [vmem:[%s3355 + $0xc8] sm:$0xff]
        %v3382 = vld [vmem:[%s3355 + $0xd0] sm:$0xff]
        %v3383 = vld [vmem:[%s3355 + $0xd8] sm:$0xff]
        %v3384 = vld [vmem:[%s3355 + $0xe0] sm:$0xff]
        %v3385 = vld [vmem:[%s3355 + $0xe8] sm:$0xff]
        %v3386 = vld [vmem:[%s3355 + $0xf0] sm:$0xff]
        %v3387 = vld [vmem:[%s3355 + $0xf8] sm:$0xff]
        %s3388 = scalar_lea.vmem %s6, 1
        %v3389 = vld [vmem:[%s3388] ss:$2 sm:$0xf]
        %v3391 = vlaneseq
        %v3392 = vshrl.u32 %v3391, 7
        %v3393 = vsub.s32 0, %v3392
        %v3394 = vrot.slane %v3389, %v3393
        %v3395 = vlaneseq
        %v3396 = vshrl.u32 %v3395, 7
        %v3397 = vsub.s32 1, %v3396
        %v3398 = vrot.slane %v3389, %v3397
        %v3399 = vlaneseq
        %v3400 = vshrl.u32 %v3399, 7
        %v3401 = vsub.s32 2, %v3400
        %v3402 = vrot.slane %v3389, %v3401
        %v3403 = vlaneseq
        %v3404 = vshrl.u32 %v3403, 7
        %v3405 = vsub.s32 3, %v3404
        %v3406 = vrot.slane %v3389, %v3405
        %v3443 = vunpack.c.l.b16 %v3356
        %v3444 = vunpack.c.h.b16 %v3356
        %v3445 = vunpack.c.l.b16 %v3357
        %v3446 = vunpack.c.h.b16 %v3357
        %v3447 = vunpack.c.l.b16 %v3358
        %v3448 = vunpack.c.h.b16 %v3358
        %v3449 = vunpack.c.l.b16 %v3359
        %v3450 = vunpack.c.h.b16 %v3359
        %v3451 = vunpack.c.l.b16 %v3360
        %v3452 = vunpack.c.h.b16 %v3360
        %v3453 = vunpack.c.l.b16 %v3361
        %v3454 = vunpack.c.h.b16 %v3361
        %v3455 = vunpack.c.l.b16 %v3362
        %v3456 = vunpack.c.h.b16 %v3362
        %v3457 = vunpack.c.l.b16 %v3363
        %v3458 = vunpack.c.h.b16 %v3363
        %v3459 = vunpack.c.l.b16 %v3364
        %v3460 = vunpack.c.h.b16 %v3364
        %v3461 = vunpack.c.l.b16 %v3365
        %v3462 = vunpack.c.h.b16 %v3365
        %v3463 = vunpack.c.l.b16 %v3366
        %v3464 = vunpack.c.h.b16 %v3366
        %v3465 = vunpack.c.l.b16 %v3367
        %v3466 = vunpack.c.h.b16 %v3367
        %v3467 = vunpack.c.l.b16 %v3368
        %v3468 = vunpack.c.h.b16 %v3368
        %v3469 = vunpack.c.l.b16 %v3369
        %v3470 = vunpack.c.h.b16 %v3369
        %v3471 = vunpack.c.l.b16 %v3370
        %v3472 = vunpack.c.h.b16 %v3370
        %v3473 = vunpack.c.l.b16 %v3371
        %v3474 = vunpack.c.h.b16 %v3371
        %v3475 = vunpack.c.l.b16 %v3372
        %v3476 = vunpack.c.h.b16 %v3372
        %v3477 = vunpack.c.l.b16 %v3373
        %v3478 = vunpack.c.h.b16 %v3373
        %v3479 = vunpack.c.l.b16 %v3374
        %v3480 = vunpack.c.h.b16 %v3374
        %v3481 = vunpack.c.l.b16 %v3375
        %v3482 = vunpack.c.h.b16 %v3375
        %v3483 = vunpack.c.l.b16 %v3376
        %v3484 = vunpack.c.h.b16 %v3376
        %v3485 = vunpack.c.l.b16 %v3377
        %v3486 = vunpack.c.h.b16 %v3377
        %v3487 = vunpack.c.l.b16 %v3378
        %v3488 = vunpack.c.h.b16 %v3378
        %v3489 = vunpack.c.l.b16 %v3379
        %v3490 = vunpack.c.h.b16 %v3379
        %v3491 = vunpack.c.l.b16 %v3380
        %v3492 = vunpack.c.h.b16 %v3380
        %v3493 = vunpack.c.l.b16 %v3381
        %v3494 = vunpack.c.h.b16 %v3381
        %v3495 = vunpack.c.l.b16 %v3382
        %v3496 = vunpack.c.h.b16 %v3382
        %v3497 = vunpack.c.l.b16 %v3383
        %v3498 = vunpack.c.h.b16 %v3383
        %v3499 = vunpack.c.l.b16 %v3384
        %v3500 = vunpack.c.h.b16 %v3384
        %v3501 = vunpack.c.l.b16 %v3385
        %v3502 = vunpack.c.h.b16 %v3385
        %v3503 = vunpack.c.l.b16 %v3386
        %v3504 = vunpack.c.h.b16 %v3386
        %v3505 = vunpack.c.l.b16 %v3387
        %v3506 = vunpack.c.h.b16 %v3387
        %v3507 = vpack.c.b16 %v3447, %v3443
        %v3508 = vpack.c.b16 %v3448, %v3444
        %v3509 = vpack.c.b16 %v3449, %v3445
        %v3510 = vpack.c.b16 %v3450, %v3446
        %v3511 = vpack.c.b16 %v3455, %v3451
        %v3512 = vpack.c.b16 %v3456, %v3452
        %v3513 = vpack.c.b16 %v3457, %v3453
        %v3514 = vpack.c.b16 %v3458, %v3454
        %v3515 = vpack.c.b16 %v3463, %v3459
        %v3516 = vpack.c.b16 %v3464, %v3460
        %v3517 = vpack.c.b16 %v3465, %v3461
        %v3518 = vpack.c.b16 %v3466, %v3462
        %v3519 = vpack.c.b16 %v3471, %v3467
        %v3520 = vpack.c.b16 %v3472, %v3468
        %v3521 = vpack.c.b16 %v3473, %v3469
        %v3522 = vpack.c.b16 %v3474, %v3470
        %v3523 = vpack.c.b16 %v3479, %v3475
        %v3524 = vpack.c.b16 %v3480, %v3476
        %v3525 = vpack.c.b16 %v3481, %v3477
        %v3526 = vpack.c.b16 %v3482, %v3478
        %v3527 = vpack.c.b16 %v3487, %v3483
        %v3528 = vpack.c.b16 %v3488, %v3484
        %v3529 = vpack.c.b16 %v3489, %v3485
        %v3530 = vpack.c.b16 %v3490, %v3486
        %v3531 = vpack.c.b16 %v3495, %v3491
        %v3532 = vpack.c.b16 %v3496, %v3492
        %v3533 = vpack.c.b16 %v3497, %v3493
        %v3534 = vpack.c.b16 %v3498, %v3494
        %v3535 = vpack.c.b16 %v3503, %v3499
        %v3536 = vpack.c.b16 %v3504, %v3500
        %v3537 = vpack.c.b16 %v3505, %v3501
        %v3538 = vpack.c.b16 %v3506, %v3502
        %3571 = vmatprep.subr.bf16.mxu0 %v3508
        %3572 = vmatpush1.bf16.msra.mxu0 %v3507
        %3573 = vmatprep.subr.bf16.mxu0 %v3512
        %3574 = vmatpush1.bf16.msra.mxu0 %v3511
        %3575 = vmatprep.subr.bf16.mxu0 %v3516
        %3576 = vmatpush1.bf16.msra.mxu0 %v3515
        %3577 = vmatprep.subr.bf16.mxu0 %v3520
        %3578 = vmatpush1.bf16.msra.mxu0 %v3519
        %3579 = vmatprep.subr.bf16.mxu0 %v3524
        %3580 = vmatpush1.bf16.msra.mxu0 %v3523
        %3581 = vmatprep.subr.bf16.mxu0 %v3528
        %3582 = vmatpush1.bf16.msra.mxu0 %v3527
        %3583 = vmatprep.subr.bf16.mxu0 %v3532
        %3584 = vmatpush1.bf16.msra.mxu0 %v3531
        %3585 = vmatprep.subr.bf16.mxu0 %v3536
        %3586 = vmatpush1.bf16.msra.mxu0 %v3535
        %3587 = vmatprep.subr.bf16.mxu0 0
        %3588 = vmatpush1.bf16.msra.mxu0 0
        %3589 = vmatprep.subr.bf16.mxu0 0
        %3590 = vmatpush1.bf16.msra.mxu0 0
        %3591 = vmatprep.subr.bf16.mxu0 0
        %3592 = vmatpush1.bf16.msra.mxu0 0
        %3593 = vmatprep.subr.bf16.mxu0 0
        %3594 = vmatpush1.bf16.msra.mxu0 0
        %3595 = vmatprep.subr.bf16.mxu0 0
        %3596 = vmatpush1.bf16.msra.mxu0 0
        %3597 = vmatprep.subr.bf16.mxu0 0
        %3598 = vmatpush1.bf16.msra.mxu0 0
        %3599 = vmatprep.subr.bf16.mxu0 0
        %3600 = vmatpush1.bf16.msra.mxu0 0
        %3601 = vmatprep.subr.bf16.mxu0 0
        %3602 = vmatpush1.bf16.msra.mxu0 0
        %3603 = vmatprep.mubr.bf16.mxu0 0
        %3604 = vmatmul.mubr.bf16.gmra.mrb[0].mxu0 %v3354
        %v3605 = vpop.f32.mrb[0].mxu0
        %v3606 = vadd.f32 %v3394, %v3605
        %v3607 = vpop.f32.mrb[0].mxu0
        %v3608 = vadd.f32 %v3398, %v3607
        %v3609 = vpop.f32.mrb[0].mxu0
        %v3610 = vpop.f32.mrb[0].mxu0
        %3611 = vdwg.mxu0
        %3612 = vmatprep.subr.bf16.mxu0 %v3510
        %3613 = vmatpush1.bf16.msra.mxu0 %v3509
        %3614 = vmatprep.subr.bf16.mxu0 %v3514
        %3615 = vmatpush1.bf16.msra.mxu0 %v3513
        %3616 = vmatprep.subr.bf16.mxu0 %v3518
        %3617 = vmatpush1.bf16.msra.mxu0 %v3517
        %3618 = vmatprep.subr.bf16.mxu0 %v3522
        %3619 = vmatpush1.bf16.msra.mxu0 %v3521
        %3620 = vmatprep.subr.bf16.mxu0 %v3526
        %3621 = vmatpush1.bf16.msra.mxu0 %v3525
        %3622 = vmatprep.subr.bf16.mxu0 %v3530
        %3623 = vmatpush1.bf16.msra.mxu0 %v3529
        %3624 = vmatprep.subr.bf16.mxu0 %v3534
        %3625 = vmatpush1.bf16.msra.mxu0 %v3533
        %3626 = vmatprep.subr.bf16.mxu0 %v3538
        %3627 = vmatpush1.bf16.msra.mxu0 %v3537
        %3628 = vmatprep.subr.bf16.mxu0 0
        %3629 = vmatpush1.bf16.msra.mxu0 0
        %3630 = vmatprep.subr.bf16.mxu0 0
        %3631 = vmatpush1.bf16.msra.mxu0 0
        %3632 = vmatprep.subr.bf16.mxu0 0
        %3633 = vmatpush1.bf16.msra.mxu0 0
        %3634 = vmatprep.subr.bf16.mxu0 0
        %3635 = vmatpush1.bf16.msra.mxu0 0
        %3636 = vmatprep.subr.bf16.mxu0 0
        %3637 = vmatpush1.bf16.msra.mxu0 0
        %3638 = vmatprep.subr.bf16.mxu0 0
        %3639 = vmatpush1.bf16.msra.mxu0 0
        %3640 = vmatprep.subr.bf16.mxu0 0
        %3641 = vmatpush1.bf16.msra.mxu0 0
        %3642 = vmatprep.subr.bf16.mxu0 0
        %3643 = vmatpush1.bf16.msra.mxu0 0
        %3644 = vmatprep.mubr.bf16.mxu0 0
        %3645 = vmatmul.mubr.bf16.gmra.mrb[0].mxu0 %v3354
        %v3646 = vpop.f32.mrb[0].mxu0
        %v3647 = vadd.f32 %v3402, %v3646
        %v3648 = vpop.f32.mrb[0].mxu0
        %v3649 = vadd.f32 %v3406, %v3648
        %v3650 = vpop.f32.mrb[0].mxu0
        %v3651 = vpop.f32.mrb[0].mxu0
        %3652 = vdwg.mxu0
        %v3653 = vmul.f32 %v3606, 1.702
        %v3654 = vmul.f32 %v3608, 1.702
        %v3655 = vmul.f32 %v3647, 1.702
        %v3656 = vmul.f32 %v3649, 1.702
        %v3657 = vxor.u32 %v3653, 2147483648
        %v3658 = vxor.u32 %v3654, 2147483648
        %v3659 = vxor.u32 %v3655, 2147483648
        %v3660 = vxor.u32 %v3656, 2147483648
        %v3661 = vmul.f32 %v3657, 1.442695
        %v3662 = vpow.pop %v3661
        %v3663 = vmul.f32 %v3658, 1.442695
        %v3664 = vpow.pop %v3663
        %v3665 = vmul.f32 %v3659, 1.442695
        %v3666 = vpow.pop %v3665
        %v3667 = vmul.f32 %v3660, 1.442695
        %v3668 = vpow.pop %v3667
        %v3669 = vadd.f32 %v3662, 1.0
        %v3670 = vadd.f32 %v3664, 1.0
        %v3671 = vadd.f32 %v3666, 1.0
        %v3672 = vadd.f32 %v3668, 1.0
        %v3673 = vrcp.pop %v3669
        %v3674 = vmul.f32 1.0, %v3673
        %v3675 = vrcp.pop %v3670
        %v3676 = vmul.f32 1.0, %v3675
        %v3677 = vrcp.pop %v3671
        %v3678 = vmul.f32 1.0, %v3677
        %v3679 = vrcp.pop %v3672
        %v3680 = vmul.f32 1.0, %v3679
        %v3681 = vmul.f32 %v3606, %v3674
        %v3682 = vmul.f32 %v3608, %v3676
        %v3683 = vmul.f32 %v3647, %v3678
        %v3684 = vmul.f32 %v3649, %v3680
        %v3685 = vpack.c.bf16 %v3681, %v3681
        %v3686 = vpack.c.bf16 %v3682, %v3682
        %v3687 = vpack.c.bf16 %v3683, %v3683
        %v3688 = vpack.c.bf16 %v3684, %v3684
        %s3689 = scalar_lea.vmem [#allocation11], 256
        %v3690 = vld [vmem:[%s3689] sm:$0xf]
        %v3691 = vld [vmem:[%s3689 + $0x4] sm:$0xf]
        %v3692 = vld [vmem:[%s3689 + $0x8] sm:$0xf]
        %v3693 = vld [vmem:[%s3689 + $0xc] sm:$0xf]
        %v3694 = vld [vmem:[%s3689 + $0x10] sm:$0xf]
        %v3695 = vld [vmem:[%s3689 + $0x14] sm:$0xf]
        %v3696 = vld [vmem:[%s3689 + $0x18] sm:$0xf]
        %v3697 = vld [vmem:[%s3689 + $0x1c] sm:$0xf]
        %v3698 = vld [vmem:[%s3689 + $0x20] sm:$0xf]
        %v3699 = vld [vmem:[%s3689 + $0x24] sm:$0xf]
        %v3700 = vld [vmem:[%s3689 + $0x28] sm:$0xf]
        %v3701 = vld [vmem:[%s3689 + $0x2c] sm:$0xf]
        %v3702 = vld [vmem:[%s3689 + $0x30] sm:$0xf]
        %v3703 = vld [vmem:[%s3689 + $0x34] sm:$0xf]
        %v3704 = vld [vmem:[%s3689 + $0x38] sm:$0xf]
        %v3705 = vld [vmem:[%s3689 + $0x3c] sm:$0xf]
        %v3706 = vld [vmem:[%s3689 + $0x40] sm:$0xf]
        %v3707 = vld [vmem:[%s3689 + $0x44] sm:$0xf]
        %v3708 = vld [vmem:[%s3689 + $0x48] sm:$0xf]
        %v3709 = vld [vmem:[%s3689 + $0x4c] sm:$0xf]
        %v3710 = vld [vmem:[%s3689 + $0x50] sm:$0xf]
        %v3711 = vld [vmem:[%s3689 + $0x54] sm:$0xf]
        %v3712 = vld [vmem:[%s3689 + $0x58] sm:$0xf]
        %v3713 = vld [vmem:[%s3689 + $0x5c] sm:$0xf]
        %v3714 = vld [vmem:[%s3689 + $0x60] sm:$0xf]
        %v3715 = vld [vmem:[%s3689 + $0x64] sm:$0xf]
        %v3716 = vld [vmem:[%s3689 + $0x68] sm:$0xf]
        %v3717 = vld [vmem:[%s3689 + $0x6c] sm:$0xf]
        %v3718 = vld [vmem:[%s3689 + $0x70] sm:$0xf]
        %v3719 = vld [vmem:[%s3689 + $0x74] sm:$0xf]
        %v3720 = vld [vmem:[%s3689 + $0x78] sm:$0xf]
        %v3721 = vld [vmem:[%s3689 + $0x7c] sm:$0xf]
        %v3722 = vld [vmem:[%s3689 + $0x80] sm:$0xf]
        %v3723 = vld [vmem:[%s3689 + $0x84] sm:$0xf]
        %v3724 = vld [vmem:[%s3689 + $0x88] sm:$0xf]
        %v3725 = vld [vmem:[%s3689 + $0x8c] sm:$0xf]
        %v3726 = vld [vmem:[%s3689 + $0x90] sm:$0xf]
        %v3727 = vld [vmem:[%s3689 + $0x94] sm:$0xf]
        %v3728 = vld [vmem:[%s3689 + $0x98] sm:$0xf]
        %v3729 = vld [vmem:[%s3689 + $0x9c] sm:$0xf]
        %v3730 = vld [vmem:[%s3689 + $0xa0] sm:$0xf]
        %v3731 = vld [vmem:[%s3689 + $0xa4] sm:$0xf]
        %v3732 = vld [vmem:[%s3689 + $0xa8] sm:$0xf]
        %v3733 = vld [vmem:[%s3689 + $0xac] sm:$0xf]
        %v3734 = vld [vmem:[%s3689 + $0xb0] sm:$0xf]
        %v3735 = vld [vmem:[%s3689 + $0xb4] sm:$0xf]
        %v3736 = vld [vmem:[%s3689 + $0xb8] sm:$0xf]
        %v3737 = vld [vmem:[%s3689 + $0xbc] sm:$0xf]
        %v3738 = vld [vmem:[%s3689 + $0xc0] sm:$0xf]
        %v3739 = vld [vmem:[%s3689 + $0xc4] sm:$0xf]
        %v3740 = vld [vmem:[%s3689 + $0xc8] sm:$0xf]
        %v3741 = vld [vmem:[%s3689 + $0xcc] sm:$0xf]
        %v3742 = vld [vmem:[%s3689 + $0xd0] sm:$0xf]
        %v3743 = vld [vmem:[%s3689 + $0xd4] sm:$0xf]
        %v3744 = vld [vmem:[%s3689 + $0xd8] sm:$0xf]
        %v3745 = vld [vmem:[%s3689 + $0xdc] sm:$0xf]
        %v3746 = vld [vmem:[%s3689 + $0xe0] sm:$0xf]
        %v3747 = vld [vmem:[%s3689 + $0xe4] sm:$0xf]
        %v3748 = vld [vmem:[%s3689 + $0xe8] sm:$0xf]
        %v3749 = vld [vmem:[%s3689 + $0xec] sm:$0xf]
        %v3750 = vld [vmem:[%s3689 + $0xf0] sm:$0xf]
        %v3751 = vld [vmem:[%s3689 + $0xf4] sm:$0xf]
        %v3752 = vld [vmem:[%s3689 + $0xf8] sm:$0xf]
        %v3753 = vld [vmem:[%s3689 + $0xfc] sm:$0xf]
        %v3754 = vld [vmem:[%s8 + $0x1] sm:$0x1]
        %v3755 = vlaneseq
        %v3756 = vshrl.u32 %v3755, 7
        %v3757 = vsub.s32 0, %v3756
        %v3758 = vrot.slane %v3754, %v3757
        %v3823 = vunpack.c.l.b16 %v3690
        %v3824 = vunpack.c.l.b16 %v3691
        %v3825 = vunpack.c.l.b16 %v3692
        %v3826 = vunpack.c.l.b16 %v3693
        %v3827 = vunpack.c.l.b16 %v3694
        %v3828 = vunpack.c.l.b16 %v3695
        %v3829 = vunpack.c.l.b16 %v3696
        %v3830 = vunpack.c.l.b16 %v3697
        %v3831 = vunpack.c.l.b16 %v3698
        %v3832 = vunpack.c.l.b16 %v3699
        %v3833 = vunpack.c.l.b16 %v3700
        %v3834 = vunpack.c.l.b16 %v3701
        %v3835 = vunpack.c.l.b16 %v3702
        %v3836 = vunpack.c.l.b16 %v3703
        %v3837 = vunpack.c.l.b16 %v3704
        %v3838 = vunpack.c.l.b16 %v3705
        %v3839 = vunpack.c.l.b16 %v3706
        %v3840 = vunpack.c.l.b16 %v3707
        %v3841 = vunpack.c.l.b16 %v3708
        %v3842 = vunpack.c.l.b16 %v3709
        %v3843 = vunpack.c.l.b16 %v3710
        %v3844 = vunpack.c.l.b16 %v3711
        %v3845 = vunpack.c.l.b16 %v3712
        %v3846 = vunpack.c.l.b16 %v3713
        %v3847 = vunpack.c.l.b16 %v3714
        %v3848 = vunpack.c.l.b16 %v3715
        %v3849 = vunpack.c.l.b16 %v3716
        %v3850 = vunpack.c.l.b16 %v3717
        %v3851 = vunpack.c.l.b16 %v3718
        %v3852 = vunpack.c.l.b16 %v3719
        %v3853 = vunpack.c.l.b16 %v3720
        %v3854 = vunpack.c.l.b16 %v3721
        %v3855 = vunpack.c.l.b16 %v3722
        %v3856 = vunpack.c.l.b16 %v3723
        %v3857 = vunpack.c.l.b16 %v3724
        %v3858 = vunpack.c.l.b16 %v3725
        %v3859 = vunpack.c.l.b16 %v3726
        %v3860 = vunpack.c.l.b16 %v3727
        %v3861 = vunpack.c.l.b16 %v3728
        %v3862 = vunpack.c.l.b16 %v3729
        %v3863 = vunpack.c.l.b16 %v3730
        %v3864 = vunpack.c.l.b16 %v3731
        %v3865 = vunpack.c.l.b16 %v3732
        %v3866 = vunpack.c.l.b16 %v3733
        %v3867 = vunpack.c.l.b16 %v3734
        %v3868 = vunpack.c.l.b16 %v3735
        %v3869 = vunpack.c.l.b16 %v3736
        %v3870 = vunpack.c.l.b16 %v3737
        %v3871 = vunpack.c.l.b16 %v3738
        %v3872 = vunpack.c.l.b16 %v3739
        %v3873 = vunpack.c.l.b16 %v3740
        %v3874 = vunpack.c.l.b16 %v3741
        %v3875 = vunpack.c.l.b16 %v3742
        %v3876 = vunpack.c.l.b16 %v3743
        %v3877 = vunpack.c.l.b16 %v3744
        %v3878 = vunpack.c.l.b16 %v3745
        %v3879 = vunpack.c.l.b16 %v3746
        %v3880 = vunpack.c.l.b16 %v3747
        %v3881 = vunpack.c.l.b16 %v3748
        %v3882 = vunpack.c.l.b16 %v3749
        %v3883 = vunpack.c.l.b16 %v3750
        %v3884 = vunpack.c.l.b16 %v3751
        %v3885 = vunpack.c.l.b16 %v3752
        %v3886 = vunpack.c.l.b16 %v3753
        %v3887 = vpack.c.b16 %v3824, %v3823
        %v3888 = vpack.c.b16 %v3826, %v3825
        %v3889 = vpack.c.b16 %v3828, %v3827
        %v3890 = vpack.c.b16 %v3830, %v3829
        %v3891 = vpack.c.b16 %v3832, %v3831
        %v3892 = vpack.c.b16 %v3834, %v3833
        %v3893 = vpack.c.b16 %v3836, %v3835
        %v3894 = vpack.c.b16 %v3838, %v3837
        %v3895 = vpack.c.b16 %v3840, %v3839
        %v3896 = vpack.c.b16 %v3842, %v3841
        %v3897 = vpack.c.b16 %v3844, %v3843
        %v3898 = vpack.c.b16 %v3846, %v3845
        %v3899 = vpack.c.b16 %v3848, %v3847
        %v3900 = vpack.c.b16 %v3850, %v3849
        %v3901 = vpack.c.b16 %v3852, %v3851
        %v3902 = vpack.c.b16 %v3854, %v3853
        %v3903 = vpack.c.b16 %v3856, %v3855
        %v3904 = vpack.c.b16 %v3858, %v3857
        %v3905 = vpack.c.b16 %v3860, %v3859
        %v3906 = vpack.c.b16 %v3862, %v3861
        %v3907 = vpack.c.b16 %v3864, %v3863
        %v3908 = vpack.c.b16 %v3866, %v3865
        %v3909 = vpack.c.b16 %v3868, %v3867
        %v3910 = vpack.c.b16 %v3870, %v3869
        %v3911 = vpack.c.b16 %v3872, %v3871
        %v3912 = vpack.c.b16 %v3874, %v3873
        %v3913 = vpack.c.b16 %v3876, %v3875
        %v3914 = vpack.c.b16 %v3878, %v3877
        %v3915 = vpack.c.b16 %v3880, %v3879
        %v3916 = vpack.c.b16 %v3882, %v3881
        %v3917 = vpack.c.b16 %v3884, %v3883
        %v3918 = vpack.c.b16 %v3886, %v3885
        %3951 = vmatprep.subr.bf16.mxu0 0
        %3952 = vmatpush1.bf16.msra.mxu0 %v3887
        %3953 = vmatprep.subr.bf16.mxu0 0
        %3954 = vmatpush1.bf16.msra.mxu0 %v3888
        %3955 = vmatprep.subr.bf16.mxu0 0
        %3956 = vmatpush1.bf16.msra.mxu0 %v3889
        %3957 = vmatprep.subr.bf16.mxu0 0
        %3958 = vmatpush1.bf16.msra.mxu0 %v3890
        %3959 = vmatprep.subr.bf16.mxu0 0
        %3960 = vmatpush1.bf16.msra.mxu0 %v3891
        %3961 = vmatprep.subr.bf16.mxu0 0
        %3962 = vmatpush1.bf16.msra.mxu0 %v3892
        %3963 = vmatprep.subr.bf16.mxu0 0
        %3964 = vmatpush1.bf16.msra.mxu0 %v3893
        %3965 = vmatprep.subr.bf16.mxu0 0
        %3966 = vmatpush1.bf16.msra.mxu0 %v3894
        %3967 = vmatprep.subr.bf16.mxu0 0
        %3968 = vmatpush1.bf16.msra.mxu0 %v3895
        %3969 = vmatprep.subr.bf16.mxu0 0
        %3970 = vmatpush1.bf16.msra.mxu0 %v3896
        %3971 = vmatprep.subr.bf16.mxu0 0
        %3972 = vmatpush1.bf16.msra.mxu0 %v3897
        %3973 = vmatprep.subr.bf16.mxu0 0
        %3974 = vmatpush1.bf16.msra.mxu0 %v3898
        %3975 = vmatprep.subr.bf16.mxu0 0
        %3976 = vmatpush1.bf16.msra.mxu0 %v3899
        %3977 = vmatprep.subr.bf16.mxu0 0
        %3978 = vmatpush1.bf16.msra.mxu0 %v3900
        %3979 = vmatprep.subr.bf16.mxu0 0
        %3980 = vmatpush1.bf16.msra.mxu0 %v3901
        %3981 = vmatprep.subr.bf16.mxu0 0
        %3982 = vmatpush1.bf16.msra.mxu0 %v3902
        %3983 = vmatprep.mubr.bf16.mxu0 %v3686
        %3984 = vmatmul.mubr.bf16.gmra.mrb[0].mxu0 %v3685
        %v3985 = vpop.f32.mrb[0].mxu0
        %v3986 = vadd.f32 %v3758, %v3985
        %v3987 = vpop.f32.mrb[0].mxu0
        %v3988 = vpop.f32.mrb[0].mxu0
        %v3989 = vpop.f32.mrb[0].mxu0
        %3990 = vdwg.mxu0
        %3991 = vmatprep.subr.bf16.mxu0 0
        %3992 = vmatpush1.bf16.msra.mxu0 %v3903
        %3993 = vmatprep.subr.bf16.mxu0 0
        %3994 = vmatpush1.bf16.msra.mxu0 %v3904
        %3995 = vmatprep.subr.bf16.mxu0 0
        %3996 = vmatpush1.bf16.msra.mxu0 %v3905
        %3997 = vmatprep.subr.bf16.mxu0 0
        %3998 = vmatpush1.bf16.msra.mxu0 %v3906
        %3999 = vmatprep.subr.bf16.mxu0 0
        %4000 = vmatpush1.bf16.msra.mxu0 %v3907
        %4001 = vmatprep.subr.bf16.mxu0 0
        %4002 = vmatpush1.bf16.msra.mxu0 %v3908
        %4003 = vmatprep.subr.bf16.mxu0 0
        %4004 = vmatpush1.bf16.msra.mxu0 %v3909
        %4005 = vmatprep.subr.bf16.mxu0 0
        %4006 = vmatpush1.bf16.msra.mxu0 %v3910
        %4007 = vmatprep.subr.bf16.mxu0 0
        %4008 = vmatpush1.bf16.msra.mxu0 %v3911
        %4009 = vmatprep.subr.bf16.mxu0 0
        %4010 = vmatpush1.bf16.msra.mxu0 %v3912
        %4011 = vmatprep.subr.bf16.mxu0 0
        %4012 = vmatpush1.bf16.msra.mxu0 %v3913
        %4013 = vmatprep.subr.bf16.mxu0 0
        %4014 = vmatpush1.bf16.msra.mxu0 %v3914
        %4015 = vmatprep.subr.bf16.mxu0 0
        %4016 = vmatpush1.bf16.msra.mxu0 %v3915
        %4017 = vmatprep.subr.bf16.mxu0 0
        %4018 = vmatpush1.bf16.msra.mxu0 %v3916
        %4019 = vmatprep.subr.bf16.mxu0 0
        %4020 = vmatpush1.bf16.msra.mxu0 %v3917
        %4021 = vmatprep.subr.bf16.mxu0 0
        %4022 = vmatpush1.bf16.msra.mxu0 %v3918
        %4023 = vmatprep.mubr.bf16.mxu0 %v3688
        %4024 = vmatmul.mubr.bf16.gmra.mrb[0].mxu0 %v3687
        %v4025 = vpop.f32.mrb[0].mxu0
        %v4026 = vadd.f32 %v3986, %v4025
        %v4027 = vpop.f32.mrb[0].mxu0
        %v4028 = vpop.f32.mrb[0].mxu0
        %v4029 = vpop.f32.mrb[0].mxu0
        %4030 = vdwg.mxu0
        %v4031 = vadd.f32 %v4026, %v3330
        %v4032 = vld [vmem:[%s10] sm:$0x1]
        %v4033 = vld [vmem:[%s10 + $0x1] sm:$0x1]
        %4034 = vadd.xlane.f32.xlu0 %v4031
        %v4035 = vpop.xlane.xlu0 %4034
        %v4036 = vmul.f32 %v4035, %v485
        %v4037 = vsub.f32 %v4031, %v4036
        %v4038 = vmul.f32 %v4037, %v4037
        %4039 = vadd.xlane.f32.xlu0 %v4038
        %v4040 = vpop.xlane.xlu0 %4039
        %v4041 = vmul.f32 %v4040, %v485
        %v4042 = vadd.f32 %v4041, 1e-05
        %v4043 = vrsqrt.pop %v4042
        %v4044 = vmul.f32 %v4037, %v4043
        %v4045 = vlaneseq
        %v4046 = vshrl.u32 %v4045, 7
        %v4047 = vsub.s32 0, %v4046
        %v4048 = vrot.slane %v4032, %v4047
        %v4049 = vmul.f32 %v4044, %v4048
        %v4050 = vlaneseq
        %v4051 = vshrl.u32 %v4050, 7
        %v4052 = vsub.s32 0, %v4051
        %v4053 = vrot.slane %v4033, %v4052
        %v4054 = vadd.f32 %v4049, %v4053
        %4055 = vst [vmem:[%s472] sm:$0xff] %v4054
        %s4056 = sand.u32 %s275, 1
        %s4057 = scalar_lea.sflag [#allocation4], %s4056
        %s4058 = sand.u32 %s275, 1
        %s4059 = smul.addr %s4058, 8
        %s4060 = scalar_lea.vmem [#allocation13], %s4059
        // Predicated region
        $region89: #{tpu_custom_call.1} parent=63 // pred_check
          %p4061 = pneg %p285
        $region90: #{tpu_custom_call.1} parent=63 // pred_check_branch
          %4063 = sbr.rel (%p4061) target = $region92
        $region91: #{tpu_custom_call.1} parent=63 // pred_region
          %s4065 = ssub.s32 128, 128
          %4066 = vsyncadd %s4057, %s4065
          %s4067 = smul.addr %s31, 128
          %s4068 = scalar_lea.hbm %s11, %s4067
          %s4070 = sshll.u32 %s4060, 4
          %s4071 = int_to_ptr.vmem [resolvable:$true] %s4070
          %4073 = dma.vmem_to_hbm [thread:$0]  %s4071, 128, %s4068, %s4057
        $region92: #{tpu_custom_call.1} parent=63 // pred_fallthru
          _
      $region64: #{tpu_custom_call.1} parent=5 // pred_fallthru
        _
      %p4074 = scmp.le.s32.totalorder 2, %s26
      // Predicated region
      $region93: #{tpu_custom_call.1} parent=5 // pred_check
        %p4075 = pneg %p4074
      $region94: #{tpu_custom_call.1} parent=5 // pred_check_branch
        %4077 = sbr.rel (%p4075) target = $region96
      $region95: #{tpu_custom_call.1} parent=5 // pred_region
        %s4078 = ssub.s32 %s26, 2
        // Predicated region
        $region97: #{tpu_custom_call.1} parent=95 // pred_check
          %p4079 = pneg %p291
        $region98: #{tpu_custom_call.1} parent=95 // pred_check_branch
          %4081 = sbr.rel (%p4079) target = $region100
        $region99: #{tpu_custom_call.1} parent=95 // pred_region
          %s4082 = sand.u32 %s276, 1
          %s4083 = scalar_lea.sflag [#allocation4], %s4082
          %s4084 = sand.u32 %s276, 1
          %s4085 = smul.addr %s4084, 8
          %s4086 = scalar_lea.vmem [#allocation13], %s4085
          %4087 = dma.done %s4083, 128
        $region100: #{tpu_custom_call.1} parent=95 // pred_fallthru
          _
      $region96: #{tpu_custom_call.1} parent=5 // pred_fallthru
        _
    $region6: #{tpu_custom_call.1} parent=1 // loop_footer
      %s30 = sadd.s32 1, %s26
    $region7: #{tpu_custom_call.1} parent=1 // loop_footer_branch
      %25 = sbr.rel target = $region3
    $region8: #{tpu_custom_call.1} parent=1 // loop_exit
      _
    %4088 = vsyncpa [#allocation3], 1
    %s4089 = scalar_lea.sflag [#allocation3], 1
    %4090 = vsyncpa %s4089, 1
    %4091 = vsyncpa [#allocation6], 1
    %4092 = vsyncpa [#allocation9], 1
    %4093 = vsyncpa [#allocation12], 1
    %4094 = vsyncpa [#allocation4], 1
    %s4095 = scalar_lea.sflag [#allocation4], 1
    %4096 = vsyncpa %s4095, 1

</llo_original>
